<compile_context>
chip_gen: v7x
topology: tpu7x:2x2x1
jax: 0.10.0
libtpu: 0.0.40
codegen_flags: <defaults>
</compile_context>

<pallas_src>
import math
import functools

import jax
import jax.numpy as jnp
from jax.experimental import pallas as pl
from jax.experimental.pallas import tpu as pltpu

# Raised past v5e's 16 MiB scoped default; leaves headroom under v7x's 64 MiB physical VMEM.
_VMEM_LIMIT = 48 * 1024 * 1024


def _round_up(x, m):
    return (x + m - 1) // m * m


def _gelu_tanh(x):
    c = math.sqrt(2.0 / math.pi)
    return 0.5 * x * (1.0 + jnp.tanh(c * (x + 0.044715 * x * x * x)))


def _layernorm_f32(x, g, b, eps):
    mu = jnp.mean(x, axis=-1, keepdims=True)
    var = jnp.mean(jnp.square(x - mu), axis=-1, keepdims=True)
    return ((x - mu) * jax.lax.rsqrt(var + eps)) * g + b


# ----------------------------- Pallas kernels -----------------------------

def matmul_bias_kernel(x_ref, w_ref, b_ref, o_ref, acc_ref, *, activation=None):
    """Tiled X @ W + b (optional GELU). Grid = (M_tiles, N_tiles, K_tiles). bf16 MXU, f32 acc."""
    @pl.when(pl.program_id(2) == 0)
    def _init():
        acc_ref[...] = jnp.zeros_like(acc_ref)

    acc_ref[...] += jnp.dot(x_ref[...].astype(jnp.bfloat16),
                            w_ref[...].astype(jnp.bfloat16),
                            preferred_element_type=jnp.float32)

    @pl.when(pl.program_id(2) == pl.num_programs(2) - 1)
    def _finalize():
        y = acc_ref[...] + b_ref[...].astype(jnp.float32)
        if activation == "gelu":
            y = _gelu_tanh(y)
        o_ref[...] = y.astype(o_ref.dtype)


def ln_matmul_bias_kernel(x_ref, g_ref, bta_ref, w_ref, b_ref, o_ref, xn_ref, *,
                          activation=None, ln_eps=1e-5):
    """LayerNorm(x) @ W + b. Grid = (M_tiles, N_tiles); LN cached in VMEM across N tiles."""
    @pl.when(pl.program_id(1) == 0)
    def _ln():
        x = x_ref[...].astype(jnp.float32)
        xn_ref[...] = _layernorm_f32(x, g_ref[...], bta_ref[...], ln_eps)

    y = jnp.dot(xn_ref[...].astype(jnp.bfloat16),
                w_ref[...].astype(jnp.bfloat16),
                preferred_element_type=jnp.float32)
    y = y + b_ref[...].astype(jnp.float32)
    if activation == "gelu":
        y = _gelu_tanh(y)
    o_ref[...] = y.astype(o_ref.dtype)


def mlp_fused_kernel(x_ref, g_ref, bta_ref, w1_ref, b1_ref, w2_ref, b2_ref, o_ref,
                     xn_ref, acc_ref, *, ln_eps=1e-5):
    """Fused LN -> W1 -> GELU -> W2 (+b2).  Grid = (M_tiles, mlp_K_tiles);
    the hidden activation never touches HBM."""
    @pl.when(pl.program_id(1) == 0)
    def _init():
        x = x_ref[...].astype(jnp.float32)
        xn_ref[...] = _layernorm_f32(x, g_ref[...], bta_ref[...], ln_eps)
        acc_ref[...] = jnp.zeros_like(acc_ref)

    h = jnp.dot(xn_ref[...].astype(jnp.bfloat16),
                w1_ref[...].astype(jnp.bfloat16),
                preferred_element_type=jnp.float32)
    h = _gelu_tanh(h + b1_ref[...].astype(jnp.float32))
    acc_ref[...] += jnp.dot(h.astype(jnp.bfloat16),
                            w2_ref[...].astype(jnp.bfloat16),
                            preferred_element_type=jnp.float32)

    @pl.when(pl.program_id(1) == pl.num_programs(1) - 1)
    def _finalize():
        o_ref[...] = (acc_ref[...] + b2_ref[...].astype(jnp.float32)).astype(o_ref.dtype)


def ln_proj_kernel(x_ref, g_ref, bta_ref, proj_ref, xn_ref, dash_ref, kmax_ref, *,
                   ln_eps=1e-5, num_rows=0):
    """Attention pass 1 (row-flat): LayerNorm + performer feature logits.
    Writes xn, dash and a per-step partial key-max (lane-dense (8,128) block)."""
    x = x_ref[...].astype(jnp.float32)                                  # (tr, D)
    xn = _layernorm_f32(x, g_ref[...], bta_ref[...], ln_eps)
    d = xn.shape[-1]
    dn = d ** -0.25
    dash = jax.lax.dot_general((dn * xn).astype(jnp.bfloat16),
                               proj_ref[...].astype(jnp.bfloat16),
                               (((1,), (1,)), ((), ())),
                               preferred_element_type=jnp.float32)      # (tr, M)
    xn_ref[...] = xn.astype(xn_ref.dtype)
    dash_ref[...] = dash.astype(dash_ref.dtype)

    # Mask padded rows out of the global key-feature max.
    tr = x.shape[0]
    row = pl.program_id(0) * tr + jax.lax.broadcasted_iota(jnp.int32, (tr, 1), 0)
    dash_m = jnp.where(row < num_rows, dash, -jnp.inf)
    kmax_ref[...] = jnp.full(kmax_ref.shape, jnp.max(dash_m), kmax_ref.dtype)


def fast_attention_kernel(kmax_ref, xn_ref, dash_ref, o_ref, *, attn_eps=1e-4):
    """Attention pass 2: performer softmax-kernel features + linear attention,
    TB batch-heads per grid step, single (N, M) exponential per batch-head."""
    xn = xn_ref[...]                                                     # (TB, N, D) f32
    dash = dash_ref[...]                                                 # (TB, N, M) f32
    tb = xn.shape[0]
    d = xn.shape[-1]
    m = dash.shape[-1]
    ratio = m ** -0.5

    diag = (0.5 * d ** -0.5) * jnp.sum(xn * xn, axis=-1, keepdims=True)  # (TB, N, 1)
    rowmax = jnp.max(dash, axis=-1, keepdims=True)                       # (TB, N, 1)
    e = jnp.exp(dash - diag - rowmax)                                    # one exp per element
    q_prime = ratio * (e + attn_eps)
    # k_prime = ratio*(exp(dash - diag - kmax) + eps) via exact algebra (no second big exp)
    k_scale = ratio * jnp.exp(rowmax - kmax_ref[0])                      # (TB, N, 1)
    k_prime = e * k_scale + ratio * attn_eps
    v = xn

    k_sum = jnp.sum(k_prime, axis=1, keepdims=True)                      # (TB, 1, M)
    denom = jnp.sum(q_prime * k_sum, axis=-1, keepdims=True)             # (TB, N, 1)

    for b_i in range(tb):   # static unroll over the batched batch-heads
        ctx = jax.lax.dot_general(k_prime[b_i].astype(jnp.bfloat16),
                                  v[b_i].astype(jnp.bfloat16),
                                  (((0,), (0,)), ((), ())),
                                  preferred_element_type=jnp.float32)    # (M, D)
        num = jnp.dot(q_prime[b_i].astype(jnp.bfloat16),
                      ctx.astype(jnp.bfloat16),
                      preferred_element_type=jnp.float32)                # (N, D)
        o_ref[b_i] = (num / denom[b_i]).astype(o_ref.dtype)


# ------------------------- pallas_call wrappers ----------------------------

def pallas_linear(x2d, w, b, activation=None):
    """Tiled (M, K) @ (K, N) + b, lane-dense N; K padded to a multiple of 128."""
    M, K = x2d.shape
    N = w.shape[1]
    tm = min(512, _round_up(M, 8))
    tn = min(512, _round_up(N, 128))
    tk = _round_up(K, 128) if K <= 1024 else 512
    Mp, Np, Kp = _round_up(M, tm), _round_up(N, tn), _round_up(K, tk)

    xp = jnp.pad(x2d, ((0, Mp - M), (0, Kp - K))) if (Mp, Kp) != (M, K) else x2d
    wp = jnp.pad(w, ((0, Kp - K), (0, Np - N))) if (Kp, Np) != (K, N) else w
    bp = jnp.pad(b, (0, Np - N)).reshape(1, Np)

    grid = (Mp // tm, Np // tn, Kp // tk)
    cost = pl.CostEstimate(
        flops=2 * Mp * Np * Kp,
        transcendentals=(Mp * Np) if activation == "gelu" else 0,
        bytes_accessed=4 * (Mp * Kp + Kp * Np + Mp * Np + Np))

    out = pl.pallas_call(
        functools.partial(matmul_bias_kernel, activation=activation),
        out_shape=jax.ShapeDtypeStruct((Mp, Np), x2d.dtype),
        grid_spec=pltpu.PrefetchScalarGridSpec(
            num_scalar_prefetch=0,
            grid=grid,
            in_specs=[pl.BlockSpec((tm, tk), lambda i, j, k: (i, k)),
                      pl.BlockSpec((tk, tn), lambda i, j, k: (k, j)),
                      pl.BlockSpec((1, tn), lambda i, j, k: (0, j))],
            out_specs=pl.BlockSpec((tm, tn), lambda i, j, k: (i, j)),
            scratch_shapes=[pltpu.VMEM((tm, tn), jnp.float32)]),
        compiler_params=pltpu.CompilerParams(
            dimension_semantics=("parallel", "parallel", "arbitrary"),
            vmem_limit_bytes=_VMEM_LIMIT),
        cost_estimate=cost,
    )(xp, wp, bp)
    return out[:M, :N]


def pallas_ln_linear(x2d, gamma, beta, w, b, activation=None, ln_eps=1e-5):
    """Fused LayerNorm + (M, D) @ (D, N) + b; LN cached in VMEM across the N axis."""
    M, D = x2d.shape
    N = w.shape[1]
    tm = min(512, _round_up(M, 8))
    tn = min(512, _round_up(N, 128))
    Mp, Np = _round_up(M, tm), _round_up(N, tn)

    xp = jnp.pad(x2d, ((0, Mp - M), (0, 0))) if Mp != M else x2d
    wp = jnp.pad(w, ((0, 0), (0, Np - N))) if Np != N else w
    bp = jnp.pad(b, (0, Np - N)).reshape(1, Np)

    grid = (Mp // tm, Np // tn)
    cost = pl.CostEstimate(
        flops=2 * Mp * D * Np + 10 * Mp * D,
        transcendentals=(Mp * Np if activation == "gelu" else 0) + Mp,
        bytes_accessed=4 * (Mp * D + D * Np + Mp * Np + 2 * D + Np))

    out = pl.pallas_call(
        functools.partial(ln_matmul_bias_kernel, activation=activation, ln_eps=ln_eps),
        out_shape=jax.ShapeDtypeStruct((Mp, Np), x2d.dtype),
        grid_spec=pltpu.PrefetchScalarGridSpec(
            num_scalar_prefetch=0,
            grid=grid,
            in_specs=[pl.BlockSpec((tm, D), lambda i, j: (i, 0)),
                      pl.BlockSpec((1, D), lambda i, j: (0, 0)),
                      pl.BlockSpec((1, D), lambda i, j: (0, 0)),
                      pl.BlockSpec((D, tn), lambda i, j: (0, j)),
                      pl.BlockSpec((1, tn), lambda i, j: (0, j))],
            out_specs=pl.BlockSpec((tm, tn), lambda i, j: (i, j)),
            scratch_shapes=[pltpu.VMEM((tm, D), jnp.float32)]),
        compiler_params=pltpu.CompilerParams(
            dimension_semantics=("parallel", "arbitrary"),
            vmem_limit_bytes=_VMEM_LIMIT),
        cost_estimate=cost,
    )(xp, gamma.reshape(1, D), beta.reshape(1, D), wp, bp)
    return out[:M, :N]


def pallas_mlp_fused(x2d, gamma, beta, w1, b1, w2, b2, ln_eps=1e-5):
    """Fused MLPBlock: LayerNorm -> Linear -> GELU -> Linear, hidden kept in VMEM."""
    M, D = x2d.shape
    H = w1.shape[1]
    tm = min(512, _round_up(M, 8))
    tkm = min(512, _round_up(H, 128))
    Mp, Hp = _round_up(M, tm), _round_up(H, tkm)

    xp = jnp.pad(x2d, ((0, Mp - M), (0, 0))) if Mp != M else x2d
    w1p = jnp.pad(w1, ((0, 0), (0, Hp - H))) if Hp != H else w1
    b1p = jnp.pad(b1, (0, Hp - H)).reshape(1, Hp)
    w2p = jnp.pad(w2, ((0, Hp - H), (0, 0))) if Hp != H else w2
    b2p = b2.reshape(1, D)

    grid = (Mp // tm, Hp // tkm)
    cost = pl.CostEstimate(
        flops=4 * Mp * D * Hp + 10 * Mp * D,
        transcendentals=Mp * Hp + Mp,
        bytes_accessed=4 * (2 * Mp * D + 2 * D * Hp + Hp + 3 * D))

    out = pl.pallas_call(
        functools.partial(mlp_fused_kernel, ln_eps=ln_eps),
        out_shape=jax.ShapeDtypeStruct((Mp, D), x2d.dtype),
        grid_spec=pltpu.PrefetchScalarGridSpec(
            num_scalar_prefetch=0,
            grid=grid,
            in_specs=[pl.BlockSpec((tm, D), lambda i, k: (i, 0)),
                      pl.BlockSpec((1, D), lambda i, k: (0, 0)),
                      pl.BlockSpec((1, D), lambda i, k: (0, 0)),
                      pl.BlockSpec((D, tkm), lambda i, k: (0, k)),
                      pl.BlockSpec((1, tkm), lambda i, k: (0, k)),
                      pl.BlockSpec((tkm, D), lambda i, k: (k, 0)),
                      pl.BlockSpec((1, D), lambda i, k: (0, 0))],
            out_specs=pl.BlockSpec((tm, D), lambda i, k: (i, 0)),
            scratch_shapes=[pltpu.VMEM((tm, D), jnp.float32),
                            pltpu.VMEM((tm, D), jnp.float32)]),
        compiler_params=pltpu.CompilerParams(
            dimension_semantics=("parallel", "arbitrary"),
            vmem_limit_bytes=_VMEM_LIMIT),
        cost_estimate=cost,
    )(xp, gamma.reshape(1, D), beta.reshape(1, D), w1p, b1p, w2p, b2p)
    return out[:M]


def pallas_fast_attention(x, gamma, beta, proj, *, ln_eps=1e-5, attn_eps=1e-4):
    """Fused LN + Performer FastAttention with q = k = v = LN(x).

    Pass 1 (row-flat, 'parallel'): LN + feature logits (dash) + partial key max.
    Pass 2 ('parallel', TB batch-heads per step): linear attention from cached xn/dash."""
    lead = x.shape[:-2]
    N, D = x.shape[-2:]
    BH = max(1, math.prod(lead))
    M = proj.shape[0]
    g2 = gamma.reshape(1, D)
    b2 = beta.reshape(1, D)

    # ---------------- pass 1 ----------------
    R = BH * N
    x_flat = x.reshape(R, D)
    tr = R if R <= 1024 else 512
    Rp = _round_up(R, tr)
    if Rp != R:
        x_flat = jnp.pad(x_flat, ((0, Rp - R), (0, 0)))
    G1 = Rp // tr

    xn_flat, dash_flat, kmax_parts = pl.pallas_call(
        functools.partial(ln_proj_kernel, ln_eps=ln_eps, num_rows=R),
        out_shape=(jax.ShapeDtypeStruct((Rp, D), jnp.float32),
                   jax.ShapeDtypeStruct((Rp, M), jnp.float32),
                   jax.ShapeDtypeStruct((G1, 8, 128), jnp.float32)),
        grid_spec=pltpu.PrefetchScalarGridSpec(
            num_scalar_prefetch=0,
            grid=(G1,),
            in_specs=[pl.BlockSpec((tr, D), lambda s: (s, 0)),
                      pl.BlockSpec((1, D), lambda s: (0, 0)),
                      pl.BlockSpec((1, D), lambda s: (0, 0)),
                      pl.BlockSpec((M, D), lambda s: (0, 0))],
            out_specs=[pl.BlockSpec((tr, D), lambda s: (s, 0)),
                       pl.BlockSpec((tr, M), lambda s: (s, 0)),
                       pl.BlockSpec((1, 8, 128), lambda s: (s, 0, 0))]),
        compiler_params=pltpu.CompilerParams(
            dimension_semantics=("parallel",),
            vmem_limit_bytes=_VMEM_LIMIT),
        cost_estimate=pl.CostEstimate(flops=2 * Rp * D * M + 10 * Rp * D,
                                      transcendentals=Rp,
                                      bytes_accessed=4 * (2 * Rp * D + Rp * M + M * D)),
    )(x_flat, g2, b2, proj)

    kmax_s = jnp.max(kmax_parts).reshape(1)          # global key-feature max (performer)
    xn = xn_flat[:R].reshape(BH, N, D)
    dash = dash_flat[:R].reshape(BH, N, M)

    # ---------------- pass 2 ----------------
    TB = max(1, math.gcd(BH, 8))                     # batch several batch-heads per grid step
    G2 = BH // TB

    out = pl.pallas_call(
        functools.partial(fast_attention_kernel, attn_eps=attn_eps),
        out_shape=jax.ShapeDtypeStruct((BH, N, D), x.dtype),
        grid_spec=pltpu.PrefetchScalarGridSpec(
            num_scalar_prefetch=0,
            grid=(G2,),
            in_specs=[pl.BlockSpec(memory_space=pltpu.MemorySpace.SMEM),
                      pl.BlockSpec((TB, N, D), lambda s: (s, 0, 0)),
                      pl.BlockSpec((TB, N, M), lambda s: (s, 0, 0))],
            out_specs=pl.BlockSpec((TB, N, D), lambda s: (s, 0, 0))),
        compiler_params=pltpu.CompilerParams(
            dimension_semantics=("parallel",),
            vmem_limit_bytes=_VMEM_LIMIT),
        cost_estimate=pl.CostEstimate(flops=4 * BH * N * M * D,
                                      transcendentals=BH * N * (M + 1),
                                      bytes_accessed=4 * (BH * N * (2 * D + M))),
    )(kmax_s, xn, dash)
    return out.reshape(*lead, N, D)


# ------------------------------ model glue ---------------------------------

def extract_patches_nchw(x, ps):
    # (B, C, H, W) -> (B, num_patches, C*ps*ps), patch columns ordered (c, kh, kw)
    b, c, h, w = x.shape
    hp, wp = h // ps, w // ps
    x = x.reshape(b, c, hp, ps, wp, ps)
    x = x.transpose(0, 2, 4, 1, 3, 5)            # (b, hp, wp, c, ps, ps)
    return x.reshape(b, hp * wp, c * ps * ps)


def init_params(key, *, img_size, in_channels, patch_size, num_layers,
                embedding_dim, mlp_size, nb_features, num_classes):
    num_patches = (img_size // patch_size) ** 2
    keys = iter(jax.random.split(key, 8 + 8 * num_layers))

    def nrm(shape, scale=0.02):
        return (scale * jax.random.normal(next(keys), shape)).astype(jnp.float32)

    params = dict(
        cls=jax.random.normal(next(keys), (1, 1, embedding_dim), jnp.float32),
        pos=jax.random.normal(next(keys), (1, num_patches + 1, embedding_dim),
                              jnp.float32),
        patch_w=nrm((in_channels * patch_size * patch_size, embedding_dim)),
        patch_b=nrm((embedding_dim,)),
        lnc_g=jnp.ones((embedding_dim,), jnp.float32),
        lnc_b=jnp.zeros((embedding_dim,), jnp.float32),
        head_w=nrm((embedding_dim, num_classes)),
        head_b=nrm((num_classes,)),
        layers=[],
    )
    for _ in range(num_layers):
        params["layers"].append(dict(
            ln1_g=jnp.ones((embedding_dim,), jnp.float32),
            ln1_b=jnp.zeros((embedding_dim,), jnp.float32),
            proj=jax.random.normal(next(keys), (nb_features, embedding_dim),
                                   jnp.float32),
            ln2_g=jnp.ones((embedding_dim,), jnp.float32),
            ln2_b=jnp.zeros((embedding_dim,), jnp.float32),
            w1=nrm((embedding_dim, mlp_size)),
            b1=nrm((mlp_size,)),
            w2=nrm((mlp_size, embedding_dim)),
            b2=nrm((embedding_dim,)),
        ))
    return params


def vit_forward(params, x, *, patch_size, num_heads):
    b = x.shape[0]
    d = params["cls"].shape[-1]

    # Patch embedding (Conv2d stride==kernel -> tiled Pallas matmul, K padded to 128 multiple)
    patches = extract_patches_nchw(x, patch_size)             # (B, P, C*ps*ps)
    p = patches.shape[1]
    emb = pallas_linear(patches.reshape(b * p, -1),
                        params["patch_w"], params["patch_b"]).reshape(b, p, d)

    cls_tok = jnp.broadcast_to(params["cls"], (b, 1, d))
    h = jnp.concatenate([cls_tok, emb], axis=1)
    h = params["pos"] + h
    # embedding_dropout / attn_dropout / mlp_dropout: identity in inference mode

    for lp in params["layers"]:
        # MultiheadFastAttentionBlock: the reference stacks identical LN(h) copies over heads,
        # so per-head outputs are identical -> compute once, broadcast over a virtual heads
        # axis (numerically equivalent), then broadcasting residual (faithful shape growth).
        attn = pallas_fast_attention(h, lp["ln1_g"], lp["ln1_b"], lp["proj"])
        attn_heads = jnp.broadcast_to(
            jnp.expand_dims(attn, 1),
            attn.shape[:1] + (num_heads,) + attn.shape[1:])
        h = attn_heads + h

        # MLPBlock: fully fused LN -> W1 -> GELU -> W2 kernel (no HBM intermediate).
        lead = h.shape[:-1]
        z = pallas_mlp_fused(h.reshape(-1, d), lp["ln2_g"], lp["ln2_b"],
                             lp["w1"], lp["b1"], lp["w2"], lp["b2"])
        h = z.reshape(*lead, d) + h

    # Classifier on x[:, 0]: LN fused into the head linear (output padded to 128 lanes).
    cls_out = h[:, 0]
    lead = cls_out.shape[:-1]
    logits = pallas_ln_linear(cls_out.reshape(-1, d),
                              params["lnc_g"], params["lnc_b"],
                              params["head_w"], params["head_b"])
    return logits.reshape(*lead, params["head_w"].shape[1])


# --------------------------------- main -------------------------------------

if __name__ == "__main__":
    IMG, C, PS = 16, 3, 8            # num_patches = 4, seq = 5
    D, MLP_SIZE = 128, 256           # lane-dense feature dims (multiples of 128)
    HEADS, NB_FEATURES = 2, 128
    LAYERS, CLASSES, B = 2, 10, 2

    key = jax.random.PRNGKey(0)
    pkey, xkey = jax.random.split(key)
    params = init_params(pkey, img_size=IMG, in_channels=C, patch_size=PS,
                         num_layers=LAYERS, embedding_dim=D, mlp_size=MLP_SIZE,
                         nb_features=NB_FEATURES, num_classes=CLASSES)
    x = jax.random.normal(xkey, (B, C, IMG, IMG), jnp.float32)   # NCHW like PyTorch

    fwd = jax.jit(functools.partial(vit_forward, patch_size=PS, num_heads=HEADS))
    out = fwd(params, x)
    jax.block_until_ready(out)
    print("KERNEL_OK")
</pallas_src>

<mosaic_0001>
module attributes {stable_mosaic.version = 11 : i64} {
  func.func @mlp_fused_kernel(%arg0: i32, %arg1: i32, %arg2: memref<24x128xf32, #tpu.memory_space<vmem>>, %arg3: memref<1x128xf32, #tpu.memory_space<vmem>>, %arg4: memref<1x128xf32, #tpu.memory_space<vmem>>, %arg5: memref<128x256xf32, #tpu.memory_space<vmem>>, %arg6: memref<1x256xf32, #tpu.memory_space<vmem>>, %arg7: memref<256x128xf32, #tpu.memory_space<vmem>>, %arg8: memref<1x128xf32, #tpu.memory_space<vmem>>, %arg9: memref<24x128xf32, #tpu.memory_space<vmem>>, %arg10: memref<24x128xf32, #tpu.memory_space<vmem>>, %arg11: memref<24x128xf32, #tpu.memory_space<vmem>>) attributes {dimension_semantics = [#tpu.dimension_semantics<parallel>, #tpu.dimension_semantics<arbitrary>], iteration_bounds = array<i64: 1, 1>, scalar_prefetch = 0 : i64, scratch_operands = 2 : i64, tpu.core_type = #tpu.core_type<tc>, window_params = [{transform_indices = @transform_0, window_bounds = array<i64: 24, 128>}, {pipeline_mode = #tpu.pipeline_mode<synchronous>, transform_indices = @transform_1, window_bounds = array<i64: 1, 128>}, {pipeline_mode = #tpu.pipeline_mode<synchronous>, transform_indices = @transform_2, window_bounds = array<i64: 1, 128>}, {transform_indices = @transform_3, window_bounds = array<i64: 128, 256>}, {transform_indices = @transform_4, window_bounds = array<i64: 1, 256>}, {transform_indices = @transform_5, window_bounds = array<i64: 256, 128>}, {pipeline_mode = #tpu.pipeline_mode<synchronous>, transform_indices = @transform_6, window_bounds = array<i64: 1, 128>}, {transform_indices = @transform_7, window_bounds = array<i64: 24, 128>}]} {
    %c0_i32 = arith.constant 0 : i32
    %0 = arith.cmpi eq, %arg1, %c0_i32 : i32
    %1 = arith.extui %0 : i1 to i32
    %c0_i32_0 = arith.constant 0 : i32
    %2 = arith.cmpi ne, %1, %c0_i32_0 : i32
    scf.if %2 {
      %c0_19 = arith.constant 0 : index
      %c0_20 = arith.constant 0 : index
      %34 = vector.load %arg2[%c0_19, %c0_20] : memref<24x128xf32, #tpu.memory_space<vmem>>, vector<24x128xf32>
      %c0_21 = arith.constant 0 : index
      %c0_22 = arith.constant 0 : index
      %35 = vector.load %arg3[%c0_21, %c0_22] : memref<1x128xf32, #tpu.memory_space<vmem>>, vector<1x128xf32>
      %c0_23 = arith.constant 0 : index
      %c0_24 = arith.constant 0 : index
      %36 = vector.load %arg4[%c0_23, %c0_24] : memref<1x128xf32, #tpu.memory_space<vmem>>, vector<1x128xf32>
      %cst_25 = arith.constant dense<0.000000e+00> : vector<24xf32>
      %37 = vector.multi_reduction <add>, %34, %cst_25 [1] : vector<24x128xf32> to vector<24xf32>
      %38 = vector.shape_cast %37 : vector<24xf32> to vector<24x1xf32>
      %cst_26 = arith.constant 1.280000e+02 : f32
      %39 = vector.broadcast %cst_26 : f32 to vector<24x1xf32>
      %40 = arith.divf %38, %39 : vector<24x1xf32>
      %41 = vector.broadcast %40 : vector<24x1xf32> to vector<24x128xf32>
      %42 = arith.subf %34, %41 : vector<24x128xf32>
      %43 = arith.mulf %42, %42 : vector<24x128xf32>
      %cst_27 = arith.constant dense<0.000000e+00> : vector<24xf32>
      %44 = vector.multi_reduction <add>, %43, %cst_27 [1] : vector<24x128xf32> to vector<24xf32>
      %45 = vector.shape_cast %44 : vector<24xf32> to vector<24x1xf32>
      %cst_28 = arith.constant 1.280000e+02 : f32
      %46 = vector.broadcast %cst_28 : f32 to vector<24x1xf32>
      %47 = arith.divf %45, %46 : vector<24x1xf32>
      %48 = vector.broadcast %40 : vector<24x1xf32> to vector<24x128xf32>
      %49 = arith.subf %34, %48 : vector<24x128xf32>
      %cst_29 = arith.constant 9.99999974E-6 : f32
      %50 = vector.broadcast %cst_29 : f32 to vector<24x1xf32>
      %51 = arith.addf %47, %50 : vector<24x1xf32>
      %52 = math.rsqrt %51 : vector<24x1xf32>
      %53 = vector.broadcast %52 : vector<24x1xf32> to vector<24x128xf32>
      %54 = arith.mulf %49, %53 : vector<24x128xf32>
      %55 = vector.broadcast %35 : vector<1x128xf32> to vector<24x128xf32>
      %56 = arith.mulf %54, %55 : vector<24x128xf32>
      %57 = vector.broadcast %36 : vector<1x128xf32> to vector<24x128xf32>
      %58 = arith.addf %56, %57 : vector<24x128xf32>
      %c0_30 = arith.constant 0 : index
      %c0_31 = arith.constant 0 : index
      %59 = vector.load %arg10[%c0_30, %c0_31] : memref<24x128xf32, #tpu.memory_space<vmem>>, vector<24x128xf32>
      tpu.vector_store %arg10[%c0_30, %c0_31], %58 {strides = array<i32>} : memref<24x128xf32, #tpu.memory_space<vmem>>, vector<24x128xf32>,
      %cst_32 = arith.constant 0.000000e+00 : f32
      %60 = vector.broadcast %cst_32 : f32 to vector<24x128xf32>
      %c0_33 = arith.constant 0 : index
      %c0_34 = arith.constant 0 : index
      %61 = vector.load %arg11[%c0_33, %c0_34] : memref<24x128xf32, #tpu.memory_space<vmem>>, vector<24x128xf32>
      tpu.vector_store %arg11[%c0_33, %c0_34], %60 {strides = array<i32>} : memref<24x128xf32, #tpu.memory_space<vmem>>, vector<24x128xf32>,
    } else {
    }
    %c0 = arith.constant 0 : index
    %c0_1 = arith.constant 0 : index
    %3 = vector.load %arg10[%c0, %c0_1] : memref<24x128xf32, #tpu.memory_space<vmem>>, vector<24x128xf32>
    %4 = arith.truncf %3 : vector<24x128xf32> to vector<24x128xbf16>
    %c0_2 = arith.constant 0 : index
    %c0_3 = arith.constant 0 : index
    %5 = vector.load %arg5[%c0_2, %c0_3] : memref<128x256xf32, #tpu.memory_space<vmem>>, vector<128x256xf32>
    %6 = arith.truncf %5 : vector<128x256xf32> to vector<128x256xbf16>
    %cst = arith.constant dense<0.000000e+00> : vector<24x256xf32>
    %7 = tpu.matmul %4, %6, %cst {dimension_numbers = #tpu.dot_dimension_numbers<[1], [0], [0], [1], [0, 0, 1, 1], [], []>} : vector<24x128xbf16>, vector<128x256xbf16>, vector<24x256xf32> -> vector<24x256xf32>
    %c0_4 = arith.constant 0 : index
    %c0_5 = arith.constant 0 : index
    %8 = vector.load %arg6[%c0_4, %c0_5] : memref<1x256xf32, #tpu.memory_space<vmem>>, vector<1x256xf32>
    %9 = vector.broadcast %8 : vector<1x256xf32> to vector<24x256xf32>
    %10 = arith.addf %7, %9 : vector<24x256xf32>
    %cst_6 = arith.constant 5.000000e-01 : f32
    %11 = vector.broadcast %cst_6 : f32 to vector<24x256xf32>
    %12 = arith.mulf %11, %10 : vector<24x256xf32>
    %cst_7 = arith.constant 4.471500e-02 : f32
    %13 = vector.broadcast %cst_7 : f32 to vector<24x256xf32>
    %14 = arith.mulf %13, %10 : vector<24x256xf32>
    %15 = arith.mulf %14, %10 : vector<24x256xf32>
    %16 = arith.mulf %15, %10 : vector<24x256xf32>
    %17 = arith.addf %10, %16 : vector<24x256xf32>
    %cst_8 = arith.constant 0.797884583 : f32
    %18 = vector.broadcast %cst_8 : f32 to vector<24x256xf32>
    %19 = arith.mulf %18, %17 : vector<24x256xf32>
    %20 = math.tanh %19 : vector<24x256xf32>
    %cst_9 = arith.constant 1.000000e+00 : f32
    %21 = vector.broadcast %cst_9 : f32 to vector<24x256xf32>
    %22 = arith.addf %21, %20 : vector<24x256xf32>
    %23 = arith.mulf %12, %22 : vector<24x256xf32>
    %c0_10 = arith.constant 0 : index
    %c0_11 = arith.constant 0 : index
    %24 = vector.load %arg11[%c0_10, %c0_11] : memref<24x128xf32, #tpu.memory_space<vmem>>, vector<24x128xf32>
    %25 = arith.truncf %23 : vector<24x256xf32> to vector<24x256xbf16>
    %c0_12 = arith.constant 0 : index
    %c0_13 = arith.constant 0 : index
    %26 = vector.load %arg7[%c0_12, %c0_13] : memref<256x128xf32, #tpu.memory_space<vmem>>, vector<256x128xf32>
    %27 = arith.truncf %26 : vector<256x128xf32> to vector<256x128xbf16>
    %cst_14 = arith.constant dense<0.000000e+00> : vector<24x128xf32>
    %28 = tpu.matmul %25, %27, %cst_14 {dimension_numbers = #tpu.dot_dimension_numbers<[1], [0], [0], [1], [0, 0, 1, 1], [], []>} : vector<24x256xbf16>, vector<256x128xbf16>, vector<24x128xf32> -> vector<24x128xf32>
    %29 = arith.addf %24, %28 : vector<24x128xf32>
    %c0_15 = arith.constant 0 : index
    %c0_16 = arith.constant 0 : index
    %30 = vector.load %arg11[%c0_15, %c0_16] : memref<24x128xf32, #tpu.memory_space<vmem>>, vector<24x128xf32>
    tpu.vector_store %arg11[%c0_15, %c0_16], %29 {strides = array<i32>} : memref<24x128xf32, #tpu.memory_space<vmem>>, vector<24x128xf32>,
    %c0_i32_17 = arith.constant 0 : i32
    %31 = arith.cmpi eq, %arg1, %c0_i32_17 : i32
    %32 = arith.extui %31 : i1 to i32
    %c0_i32_18 = arith.constant 0 : i32
    %33 = arith.cmpi ne, %32, %c0_i32_18 : i32
    scf.if %33 {
      %c0_19 = arith.constant 0 : index
      %c0_20 = arith.constant 0 : index
      %34 = vector.load %arg11[%c0_19, %c0_20] : memref<24x128xf32, #tpu.memory_space<vmem>>, vector<24x128xf32>
      %c0_21 = arith.constant 0 : index
      %c0_22 = arith.constant 0 : index
      %35 = vector.load %arg8[%c0_21, %c0_22] : memref<1x128xf32, #tpu.memory_space<vmem>>, vector<1x128xf32>
      %36 = vector.broadcast %35 : vector<1x128xf32> to vector<24x128xf32>
      %37 = arith.addf %34, %36 : vector<24x128xf32>
      %c0_23 = arith.constant 0 : index
      %c0_24 = arith.constant 0 : index
      %38 = vector.load %arg9[%c0_23, %c0_24] : memref<24x128xf32, #tpu.memory_space<vmem>>, vector<24x128xf32>
      tpu.vector_store %arg9[%c0_23, %c0_24], %37 {strides = array<i32>} : memref<24x128xf32, #tpu.memory_space<vmem>>, vector<24x128xf32>,
    } else {
    }
    return
  }
  func.func @transform_0(%arg0: i32, %arg1: i32) -> (i32, i32) {
    %c0_i32 = arith.constant 0 : i32
    %c0_i32_0 = arith.constant 0 : i32
    return %arg0, %c0_i32 : i32, i32
  }
  func.func @transform_1(%arg0: i32, %arg1: i32) -> (i32, i32) {
    %c0_i32 = arith.constant 0 : i32
    %c0_i32_0 = arith.constant 0 : i32
    %c0_i32_1 = arith.constant 0 : i32
    return %c0_i32, %c0_i32_0 : i32, i32
  }
  func.func @transform_2(%arg0: i32, %arg1: i32) -> (i32, i32) {
    %c0_i32 = arith.constant 0 : i32
    %c0_i32_0 = arith.constant 0 : i32
    %c0_i32_1 = arith.constant 0 : i32
    return %c0_i32, %c0_i32_0 : i32, i32
  }
  func.func @transform_3(%arg0: i32, %arg1: i32) -> (i32, i32) {
    %c0_i32 = arith.constant 0 : i32
    %c0_i32_0 = arith.constant 0 : i32
    return %c0_i32, %arg1 : i32, i32
  }
  func.func @transform_4(%arg0: i32, %arg1: i32) -> (i32, i32) {
    %c0_i32 = arith.constant 0 : i32
    %c0_i32_0 = arith.constant 0 : i32
    return %c0_i32, %arg1 : i32, i32
  }
  func.func @transform_5(%arg0: i32, %arg1: i32) -> (i32, i32) {
    %c0_i32 = arith.constant 0 : i32
    %c0_i32_0 = arith.constant 0 : i32
    return %arg1, %c0_i32 : i32, i32
  }
  func.func @transform_6(%arg0: i32, %arg1: i32) -> (i32, i32) {
    %c0_i32 = arith.constant 0 : i32
    %c0_i32_0 = arith.constant 0 : i32
    %c0_i32_1 = arith.constant 0 : i32
    return %c0_i32, %c0_i32_0 : i32, i32
  }
  func.func @transform_7(%arg0: i32, %arg1: i32) -> (i32, i32) {
    %c0_i32 = arith.constant 0 : i32
    %c0_i32_0 = arith.constant 0 : i32
    return %arg0, %c0_i32 : i32, i32
  }
}

module attributes {stable_mosaic.version = 11 : i64} {
  func.func @matmul_bias_kernel(%arg0: i32, %arg1: i32, %arg2: i32, %arg3: memref<8x256xf32, #tpu.memory_space<vmem>>, %arg4: memref<256x128xf32, #tpu.memory_space<vmem>>, %arg5: memref<1x128xf32, #tpu.memory_space<vmem>>, %arg6: memref<8x128xf32, #tpu.memory_space<vmem>>, %arg7: memref<8x128xf32, #tpu.memory_space<vmem>>) attributes {dimension_semantics = [#tpu.dimension_semantics<parallel>, #tpu.dimension_semantics<parallel>, #tpu.dimension_semantics<arbitrary>], iteration_bounds = array<i64: 1, 1, 1>, scalar_prefetch = 0 : i64, scratch_operands = 1 : i64, tpu.core_type = #tpu.core_type<tc>, window_params = [{transform_indices = @transform_0, window_bounds = array<i64: 8, 256>}, {transform_indices = @transform_1, window_bounds = array<i64: 256, 128>}, {transform_indices = @transform_2, window_bounds = array<i64: 1, 128>}, {transform_indices = @transform_3, window_bounds = array<i64: 8, 128>}]} {
    %c0_i32 = arith.constant 0 : i32
    %0 = arith.cmpi eq, %arg2, %c0_i32 : i32
    %1 = arith.extui %0 : i1 to i32
    %c0_i32_0 = arith.constant 0 : i32
    %2 = arith.cmpi ne, %1, %c0_i32_0 : i32
    scf.if %2 {
      %cst_10 = arith.constant 0.000000e+00 : f32
      %14 = vector.broadcast %cst_10 : f32 to vector<8x128xf32>
      %c0_11 = arith.constant 0 : index
      %c0_12 = arith.constant 0 : index
      %15 = vector.load %arg7[%c0_11, %c0_12] : memref<8x128xf32, #tpu.memory_space<vmem>>, vector<8x128xf32>
      tpu.vector_store %arg7[%c0_11, %c0_12], %14 {strides = array<i32>} : memref<8x128xf32, #tpu.memory_space<vmem>>, vector<8x128xf32>,
    } else {
    }
    %c0 = arith.constant 0 : index
    %c0_1 = arith.constant 0 : index
    %3 = vector.load %arg7[%c0, %c0_1] : memref<8x128xf32, #tpu.memory_space<vmem>>, vector<8x128xf32>
    %c0_2 = arith.constant 0 : index
    %c0_3 = arith.constant 0 : index
    %4 = vector.load %arg3[%c0_2, %c0_3] : memref<8x256xf32, #tpu.memory_space<vmem>>, vector<8x256xf32>
    %5 = arith.truncf %4 : vector<8x256xf32> to vector<8x256xbf16>
    %c0_4 = arith.constant 0 : index
    %c0_5 = arith.constant 0 : index
    %6 = vector.load %arg4[%c0_4, %c0_5] : memref<256x128xf32, #tpu.memory_space<vmem>>, vector<256x128xf32>
    %7 = arith.truncf %6 : vector<256x128xf32> to vector<256x128xbf16>
    %cst = arith.constant dense<0.000000e+00> : vector<8x128xf32>
    %8 = tpu.matmul %5, %7, %cst {dimension_numbers = #tpu.dot_dimension_numbers<[1], [0], [0], [1], [0, 0, 1, 1], [], []>} : vector<8x256xbf16>, vector<256x128xbf16>, vector<8x128xf32> -> vector<8x128xf32>
    %9 = arith.addf %3, %8 : vector<8x128xf32>
    %c0_6 = arith.constant 0 : index
    %c0_7 = arith.constant 0 : index
    %10 = vector.load %arg7[%c0_6, %c0_7] : memref<8x128xf32, #tpu.memory_space<vmem>>, vector<8x128xf32>
    tpu.vector_store %arg7[%c0_6, %c0_7], %9 {strides = array<i32>} : memref<8x128xf32, #tpu.memory_space<vmem>>, vector<8x128xf32>,
    %c0_i32_8 = arith.constant 0 : i32
    %11 = arith.cmpi eq, %arg2, %c0_i32_8 : i32
    %12 = arith.extui %11 : i1 to i32
    %c0_i32_9 = arith.constant 0 : i32
    %13 = arith.cmpi ne, %12, %c0_i32_9 : i32
    scf.if %13 {
      %c0_10 = arith.constant 0 : index
      %c0_11 = arith.constant 0 : index
      %14 = vector.load %arg7[%c0_10, %c0_11] : memref<8x128xf32, #tpu.memory_space<vmem>>, vector<8x128xf32>
      %c0_12 = arith.constant 0 : index
      %c0_13 = arith.constant 0 : index
      %15 = vector.load %arg5[%c0_12, %c0_13] : memref<1x128xf32, #tpu.memory_space<vmem>>, vector<1x128xf32>
      %16 = vector.broadcast %15 : vector<1x128xf32> to vector<8x128xf32>
      %17 = arith.addf %14, %16 : vector<8x128xf32>
      %c0_14 = arith.constant 0 : index
      %c0_15 = arith.constant 0 : index
      %18 = vector.load %arg6[%c0_14, %c0_15] : memref<8x128xf32, #tpu.memory_space<vmem>>, vector<8x128xf32>
      tpu.vector_store %arg6[%c0_14, %c0_15], %17 {strides = array<i32>} : memref<8x128xf32, #tpu.memory_space<vmem>>, vector<8x128xf32>,
    } else {
    }
    return
  }
  func.func @transform_0(%arg0: i32, %arg1: i32, %arg2: i32) -> (i32, i32) {
    %c0_i32 = arith.constant 0 : i32
    return %arg0, %arg2 : i32, i32
  }
  func.func @transform_1(%arg0: i32, %arg1: i32, %arg2: i32) -> (i32, i32) {
    %c0_i32 = arith.constant 0 : i32
    return %arg2, %arg1 : i32, i32
  }
  func.func @transform_2(%arg0: i32, %arg1: i32, %arg2: i32) -> (i32, i32) {
    %c0_i32 = arith.constant 0 : i32
    %c0_i32_0 = arith.constant 0 : i32
    return %c0_i32, %arg1 : i32, i32
  }
  func.func @transform_3(%arg0: i32, %arg1: i32, %arg2: i32) -> (i32, i32) {
    %c0_i32 = arith.constant 0 : i32
    return %arg0, %arg1 : i32, i32
  }
}

module attributes {stable_mosaic.version = 11 : i64} {
  func.func @ln_proj_kernel(%arg0: i32, %arg1: memref<10x128xf32, #tpu.memory_space<vmem>>, %arg2: memref<1x128xf32, #tpu.memory_space<vmem>>, %arg3: memref<1x128xf32, #tpu.memory_space<vmem>>, %arg4: memref<128x128xf32, #tpu.memory_space<vmem>>, %arg5: memref<10x128xf32, #tpu.memory_space<vmem>>, %arg6: memref<10x128xf32, #tpu.memory_space<vmem>>, %arg7: memref<1x8x128xf32, #tpu.memory_space<vmem>>) attributes {dimension_semantics = [#tpu.dimension_semantics<parallel>], iteration_bounds = array<i64: 1>, scalar_prefetch = 0 : i64, scratch_operands = 0 : i64, tpu.core_type = #tpu.core_type<tc>, window_params = [{transform_indices = @transform_0, window_bounds = array<i64: 10, 128>}, {pipeline_mode = #tpu.pipeline_mode<synchronous>, transform_indices = @transform_1, window_bounds = array<i64: 1, 128>}, {pipeline_mode = #tpu.pipeline_mode<synchronous>, transform_indices = @transform_2, window_bounds = array<i64: 1, 128>}, {pipeline_mode = #tpu.pipeline_mode<synchronous>, transform_indices = @transform_3, window_bounds = array<i64: 128, 128>}, {transform_indices = @transform_4, window_bounds = array<i64: 10, 128>}, {transform_indices = @transform_5, window_bounds = array<i64: 10, 128>}, {transform_indices = @transform_6, window_bounds = array<i64: 1, 8, 128>}]} {
    %c0 = arith.constant 0 : index
    %c0_0 = arith.constant 0 : index
    %0 = vector.load %arg1[%c0, %c0_0] : memref<10x128xf32, #tpu.memory_space<vmem>>, vector<10x128xf32>
    %c0_1 = arith.constant 0 : index
    %c0_2 = arith.constant 0 : index
    %1 = vector.load %arg2[%c0_1, %c0_2] : memref<1x128xf32, #tpu.memory_space<vmem>>, vector<1x128xf32>
    %c0_3 = arith.constant 0 : index
    %c0_4 = arith.constant 0 : index
    %2 = vector.load %arg3[%c0_3, %c0_4] : memref<1x128xf32, #tpu.memory_space<vmem>>, vector<1x128xf32>
    %cst = arith.constant dense<0.000000e+00> : vector<10xf32>
    %3 = vector.multi_reduction <add>, %0, %cst [1] : vector<10x128xf32> to vector<10xf32>
    %4 = vector.shape_cast %3 : vector<10xf32> to vector<10x1xf32>
    %cst_5 = arith.constant 1.280000e+02 : f32
    %5 = vector.broadcast %cst_5 : f32 to vector<10x1xf32>
    %6 = arith.divf %4, %5 : vector<10x1xf32>
    %7 = vector.broadcast %6 : vector<10x1xf32> to vector<10x128xf32>
    %8 = arith.subf %0, %7 : vector<10x128xf32>
    %9 = arith.mulf %8, %8 : vector<10x128xf32>
    %cst_6 = arith.constant dense<0.000000e+00> : vector<10xf32>
    %10 = vector.multi_reduction <add>, %9, %cst_6 [1] : vector<10x128xf32> to vector<10xf32>
    %11 = vector.shape_cast %10 : vector<10xf32> to vector<10x1xf32>
    %cst_7 = arith.constant 1.280000e+02 : f32
    %12 = vector.broadcast %cst_7 : f32 to vector<10x1xf32>
    %13 = arith.divf %11, %12 : vector<10x1xf32>
    %14 = vector.broadcast %6 : vector<10x1xf32> to vector<10x128xf32>
    %15 = arith.subf %0, %14 : vector<10x128xf32>
    %cst_8 = arith.constant 9.99999974E-6 : f32
    %16 = vector.broadcast %cst_8 : f32 to vector<10x1xf32>
    %17 = arith.addf %13, %16 : vector<10x1xf32>
    %18 = math.rsqrt %17 : vector<10x1xf32>
    %19 = vector.broadcast %18 : vector<10x1xf32> to vector<10x128xf32>
    %20 = arith.mulf %15, %19 : vector<10x128xf32>
    %21 = vector.broadcast %1 : vector<1x128xf32> to vector<10x128xf32>
    %22 = arith.mulf %20, %21 : vector<10x128xf32>
    %23 = vector.broadcast %2 : vector<1x128xf32> to vector<10x128xf32>
    %24 = arith.addf %22, %23 : vector<10x128xf32>
    %cst_9 = arith.constant 0.297301769 : f32
    %25 = vector.broadcast %cst_9 : f32 to vector<10x128xf32>
    %26 = arith.mulf %25, %24 : vector<10x128xf32>
    %27 = arith.truncf %26 : vector<10x128xf32> to vector<10x128xbf16>
    %c0_10 = arith.constant 0 : index
    %c0_11 = arith.constant 0 : index
    %28 = vector.load %arg4[%c0_10, %c0_11] : memref<128x128xf32, #tpu.memory_space<vmem>>, vector<128x128xf32>
    %29 = arith.truncf %28 : vector<128x128xf32> to vector<128x128xbf16>
    %cst_12 = arith.constant dense<0.000000e+00> : vector<10x128xf32>
    %30 = tpu.matmul %27, %29, %cst_12 {dimension_numbers = #tpu.dot_dimension_numbers<[1], [1], [0], [0], [0, 0, 1, 0], [], []>} : vector<10x128xbf16>, vector<128x128xbf16>, vector<10x128xf32> -> vector<10x128xf32>
    %c0_13 = arith.constant 0 : index
    %c0_14 = arith.constant 0 : index
    %31 = vector.load %arg5[%c0_13, %c0_14] : memref<10x128xf32, #tpu.memory_space<vmem>>, vector<10x128xf32>
    tpu.vector_store %arg5[%c0_13, %c0_14], %24 {strides = array<i32>} : memref<10x128xf32, #tpu.memory_space<vmem>>, vector<10x128xf32>,
    %c0_15 = arith.constant 0 : index
    %c0_16 = arith.constant 0 : index
    %32 = vector.load %arg6[%c0_15, %c0_16] : memref<10x128xf32, #tpu.memory_space<vmem>>, vector<10x128xf32>
    tpu.vector_store %arg6[%c0_15, %c0_16], %30 {strides = array<i32>} : memref<10x128xf32, #tpu.memory_space<vmem>>, vector<10x128xf32>,
    %c10_i32 = arith.constant 10 : i32
    %33 = arith.muli %arg0, %c10_i32 : i32
    %34 = tpu.iota {dimensions = array<i32: 0>} : vector<10x1xi32>
    %35 = vector.broadcast %33 : i32 to vector<10x1xi32>
    %36 = arith.addi %35, %34 : vector<10x1xi32>
    %c10_i32_17 = arith.constant 10 : i32
    %37 = vector.broadcast %c10_i32_17 : i32 to vector<10x1xi32>
    %38 = arith.cmpi slt, %36, %37 : vector<10x1xi32>
    %cst_18 = arith.constant 0xFF800000 : f32
    %39 = vector.shape_cast %38 : vector<10x1xi1> to vector<10x1xi1>
    %40 = vector.broadcast %39 : vector<10x1xi1> to vector<10x128xi1>
    %41 = vector.broadcast %cst_18 : f32 to vector<10x128xf32>
    %42 = arith.select %40, %30, %41 : vector<10x128xi1>, vector<10x128xf32>
    %43 = vector.shape_cast %42 : vector<10x128xf32> to vector<1x10x128xf32>
    %cst_19 = arith.constant dense<0xFF800000> : vector<1xf32>
    %44 = vector.multi_reduction <maximumf>, %43, %cst_19 [1, 2] : vector<1x10x128xf32> to vector<1xf32>
    %45 = vector.shape_cast %44 : vector<1xf32> to vector<1x1x1xf32>
    %46 = vector.extract %45[0, 0, 0] : f32 from vector<1x1x1xf32>
    %47 = vector.broadcast %46 : f32 to vector<1x8x128xf32>
    %c0_20 = arith.constant 0 : index
    %c0_21 = arith.constant 0 : index
    %c0_22 = arith.constant 0 : index
    %48 = vector.load %arg7[%c0_20, %c0_21, %c0_22] : memref<1x8x128xf32, #tpu.memory_space<vmem>>, vector<1x8x128xf32>
    tpu.vector_store %arg7[%c0_20, %c0_21, %c0_22], %47 {strides = array<i32>} : memref<1x8x128xf32, #tpu.memory_space<vmem>>, vector<1x8x128xf32>,
    return
  }
  func.func @transform_0(%arg0: i32) -> (i32, i32) {
    %c0_i32 = arith.constant 0 : i32
    %c0_i32_0 = arith.constant 0 : i32
    return %arg0, %c0_i32 : i32, i32
  }
  func.func @transform_1(%arg0: i32) -> (i32, i32) {
    %c0_i32 = arith.constant 0 : i32
    %c0_i32_0 = arith.constant 0 : i32
    %c0_i32_1 = arith.constant 0 : i32
    return %c0_i32, %c0_i32_0 : i32, i32
  }
  func.func @transform_2(%arg0: i32) -> (i32, i32) {
    %c0_i32 = arith.constant 0 : i32
    %c0_i32_0 = arith.constant 0 : i32
    %c0_i32_1 = arith.constant 0 : i32
    return %c0_i32, %c0_i32_0 : i32, i32
  }
  func.func @transform_3(%arg0: i32) -> (i32, i32) {
    %c0_i32 = arith.constant 0 : i32
    %c0_i32_0 = arith.constant 0 : i32
    %c0_i32_1 = arith.constant 0 : i32
    return %c0_i32, %c0_i32_0 : i32, i32
  }
  func.func @transform_4(%arg0: i32) -> (i32, i32) {
    %c0_i32 = arith.constant 0 : i32
    %c0_i32_0 = arith.constant 0 : i32
    return %arg0, %c0_i32 : i32, i32
  }
  func.func @transform_5(%arg0: i32) -> (i32, i32) {
    %c0_i32 = arith.constant 0 : i32
    %c0_i32_0 = arith.constant 0 : i32
    return %arg0, %c0_i32 : i32, i32
  }
  func.func @transform_6(%arg0: i32) -> (i32, i32, i32) {
    %c0_i32 = arith.constant 0 : i32
    %c0_i32_0 = arith.constant 0 : i32
    %c0_i32_1 = arith.constant 0 : i32
    return %arg0, %c0_i32, %c0_i32_0 : i32, i32, i32
  }
}

module attributes {stable_mosaic.version = 11 : i64} {
  func.func @fast_attention_kernel(%arg0: i32, %arg1: memref<1xf32, #tpu.memory_space<smem>>, %arg2: memref<2x5x128xf32, #tpu.memory_space<vmem>>, %arg3: memref<2x5x128xf32, #tpu.memory_space<vmem>>, %arg4: memref<2x5x128xf32, #tpu.memory_space<vmem>>) attributes {dimension_semantics = [#tpu.dimension_semantics<parallel>], iteration_bounds = array<i64: 1>, scalar_prefetch = 0 : i64, scratch_operands = 0 : i64, tpu.core_type = #tpu.core_type<tc>, window_params = [{transform_indices = @transform_0, window_bounds = array<i64: 1>}, {transform_indices = @transform_1, window_bounds = array<i64: 2, 5, 128>}, {transform_indices = @transform_2, window_bounds = array<i64: 2, 5, 128>}, {transform_indices = @transform_3, window_bounds = array<i64: 2, 5, 128>}]} {
    %c0 = arith.constant 0 : index
    %c0_0 = arith.constant 0 : index
    %c0_1 = arith.constant 0 : index
    %0 = vector.load %arg2[%c0, %c0_0, %c0_1] : memref<2x5x128xf32, #tpu.memory_space<vmem>>, vector<2x5x128xf32>
    %c0_2 = arith.constant 0 : index
    %c0_3 = arith.constant 0 : index
    %c0_4 = arith.constant 0 : index
    %1 = vector.load %arg3[%c0_2, %c0_3, %c0_4] : memref<2x5x128xf32, #tpu.memory_space<vmem>>, vector<2x5x128xf32>
    %2 = arith.mulf %0, %0 : vector<2x5x128xf32>
    %cst = arith.constant dense<0.000000e+00> : vector<2x5xf32>
    %3 = vector.multi_reduction <add>, %2, %cst [2] : vector<2x5x128xf32> to vector<2x5xf32>
    %4 = vector.shape_cast %3 : vector<2x5xf32> to vector<2x5x1xf32>
    %cst_5 = arith.constant 0.0441941731 : f32
    %5 = vector.broadcast %cst_5 : f32 to vector<2x5x1xf32>
    %6 = arith.mulf %5, %4 : vector<2x5x1xf32>
    %cst_6 = arith.constant dense<0xFF800000> : vector<2x5xf32>
    %7 = vector.multi_reduction <maximumf>, %1, %cst_6 [2] : vector<2x5x128xf32> to vector<2x5xf32>
    %8 = vector.shape_cast %7 : vector<2x5xf32> to vector<2x5x1xf32>
    %9 = vector.broadcast %6 : vector<2x5x1xf32> to vector<2x5x128xf32>
    %10 = arith.subf %1, %9 : vector<2x5x128xf32>
    %11 = vector.broadcast %8 : vector<2x5x1xf32> to vector<2x5x128xf32>
    %12 = arith.subf %10, %11 : vector<2x5x128xf32>
    %13 = math.exp %12 : vector<2x5x128xf32>
    %cst_7 = arith.constant 9.99999974E-5 : f32
    %14 = vector.broadcast %cst_7 : f32 to vector<2x5x128xf32>
    %15 = arith.addf %13, %14 : vector<2x5x128xf32>
    %cst_8 = arith.constant 0.0883883461 : f32
    %16 = vector.broadcast %cst_8 : f32 to vector<2x5x128xf32>
    %17 = arith.mulf %16, %15 : vector<2x5x128xf32>
    %c0_9 = arith.constant 0 : index
    %18 = memref.load %arg1[%c0_9] : memref<1xf32, #tpu.memory_space<smem>>
    %19 = vector.broadcast %18 : f32 to vector<2x5x1xf32>
    %20 = arith.subf %8, %19 : vector<2x5x1xf32>
    %21 = math.exp %20 : vector<2x5x1xf32>
    %cst_10 = arith.constant 0.0883883461 : f32
    %22 = vector.broadcast %cst_10 : f32 to vector<2x5x1xf32>
    %23 = arith.mulf %22, %21 : vector<2x5x1xf32>
    %24 = vector.broadcast %23 : vector<2x5x1xf32> to vector<2x5x128xf32>
    %25 = arith.mulf %13, %24 : vector<2x5x128xf32>
    %cst_11 = arith.constant 8.83883513E-6 : f32
    %26 = vector.broadcast %cst_11 : f32 to vector<2x5x128xf32>
    %27 = arith.addf %25, %26 : vector<2x5x128xf32>
    %cst_12 = arith.constant dense<0.000000e+00> : vector<2x128xf32>
    %28 = vector.multi_reduction <add>, %27, %cst_12 [1] : vector<2x5x128xf32> to vector<2x128xf32>
    %29 = vector.shape_cast %28 : vector<2x128xf32> to vector<2x1x128xf32>
    %30 = vector.broadcast %29 : vector<2x1x128xf32> to vector<2x5x128xf32>
    %31 = arith.mulf %17, %30 : vector<2x5x128xf32>
    %cst_13 = arith.constant dense<0.000000e+00> : vector<2x5xf32>
    %32 = vector.multi_reduction <add>, %31, %cst_13 [2] : vector<2x5x128xf32> to vector<2x5xf32>
    %33 = vector.shape_cast %32 : vector<2x5xf32> to vector<2x5x1xf32>
    %34 = vector.extract_strided_slice %27 {offsets = [0, 0, 0], sizes = [1, 5, 128], strides = [1, 1, 1]} : vector<2x5x128xf32> to vector<1x5x128xf32>
    %35 = vector.shape_cast %34 : vector<1x5x128xf32> to vector<5x128xf32>
    %36 = arith.truncf %35 : vector<5x128xf32> to vector<5x128xbf16>
    %37 = vector.extract_strided_slice %0 {offsets = [0, 0, 0], sizes = [1, 5, 128], strides = [1, 1, 1]} : vector<2x5x128xf32> to vector<1x5x128xf32>
    %38 = vector.shape_cast %37 : vector<1x5x128xf32> to vector<5x128xf32>
    %39 = arith.truncf %38 : vector<5x128xf32> to vector<5x128xbf16>
    %cst_14 = arith.constant dense<0.000000e+00> : vector<128x128xf32>
    %40 = tpu.matmul %36, %39, %cst_14 {dimension_numbers = #tpu.dot_dimension_numbers<[0], [0], [1], [1], [0, 1, 1, 1], [], []>} : vector<5x128xbf16>, vector<5x128xbf16>, vector<128x128xf32> -> vector<128x128xf32>
    %41 = vector.extract_strided_slice %17 {offsets = [0, 0, 0], sizes = [1, 5, 128], strides = [1, 1, 1]} : vector<2x5x128xf32> to vector<1x5x128xf32>
    %42 = vector.shape_cast %41 : vector<1x5x128xf32> to vector<5x128xf32>
    %43 = arith.truncf %42 : vector<5x128xf32> to vector<5x128xbf16>
    %44 = arith.truncf %40 : vector<128x128xf32> to vector<128x128xbf16>
    %cst_15 = arith.constant dense<0.000000e+00> : vector<5x128xf32>
    %45 = tpu.matmul %43, %44, %cst_15 {dimension_numbers = #tpu.dot_dimension_numbers<[1], [0], [0], [1], [0, 0, 1, 1], [], []>} : vector<5x128xbf16>, vector<128x128xbf16>, vector<5x128xf32> -> vector<5x128xf32>
    %46 = vector.extract_strided_slice %33 {offsets = [0, 0, 0], sizes = [1, 5, 1], strides = [1, 1, 1]} : vector<2x5x1xf32> to vector<1x5x1xf32>
    %47 = vector.shape_cast %46 : vector<1x5x1xf32> to vector<5x1xf32>
    %48 = vector.broadcast %47 : vector<5x1xf32> to vector<5x128xf32>
    %49 = arith.divf %45, %48 : vector<5x128xf32>
    %c0_16 = arith.constant 0 : index
    %c0_17 = arith.constant 0 : index
    %c0_18 = arith.constant 0 : index
    %50 = vector.load %arg4[%c0_16, %c0_17, %c0_18] : memref<2x5x128xf32, #tpu.memory_space<vmem>>, vector<1x5x128xf32>
    %51 = vector.shape_cast %50 : vector<1x5x128xf32> to vector<5x128xf32>
    %52 = vector.shape_cast %49 : vector<5x128xf32> to vector<1x5x128xf32>
    tpu.vector_store %arg4[%c0_16, %c0_17, %c0_18], %52 {strides = array<i32>} : memref<2x5x128xf32, #tpu.memory_space<vmem>>, vector<1x5x128xf32>,
    %53 = vector.extract_strided_slice %27 {offsets = [1, 0, 0], sizes = [1, 5, 128], strides = [1, 1, 1]} : vector<2x5x128xf32> to vector<1x5x128xf32>
    %54 = vector.shape_cast %53 : vector<1x5x128xf32> to vector<5x128xf32>
    %55 = arith.truncf %54 : vector<5x128xf32> to vector<5x128xbf16>
    %56 = vector.extract_strided_slice %0 {offsets = [1, 0, 0], sizes = [1, 5, 128], strides = [1, 1, 1]} : vector<2x5x128xf32> to vector<1x5x128xf32>
    %57 = vector.shape_cast %56 : vector<1x5x128xf32> to vector<5x128xf32>
    %58 = arith.truncf %57 : vector<5x128xf32> to vector<5x128xbf16>
    %cst_19 = arith.constant dense<0.000000e+00> : vector<128x128xf32>
    %59 = tpu.matmul %55, %58, %cst_19 {dimension_numbers = #tpu.dot_dimension_numbers<[0], [0], [1], [1], [0, 1, 1, 1], [], []>} : vector<5x128xbf16>, vector<5x128xbf16>, vector<128x128xf32> -> vector<128x128xf32>
    %60 = vector.extract_strided_slice %17 {offsets = [1, 0, 0], sizes = [1, 5, 128], strides = [1, 1, 1]} : vector<2x5x128xf32> to vector<1x5x128xf32>
    %61 = vector.shape_cast %60 : vector<1x5x128xf32> to vector<5x128xf32>
    %62 = arith.truncf %61 : vector<5x128xf32> to vector<5x128xbf16>
    %63 = arith.truncf %59 : vector<128x128xf32> to vector<128x128xbf16>
    %cst_20 = arith.constant dense<0.000000e+00> : vector<5x128xf32>
    %64 = tpu.matmul %62, %63, %cst_20 {dimension_numbers = #tpu.dot_dimension_numbers<[1], [0], [0], [1], [0, 0, 1, 1], [], []>} : vector<5x128xbf16>, vector<128x128xbf16>, vector<5x128xf32> -> vector<5x128xf32>
    %65 = vector.extract_strided_slice %33 {offsets = [1, 0, 0], sizes = [1, 5, 1], strides = [1, 1, 1]} : vector<2x5x1xf32> to vector<1x5x1xf32>
    %66 = vector.shape_cast %65 : vector<1x5x1xf32> to vector<5x1xf32>
    %67 = vector.broadcast %66 : vector<5x1xf32> to vector<5x128xf32>
    %68 = arith.divf %64, %67 : vector<5x128xf32>
    %c1 = arith.constant 1 : index
    %c0_21 = arith.constant 0 : index
    %c0_22 = arith.constant 0 : index
    %69 = vector.load %arg4[%c1, %c0_21, %c0_22] : memref<2x5x128xf32, #tpu.memory_space<vmem>>, vector<1x5x128xf32>
    %70 = vector.shape_cast %69 : vector<1x5x128xf32> to vector<5x128xf32>
    %71 = vector.shape_cast %68 : vector<5x128xf32> to vector<1x5x128xf32>
    tpu.vector_store %arg4[%c1, %c0_21, %c0_22], %71 {strides = array<i32>} : memref<2x5x128xf32, #tpu.memory_space<vmem>>, vector<1x5x128xf32>,
    return
  }
  func.func @transform_0(%arg0: i32) -> i32 {
    %c0_i32 = arith.constant 0 : i32
    %c0_i32_0 = arith.constant 0 : i32
    return %c0_i32 : i32
  }
  func.func @transform_1(%arg0: i32) -> (i32, i32, i32) {
    %c0_i32 = arith.constant 0 : i32
    %c0_i32_0 = arith.constant 0 : i32
    %c0_i32_1 = arith.constant 0 : i32
    return %arg0, %c0_i32, %c0_i32_0 : i32, i32, i32
  }
  func.func @transform_2(%arg0: i32) -> (i32, i32, i32) {
    %c0_i32 = arith.constant 0 : i32
    %c0_i32_0 = arith.constant 0 : i32
    %c0_i32_1 = arith.constant 0 : i32
    return %arg0, %c0_i32, %c0_i32_0 : i32, i32, i32
  }
  func.func @transform_3(%arg0: i32) -> (i32, i32, i32) {
    %c0_i32 = arith.constant 0 : i32
    %c0_i32_0 = arith.constant 0 : i32
    %c0_i32_1 = arith.constant 0 : i32
    return %arg0, %c0_i32, %c0_i32_0 : i32, i32, i32
  }
}

module attributes {stable_mosaic.version = 11 : i64} {
  func.func @ln_proj_kernel(%arg0: i32, %arg1: memref<20x128xf32, #tpu.memory_space<vmem>>, %arg2: memref<1x128xf32, #tpu.memory_space<vmem>>, %arg3: memref<1x128xf32, #tpu.memory_space<vmem>>, %arg4: memref<128x128xf32, #tpu.memory_space<vmem>>, %arg5: memref<20x128xf32, #tpu.memory_space<vmem>>, %arg6: memref<20x128xf32, #tpu.memory_space<vmem>>, %arg7: memref<1x8x128xf32, #tpu.memory_space<vmem>>) attributes {dimension_semantics = [#tpu.dimension_semantics<parallel>], iteration_bounds = array<i64: 1>, scalar_prefetch = 0 : i64, scratch_operands = 0 : i64, tpu.core_type = #tpu.core_type<tc>, window_params = [{transform_indices = @transform_0, window_bounds = array<i64: 20, 128>}, {pipeline_mode = #tpu.pipeline_mode<synchronous>, transform_indices = @transform_1, window_bounds = array<i64: 1, 128>}, {pipeline_mode = #tpu.pipeline_mode<synchronous>, transform_indices = @transform_2, window_bounds = array<i64: 1, 128>}, {pipeline_mode = #tpu.pipeline_mode<synchronous>, transform_indices = @transform_3, window_bounds = array<i64: 128, 128>}, {transform_indices = @transform_4, window_bounds = array<i64: 20, 128>}, {transform_indices = @transform_5, window_bounds = array<i64: 20, 128>}, {transform_indices = @transform_6, window_bounds = array<i64: 1, 8, 128>}]} {
    %c0 = arith.constant 0 : index
    %c0_0 = arith.constant 0 : index
    %0 = vector.load %arg1[%c0, %c0_0] : memref<20x128xf32, #tpu.memory_space<vmem>>, vector<20x128xf32>
    %c0_1 = arith.constant 0 : index
    %c0_2 = arith.constant 0 : index
    %1 = vector.load %arg2[%c0_1, %c0_2] : memref<1x128xf32, #tpu.memory_space<vmem>>, vector<1x128xf32>
    %c0_3 = arith.constant 0 : index
    %c0_4 = arith.constant 0 : index
    %2 = vector.load %arg3[%c0_3, %c0_4] : memref<1x128xf32, #tpu.memory_space<vmem>>, vector<1x128xf32>
    %cst = arith.constant dense<0.000000e+00> : vector<20xf32>
    %3 = vector.multi_reduction <add>, %0, %cst [1] : vector<20x128xf32> to vector<20xf32>
    %4 = vector.shape_cast %3 : vector<20xf32> to vector<20x1xf32>
    %cst_5 = arith.constant 1.280000e+02 : f32
    %5 = vector.broadcast %cst_5 : f32 to vector<20x1xf32>
    %6 = arith.divf %4, %5 : vector<20x1xf32>
    %7 = vector.broadcast %6 : vector<20x1xf32> to vector<20x128xf32>
    %8 = arith.subf %0, %7 : vector<20x128xf32>
    %9 = arith.mulf %8, %8 : vector<20x128xf32>
    %cst_6 = arith.constant dense<0.000000e+00> : vector<20xf32>
    %10 = vector.multi_reduction <add>, %9, %cst_6 [1] : vector<20x128xf32> to vector<20xf32>
    %11 = vector.shape_cast %10 : vector<20xf32> to vector<20x1xf32>
    %cst_7 = arith.constant 1.280000e+02 : f32
    %12 = vector.broadcast %cst_7 : f32 to vector<20x1xf32>
    %13 = arith.divf %11, %12 : vector<20x1xf32>
    %14 = vector.broadcast %6 : vector<20x1xf32> to vector<20x128xf32>
    %15 = arith.subf %0, %14 : vector<20x128xf32>
    %cst_8 = arith.constant 9.99999974E-6 : f32
    %16 = vector.broadcast %cst_8 : f32 to vector<20x1xf32>
    %17 = arith.addf %13, %16 : vector<20x1xf32>
    %18 = math.rsqrt %17 : vector<20x1xf32>
    %19 = vector.broadcast %18 : vector<20x1xf32> to vector<20x128xf32>
    %20 = arith.mulf %15, %19 : vector<20x128xf32>
    %21 = vector.broadcast %1 : vector<1x128xf32> to vector<20x128xf32>
    %22 = arith.mulf %20, %21 : vector<20x128xf32>
    %23 = vector.broadcast %2 : vector<1x128xf32> to vector<20x128xf32>
    %24 = arith.addf %22, %23 : vector<20x128xf32>
    %cst_9 = arith.constant 0.297301769 : f32
    %25 = vector.broadcast %cst_9 : f32 to vector<20x128xf32>
    %26 = arith.mulf %25, %24 : vector<20x128xf32>
    %27 = arith.truncf %26 : vector<20x128xf32> to vector<20x128xbf16>
    %c0_10 = arith.constant 0 : index
    %c0_11 = arith.constant 0 : index
    %28 = vector.load %arg4[%c0_10, %c0_11] : memref<128x128xf32, #tpu.memory_space<vmem>>, vector<128x128xf32>
    %29 = arith.truncf %28 : vector<128x128xf32> to vector<128x128xbf16>
    %cst_12 = arith.constant dense<0.000000e+00> : vector<20x128xf32>
    %30 = tpu.matmul %27, %29, %cst_12 {dimension_numbers = #tpu.dot_dimension_numbers<[1], [1], [0], [0], [0, 0, 1, 0], [], []>} : vector<20x128xbf16>, vector<128x128xbf16>, vector<20x128xf32> -> vector<20x128xf32>
    %c0_13 = arith.constant 0 : index
    %c0_14 = arith.constant 0 : index
    %31 = vector.load %arg5[%c0_13, %c0_14] : memref<20x128xf32, #tpu.memory_space<vmem>>, vector<20x128xf32>
    tpu.vector_store %arg5[%c0_13, %c0_14], %24 {strides = array<i32>} : memref<20x128xf32, #tpu.memory_space<vmem>>, vector<20x128xf32>,
    %c0_15 = arith.constant 0 : index
    %c0_16 = arith.constant 0 : index
    %32 = vector.load %arg6[%c0_15, %c0_16] : memref<20x128xf32, #tpu.memory_space<vmem>>, vector<20x128xf32>
    tpu.vector_store %arg6[%c0_15, %c0_16], %30 {strides = array<i32>} : memref<20x128xf32, #tpu.memory_space<vmem>>, vector<20x128xf32>,
    %c20_i32 = arith.constant 20 : i32
    %33 = arith.muli %arg0, %c20_i32 : i32
    %34 = tpu.iota {dimensions = array<i32: 0>} : vector<20x1xi32>
    %35 = vector.broadcast %33 : i32 to vector<20x1xi32>
    %36 = arith.addi %35, %34 : vector<20x1xi32>
    %c20_i32_17 = arith.constant 20 : i32
    %37 = vector.broadcast %c20_i32_17 : i32 to vector<20x1xi32>
    %38 = arith.cmpi slt, %36, %37 : vector<20x1xi32>
    %cst_18 = arith.constant 0xFF800000 : f32
    %39 = vector.shape_cast %38 : vector<20x1xi1> to vector<20x1xi1>
    %40 = vector.broadcast %39 : vector<20x1xi1> to vector<20x128xi1>
    %41 = vector.broadcast %cst_18 : f32 to vector<20x128xf32>
    %42 = arith.select %40, %30, %41 : vector<20x128xi1>, vector<20x128xf32>
    %43 = vector.shape_cast %42 : vector<20x128xf32> to vector<1x20x128xf32>
    %cst_19 = arith.constant dense<0xFF800000> : vector<1xf32>
    %44 = vector.multi_reduction <maximumf>, %43, %cst_19 [1, 2] : vector<1x20x128xf32> to vector<1xf32>
    %45 = vector.shape_cast %44 : vector<1xf32> to vector<1x1x1xf32>
    %46 = vector.extract %45[0, 0, 0] : f32 from vector<1x1x1xf32>
    %47 = vector.broadcast %46 : f32 to vector<1x8x128xf32>
    %c0_20 = arith.constant 0 : index
    %c0_21 = arith.constant 0 : index
    %c0_22 = arith.constant 0 : index
    %48 = vector.load %arg7[%c0_20, %c0_21, %c0_22] : memref<1x8x128xf32, #tpu.memory_space<vmem>>, vector<1x8x128xf32>
    tpu.vector_store %arg7[%c0_20, %c0_21, %c0_22], %47 {strides = array<i32>} : memref<1x8x128xf32, #tpu.memory_space<vmem>>, vector<1x8x128xf32>,
    return
  }
  func.func @transform_0(%arg0: i32) -> (i32, i32) {
    %c0_i32 = arith.constant 0 : i32
    %c0_i32_0 = arith.constant 0 : i32
    return %arg0, %c0_i32 : i32, i32
  }
  func.func @transform_1(%arg0: i32) -> (i32, i32) {
    %c0_i32 = arith.constant 0 : i32
    %c0_i32_0 = arith.constant 0 : i32
    %c0_i32_1 = arith.constant 0 : i32
    return %c0_i32, %c0_i32_0 : i32, i32
  }
  func.func @transform_2(%arg0: i32) -> (i32, i32) {
    %c0_i32 = arith.constant 0 : i32
    %c0_i32_0 = arith.constant 0 : i32
    %c0_i32_1 = arith.constant 0 : i32
    return %c0_i32, %c0_i32_0 : i32, i32
  }
  func.func @transform_3(%arg0: i32) -> (i32, i32) {
    %c0_i32 = arith.constant 0 : i32
    %c0_i32_0 = arith.constant 0 : i32
    %c0_i32_1 = arith.constant 0 : i32
    return %c0_i32, %c0_i32_0 : i32, i32
  }
  func.func @transform_4(%arg0: i32) -> (i32, i32) {
    %c0_i32 = arith.constant 0 : i32
    %c0_i32_0 = arith.constant 0 : i32
    return %arg0, %c0_i32 : i32, i32
  }
  func.func @transform_5(%arg0: i32) -> (i32, i32) {
    %c0_i32 = arith.constant 0 : i32
    %c0_i32_0 = arith.constant 0 : i32
    return %arg0, %c0_i32 : i32, i32
  }
  func.func @transform_6(%arg0: i32) -> (i32, i32, i32) {
    %c0_i32 = arith.constant 0 : i32
    %c0_i32_0 = arith.constant 0 : i32
    %c0_i32_1 = arith.constant 0 : i32
    return %arg0, %c0_i32, %c0_i32_0 : i32, i32, i32
  }
}

module attributes {stable_mosaic.version = 11 : i64} {
  func.func @fast_attention_kernel(%arg0: i32, %arg1: memref<1xf32, #tpu.memory_space<smem>>, %arg2: memref<4x5x128xf32, #tpu.memory_space<vmem>>, %arg3: memref<4x5x128xf32, #tpu.memory_space<vmem>>, %arg4: memref<4x5x128xf32, #tpu.memory_space<vmem>>) attributes {dimension_semantics = [#tpu.dimension_semantics<parallel>], iteration_bounds = array<i64: 1>, scalar_prefetch = 0 : i64, scratch_operands = 0 : i64, tpu.core_type = #tpu.core_type<tc>, window_params = [{transform_indices = @transform_0, window_bounds = array<i64: 1>}, {transform_indices = @transform_1, window_bounds = array<i64: 4, 5, 128>}, {transform_indices = @transform_2, window_bounds = array<i64: 4, 5, 128>}, {transform_indices = @transform_3, window_bounds = array<i64: 4, 5, 128>}]} {
    %c0 = arith.constant 0 : index
    %c0_0 = arith.constant 0 : index
    %c0_1 = arith.constant 0 : index
    %0 = vector.load %arg2[%c0, %c0_0, %c0_1] : memref<4x5x128xf32, #tpu.memory_space<vmem>>, vector<4x5x128xf32>
    %c0_2 = arith.constant 0 : index
    %c0_3 = arith.constant 0 : index
    %c0_4 = arith.constant 0 : index
    %1 = vector.load %arg3[%c0_2, %c0_3, %c0_4] : memref<4x5x128xf32, #tpu.memory_space<vmem>>, vector<4x5x128xf32>
    %2 = arith.mulf %0, %0 : vector<4x5x128xf32>
    %cst = arith.constant dense<0.000000e+00> : vector<4x5xf32>
    %3 = vector.multi_reduction <add>, %2, %cst [2] : vector<4x5x128xf32> to vector<4x5xf32>
    %4 = vector.shape_cast %3 : vector<4x5xf32> to vector<4x5x1xf32>
    %cst_5 = arith.constant 0.0441941731 : f32
    %5 = vector.broadcast %cst_5 : f32 to vector<4x5x1xf32>
    %6 = arith.mulf %5, %4 : vector<4x5x1xf32>
    %cst_6 = arith.constant dense<0xFF800000> : vector<4x5xf32>
    %7 = vector.multi_reduction <maximumf>, %1, %cst_6 [2] : vector<4x5x128xf32> to vector<4x5xf32>
    %8 = vector.shape_cast %7 : vector<4x5xf32> to vector<4x5x1xf32>
    %9 = vector.broadcast %6 : vector<4x5x1xf32> to vector<4x5x128xf32>
    %10 = arith.subf %1, %9 : vector<4x5x128xf32>
    %11 = vector.broadcast %8 : vector<4x5x1xf32> to vector<4x5x128xf32>
    %12 = arith.subf %10, %11 : vector<4x5x128xf32>
    %13 = math.exp %12 : vector<4x5x128xf32>
    %cst_7 = arith.constant 9.99999974E-5 : f32
    %14 = vector.broadcast %cst_7 : f32 to vector<4x5x128xf32>
    %15 = arith.addf %13, %14 : vector<4x5x128xf32>
    %cst_8 = arith.constant 0.0883883461 : f32
    %16 = vector.broadcast %cst_8 : f32 to vector<4x5x128xf32>
    %17 = arith.mulf %16, %15 : vector<4x5x128xf32>
    %c0_9 = arith.constant 0 : index
    %18 = memref.load %arg1[%c0_9] : memref<1xf32, #tpu.memory_space<smem>>
    %19 = vector.broadcast %18 : f32 to vector<4x5x1xf32>
    %20 = arith.subf %8, %19 : vector<4x5x1xf32>
    %21 = math.exp %20 : vector<4x5x1xf32>
    %cst_10 = arith.constant 0.0883883461 : f32
    %22 = vector.broadcast %cst_10 : f32 to vector<4x5x1xf32>
    %23 = arith.mulf %22, %21 : vector<4x5x1xf32>
    %24 = vector.broadcast %23 : vector<4x5x1xf32> to vector<4x5x128xf32>
    %25 = arith.mulf %13, %24 : vector<4x5x128xf32>
    %cst_11 = arith.constant 8.83883513E-6 : f32
    %26 = vector.broadcast %cst_11 : f32 to vector<4x5x128xf32>
    %27 = arith.addf %25, %26 : vector<4x5x128xf32>
    %cst_12 = arith.constant dense<0.000000e+00> : vector<4x128xf32>
    %28 = vector.multi_reduction <add>, %27, %cst_12 [1] : vector<4x5x128xf32> to vector<4x128xf32>
    %29 = vector.shape_cast %28 : vector<4x128xf32> to vector<4x1x128xf32>
    %30 = vector.broadcast %29 : vector<4x1x128xf32> to vector<4x5x128xf32>
    %31 = arith.mulf %17, %30 : vector<4x5x128xf32>
    %cst_13 = arith.constant dense<0.000000e+00> : vector<4x5xf32>
    %32 = vector.multi_reduction <add>, %31, %cst_13 [2] : vector<4x5x128xf32> to vector<4x5xf32>
    %33 = vector.shape_cast %32 : vector<4x5xf32> to vector<4x5x1xf32>
    %34 = vector.extract_strided_slice %27 {offsets = [0, 0, 0], sizes = [1, 5, 128], strides = [1, 1, 1]} : vector<4x5x128xf32> to vector<1x5x128xf32>
    %35 = vector.shape_cast %34 : vector<1x5x128xf32> to vector<5x128xf32>
    %36 = arith.truncf %35 : vector<5x128xf32> to vector<5x128xbf16>
    %37 = vector.extract_strided_slice %0 {offsets = [0, 0, 0], sizes = [1, 5, 128], strides = [1, 1, 1]} : vector<4x5x128xf32> to vector<1x5x128xf32>
    %38 = vector.shape_cast %37 : vector<1x5x128xf32> to vector<5x128xf32>
    %39 = arith.truncf %38 : vector<5x128xf32> to vector<5x128xbf16>
    %cst_14 = arith.constant dense<0.000000e+00> : vector<128x128xf32>
    %40 = tpu.matmul %36, %39, %cst_14 {dimension_numbers = #tpu.dot_dimension_numbers<[0], [0], [1], [1], [0, 1, 1, 1], [], []>} : vector<5x128xbf16>, vector<5x128xbf16>, vector<128x128xf32> -> vector<128x128xf32>
    %41 = vector.extract_strided_slice %17 {offsets = [0, 0, 0], sizes = [1, 5, 128], strides = [1, 1, 1]} : vector<4x5x128xf32> to vector<1x5x128xf32>
    %42 = vector.shape_cast %41 : vector<1x5x128xf32> to vector<5x128xf32>
    %43 = arith.truncf %42 : vector<5x128xf32> to vector<5x128xbf16>
    %44 = arith.truncf %40 : vector<128x128xf32> to vector<128x128xbf16>
    %cst_15 = arith.constant dense<0.000000e+00> : vector<5x128xf32>
    %45 = tpu.matmul %43, %44, %cst_15 {dimension_numbers = #tpu.dot_dimension_numbers<[1], [0], [0], [1], [0, 0, 1, 1], [], []>} : vector<5x128xbf16>, vector<128x128xbf16>, vector<5x128xf32> -> vector<5x128xf32>
    %46 = vector.extract_strided_slice %33 {offsets = [0, 0, 0], sizes = [1, 5, 1], strides = [1, 1, 1]} : vector<4x5x1xf32> to vector<1x5x1xf32>
    %47 = vector.shape_cast %46 : vector<1x5x1xf32> to vector<5x1xf32>
    %48 = vector.broadcast %47 : vector<5x1xf32> to vector<5x128xf32>
    %49 = arith.divf %45, %48 : vector<5x128xf32>
    %c0_16 = arith.constant 0 : index
    %c0_17 = arith.constant 0 : index
    %c0_18 = arith.constant 0 : index
    %50 = vector.load %arg4[%c0_16, %c0_17, %c0_18] : memref<4x5x128xf32, #tpu.memory_space<vmem>>, vector<1x5x128xf32>
    %51 = vector.shape_cast %50 : vector<1x5x128xf32> to vector<5x128xf32>
    %52 = vector.shape_cast %49 : vector<5x128xf32> to vector<1x5x128xf32>
    tpu.vector_store %arg4[%c0_16, %c0_17, %c0_18], %52 {strides = array<i32>} : memref<4x5x128xf32, #tpu.memory_space<vmem>>, vector<1x5x128xf32>,
    %53 = vector.extract_strided_slice %27 {offsets = [1, 0, 0], sizes = [1, 5, 128], strides = [1, 1, 1]} : vector<4x5x128xf32> to vector<1x5x128xf32>
    %54 = vector.shape_cast %53 : vector<1x5x128xf32> to vector<5x128xf32>
    %55 = arith.truncf %54 : vector<5x128xf32> to vector<5x128xbf16>
    %56 = vector.extract_strided_slice %0 {offsets = [1, 0, 0], sizes = [1, 5, 128], strides = [1, 1, 1]} : vector<4x5x128xf32> to vector<1x5x128xf32>
    %57 = vector.shape_cast %56 : vector<1x5x128xf32> to vector<5x128xf32>
    %58 = arith.truncf %57 : vector<5x128xf32> to vector<5x128xbf16>
    %cst_19 = arith.constant dense<0.000000e+00> : vector<128x128xf32>
    %59 = tpu.matmul %55, %58, %cst_19 {dimension_numbers = #tpu.dot_dimension_numbers<[0], [0], [1], [1], [0, 1, 1, 1], [], []>} : vector<5x128xbf16>, vector<5x128xbf16>, vector<128x128xf32> -> vector<128x128xf32>
    %60 = vector.extract_strided_slice %17 {offsets = [1, 0, 0], sizes = [1, 5, 128], strides = [1, 1, 1]} : vector<4x5x128xf32> to vector<1x5x128xf32>
    %61 = vector.shape_cast %60 : vector<1x5x128xf32> to vector<5x128xf32>
    %62 = arith.truncf %61 : vector<5x128xf32> to vector<5x128xbf16>
    %63 = arith.truncf %59 : vector<128x128xf32> to vector<128x128xbf16>
    %cst_20 = arith.constant dense<0.000000e+00> : vector<5x128xf32>
    %64 = tpu.matmul %62, %63, %cst_20 {dimension_numbers = #tpu.dot_dimension_numbers<[1], [0], [0], [1], [0, 0, 1, 1], [], []>} : vector<5x128xbf16>, vector<128x128xbf16>, vector<5x128xf32> -> vector<5x128xf32>
    %65 = vector.extract_strided_slice %33 {offsets = [1, 0, 0], sizes = [1, 5, 1], strides = [1, 1, 1]} : vector<4x5x1xf32> to vector<1x5x1xf32>
    %66 = vector.shape_cast %65 : vector<1x5x1xf32> to vector<5x1xf32>
    %67 = vector.broadcast %66 : vector<5x1xf32> to vector<5x128xf32>
    %68 = arith.divf %64, %67 : vector<5x128xf32>
    %c1 = arith.constant 1 : index
    %c0_21 = arith.constant 0 : index
    %c0_22 = arith.constant 0 : index
    %69 = vector.load %arg4[%c1, %c0_21, %c0_22] : memref<4x5x128xf32, #tpu.memory_space<vmem>>, vector<1x5x128xf32>
    %70 = vector.shape_cast %69 : vector<1x5x128xf32> to vector<5x128xf32>
    %71 = vector.shape_cast %68 : vector<5x128xf32> to vector<1x5x128xf32>
    tpu.vector_store %arg4[%c1, %c0_21, %c0_22], %71 {strides = array<i32>} : memref<4x5x128xf32, #tpu.memory_space<vmem>>, vector<1x5x128xf32>,
    %72 = vector.extract_strided_slice %27 {offsets = [2, 0, 0], sizes = [1, 5, 128], strides = [1, 1, 1]} : vector<4x5x128xf32> to vector<1x5x128xf32>
    %73 = vector.shape_cast %72 : vector<1x5x128xf32> to vector<5x128xf32>
    %74 = arith.truncf %73 : vector<5x128xf32> to vector<5x128xbf16>
    %75 = vector.extract_strided_slice %0 {offsets = [2, 0, 0], sizes = [1, 5, 128], strides = [1, 1, 1]} : vector<4x5x128xf32> to vector<1x5x128xf32>
    %76 = vector.shape_cast %75 : vector<1x5x128xf32> to vector<5x128xf32>
    %77 = arith.truncf %76 : vector<5x128xf32> to vector<5x128xbf16>
    %cst_23 = arith.constant dense<0.000000e+00> : vector<128x128xf32>
    %78 = tpu.matmul %74, %77, %cst_23 {dimension_numbers = #tpu.dot_dimension_numbers<[0], [0], [1], [1], [0, 1, 1, 1], [], []>} : vector<5x128xbf16>, vector<5x128xbf16>, vector<128x128xf32> -> vector<128x128xf32>
    %79 = vector.extract_strided_slice %17 {offsets = [2, 0, 0], sizes = [1, 5, 128], strides = [1, 1, 1]} : vector<4x5x128xf32> to vector<1x5x128xf32>
    %80 = vector.shape_cast %79 : vector<1x5x128xf32> to vector<5x128xf32>
    %81 = arith.truncf %80 : vector<5x128xf32> to vector<5x128xbf16>
    %82 = arith.truncf %78 : vector<128x128xf32> to vector<128x128xbf16>
    %cst_24 = arith.constant dense<0.000000e+00> : vector<5x128xf32>
    %83 = tpu.matmul %81, %82, %cst_24 {dimension_numbers = #tpu.dot_dimension_numbers<[1], [0], [0], [1], [0, 0, 1, 1], [], []>} : vector<5x128xbf16>, vector<128x128xbf16>, vector<5x128xf32> -> vector<5x128xf32>
    %84 = vector.extract_strided_slice %33 {offsets = [2, 0, 0], sizes = [1, 5, 1], strides = [1, 1, 1]} : vector<4x5x1xf32> to vector<1x5x1xf32>
    %85 = vector.shape_cast %84 : vector<1x5x1xf32> to vector<5x1xf32>
    %86 = vector.broadcast %85 : vector<5x1xf32> to vector<5x128xf32>
    %87 = arith.divf %83, %86 : vector<5x128xf32>
    %c2 = arith.constant 2 : index
    %c0_25 = arith.constant 0 : index
    %c0_26 = arith.constant 0 : index
    %88 = vector.load %arg4[%c2, %c0_25, %c0_26] : memref<4x5x128xf32, #tpu.memory_space<vmem>>, vector<1x5x128xf32>
    %89 = vector.shape_cast %88 : vector<1x5x128xf32> to vector<5x128xf32>
    %90 = vector.shape_cast %87 : vector<5x128xf32> to vector<1x5x128xf32>
    tpu.vector_store %arg4[%c2, %c0_25, %c0_26], %90 {strides = array<i32>} : memref<4x5x128xf32, #tpu.memory_space<vmem>>, vector<1x5x128xf32>,
    %91 = vector.extract_strided_slice %27 {offsets = [3, 0, 0], sizes = [1, 5, 128], strides = [1, 1, 1]} : vector<4x5x128xf32> to vector<1x5x128xf32>
    %92 = vector.shape_cast %91 : vector<1x5x128xf32> to vector<5x128xf32>
    %93 = arith.truncf %92 : vector<5x128xf32> to vector<5x128xbf16>
    %94 = vector.extract_strided_slice %0 {offsets = [3, 0, 0], sizes = [1, 5, 128], strides = [1, 1, 1]} : vector<4x5x128xf32> to vector<1x5x128xf32>
    %95 = vector.shape_cast %94 : vector<1x5x128xf32> to vector<5x128xf32>
    %96 = arith.truncf %95 : vector<5x128xf32> to vector<5x128xbf16>
    %cst_27 = arith.constant dense<0.000000e+00> : vector<128x128xf32>
    %97 = tpu.matmul %93, %96, %cst_27 {dimension_numbers = #tpu.dot_dimension_numbers<[0], [0], [1], [1], [0, 1, 1, 1], [], []>} : vector<5x128xbf16>, vector<5x128xbf16>, vector<128x128xf32> -> vector<128x128xf32>
    %98 = vector.extract_strided_slice %17 {offsets = [3, 0, 0], sizes = [1, 5, 128], strides = [1, 1, 1]} : vector<4x5x128xf32> to vector<1x5x128xf32>
    %99 = vector.shape_cast %98 : vector<1x5x128xf32> to vector<5x128xf32>
    %100 = arith.truncf %99 : vector<5x128xf32> to vector<5x128xbf16>
    %101 = arith.truncf %97 : vector<128x128xf32> to vector<128x128xbf16>
    %cst_28 = arith.constant dense<0.000000e+00> : vector<5x128xf32>
    %102 = tpu.matmul %100, %101, %cst_28 {dimension_numbers = #tpu.dot_dimension_numbers<[1], [0], [0], [1], [0, 0, 1, 1], [], []>} : vector<5x128xbf16>, vector<128x128xbf16>, vector<5x128xf32> -> vector<5x128xf32>
    %103 = vector.extract_strided_slice %33 {offsets = [3, 0, 0], sizes = [1, 5, 1], strides = [1, 1, 1]} : vector<4x5x1xf32> to vector<1x5x1xf32>
    %104 = vector.shape_cast %103 : vector<1x5x1xf32> to vector<5x1xf32>
    %105 = vector.broadcast %104 : vector<5x1xf32> to vector<5x128xf32>
    %106 = arith.divf %102, %105 : vector<5x128xf32>
    %c3 = arith.constant 3 : index
    %c0_29 = arith.constant 0 : index
    %c0_30 = arith.constant 0 : index
    %107 = vector.load %arg4[%c3, %c0_29, %c0_30] : memref<4x5x128xf32, #tpu.memory_space<vmem>>, vector<1x5x128xf32>
    %108 = vector.shape_cast %107 : vector<1x5x128xf32> to vector<5x128xf32>
    %109 = vector.shape_cast %106 : vector<5x128xf32> to vector<1x5x128xf32>
    tpu.vector_store %arg4[%c3, %c0_29, %c0_30], %109 {strides = array<i32>} : memref<4x5x128xf32, #tpu.memory_space<vmem>>, vector<1x5x128xf32>,
    return
  }
  func.func @transform_0(%arg0: i32) -> i32 {
    %c0_i32 = arith.constant 0 : i32
    %c0_i32_0 = arith.constant 0 : i32
    return %c0_i32 : i32
  }
  func.func @transform_1(%arg0: i32) -> (i32, i32, i32) {
    %c0_i32 = arith.constant 0 : i32
    %c0_i32_0 = arith.constant 0 : i32
    %c0_i32_1 = arith.constant 0 : i32
    return %arg0, %c0_i32, %c0_i32_0 : i32, i32, i32
  }
  func.func @transform_2(%arg0: i32) -> (i32, i32, i32) {
    %c0_i32 = arith.constant 0 : i32
    %c0_i32_0 = arith.constant 0 : i32
    %c0_i32_1 = arith.constant 0 : i32
    return %arg0, %c0_i32, %c0_i32_0 : i32, i32, i32
  }
  func.func @transform_3(%arg0: i32) -> (i32, i32, i32) {
    %c0_i32 = arith.constant 0 : i32
    %c0_i32_0 = arith.constant 0 : i32
    %c0_i32_1 = arith.constant 0 : i32
    return %arg0, %c0_i32, %c0_i32_0 : i32, i32, i32
  }
}

module attributes {stable_mosaic.version = 11 : i64} {
  func.func @mlp_fused_kernel(%arg0: i32, %arg1: i32, %arg2: memref<40x128xf32, #tpu.memory_space<vmem>>, %arg3: memref<1x128xf32, #tpu.memory_space<vmem>>, %arg4: memref<1x128xf32, #tpu.memory_space<vmem>>, %arg5: memref<128x256xf32, #tpu.memory_space<vmem>>, %arg6: memref<1x256xf32, #tpu.memory_space<vmem>>, %arg7: memref<256x128xf32, #tpu.memory_space<vmem>>, %arg8: memref<1x128xf32, #tpu.memory_space<vmem>>, %arg9: memref<40x128xf32, #tpu.memory_space<vmem>>, %arg10: memref<40x128xf32, #tpu.memory_space<vmem>>, %arg11: memref<40x128xf32, #tpu.memory_space<vmem>>) attributes {dimension_semantics = [#tpu.dimension_semantics<parallel>, #tpu.dimension_semantics<arbitrary>], iteration_bounds = array<i64: 1, 1>, scalar_prefetch = 0 : i64, scratch_operands = 2 : i64, tpu.core_type = #tpu.core_type<tc>, window_params = [{transform_indices = @transform_0, window_bounds = array<i64: 40, 128>}, {pipeline_mode = #tpu.pipeline_mode<synchronous>, transform_indices = @transform_1, window_bounds = array<i64: 1, 128>}, {pipeline_mode = #tpu.pipeline_mode<synchronous>, transform_indices = @transform_2, window_bounds = array<i64: 1, 128>}, {transform_indices = @transform_3, window_bounds = array<i64: 128, 256>}, {transform_indices = @transform_4, window_bounds = array<i64: 1, 256>}, {transform_indices = @transform_5, window_bounds = array<i64: 256, 128>}, {pipeline_mode = #tpu.pipeline_mode<synchronous>, transform_indices = @transform_6, window_bounds = array<i64: 1, 128>}, {transform_indices = @transform_7, window_bounds = array<i64: 40, 128>}]} {
    %c0_i32 = arith.constant 0 : i32
    %0 = arith.cmpi eq, %arg1, %c0_i32 : i32
    %1 = arith.extui %0 : i1 to i32
    %c0_i32_0 = arith.constant 0 : i32
    %2 = arith.cmpi ne, %1, %c0_i32_0 : i32
    scf.if %2 {
      %c0_19 = arith.constant 0 : index
      %c0_20 = arith.constant 0 : index
      %34 = vector.load %arg2[%c0_19, %c0_20] : memref<40x128xf32, #tpu.memory_space<vmem>>, vector<40x128xf32>
      %c0_21 = arith.constant 0 : index
      %c0_22 = arith.constant 0 : index
      %35 = vector.load %arg3[%c0_21, %c0_22] : memref<1x128xf32, #tpu.memory_space<vmem>>, vector<1x128xf32>
      %c0_23 = arith.constant 0 : index
      %c0_24 = arith.constant 0 : index
      %36 = vector.load %arg4[%c0_23, %c0_24] : memref<1x128xf32, #tpu.memory_space<vmem>>, vector<1x128xf32>
      %cst_25 = arith.constant dense<0.000000e+00> : vector<40xf32>
      %37 = vector.multi_reduction <add>, %34, %cst_25 [1] : vector<40x128xf32> to vector<40xf32>
      %38 = vector.shape_cast %37 : vector<40xf32> to vector<40x1xf32>
      %cst_26 = arith.constant 1.280000e+02 : f32
      %39 = vector.broadcast %cst_26 : f32 to vector<40x1xf32>
      %40 = arith.divf %38, %39 : vector<40x1xf32>
      %41 = vector.broadcast %40 : vector<40x1xf32> to vector<40x128xf32>
      %42 = arith.subf %34, %41 : vector<40x128xf32>
      %43 = arith.mulf %42, %42 : vector<40x128xf32>
      %cst_27 = arith.constant dense<0.000000e+00> : vector<40xf32>
      %44 = vector.multi_reduction <add>, %43, %cst_27 [1] : vector<40x128xf32> to vector<40xf32>
      %45 = vector.shape_cast %44 : vector<40xf32> to vector<40x1xf32>
      %cst_28 = arith.constant 1.280000e+02 : f32
      %46 = vector.broadcast %cst_28 : f32 to vector<40x1xf32>
      %47 = arith.divf %45, %46 : vector<40x1xf32>
      %48 = vector.broadcast %40 : vector<40x1xf32> to vector<40x128xf32>
      %49 = arith.subf %34, %48 : vector<40x128xf32>
      %cst_29 = arith.constant 9.99999974E-6 : f32
      %50 = vector.broadcast %cst_29 : f32 to vector<40x1xf32>
      %51 = arith.addf %47, %50 : vector<40x1xf32>
      %52 = math.rsqrt %51 : vector<40x1xf32>
      %53 = vector.broadcast %52 : vector<40x1xf32> to vector<40x128xf32>
      %54 = arith.mulf %49, %53 : vector<40x128xf32>
      %55 = vector.broadcast %35 : vector<1x128xf32> to vector<40x128xf32>
      %56 = arith.mulf %54, %55 : vector<40x128xf32>
      %57 = vector.broadcast %36 : vector<1x128xf32> to vector<40x128xf32>
      %58 = arith.addf %56, %57 : vector<40x128xf32>
      %c0_30 = arith.constant 0 : index
      %c0_31 = arith.constant 0 : index
      %59 = vector.load %arg10[%c0_30, %c0_31] : memref<40x128xf32, #tpu.memory_space<vmem>>, vector<40x128xf32>
      tpu.vector_store %arg10[%c0_30, %c0_31], %58 {strides = array<i32>} : memref<40x128xf32, #tpu.memory_space<vmem>>, vector<40x128xf32>,
      %cst_32 = arith.constant 0.000000e+00 : f32
      %60 = vector.broadcast %cst_32 : f32 to vector<40x128xf32>
      %c0_33 = arith.constant 0 : index
      %c0_34 = arith.constant 0 : index
      %61 = vector.load %arg11[%c0_33, %c0_34] : memref<40x128xf32, #tpu.memory_space<vmem>>, vector<40x128xf32>
      tpu.vector_store %arg11[%c0_33, %c0_34], %60 {strides = array<i32>} : memref<40x128xf32, #tpu.memory_space<vmem>>, vector<40x128xf32>,
    } else {
    }
    %c0 = arith.constant 0 : index
    %c0_1 = arith.constant 0 : index
    %3 = vector.load %arg10[%c0, %c0_1] : memref<40x128xf32, #tpu.memory_space<vmem>>, vector<40x128xf32>
    %4 = arith.truncf %3 : vector<40x128xf32> to vector<40x128xbf16>
    %c0_2 = arith.constant 0 : index
    %c0_3 = arith.constant 0 : index
    %5 = vector.load %arg5[%c0_2, %c0_3] : memref<128x256xf32, #tpu.memory_space<vmem>>, vector<128x256xf32>
    %6 = arith.truncf %5 : vector<128x256xf32> to vector<128x256xbf16>
    %cst = arith.constant dense<0.000000e+00> : vector<40x256xf32>
    %7 = tpu.matmul %4, %6, %cst {dimension_numbers = #tpu.dot_dimension_numbers<[1], [0], [0], [1], [0, 0, 1, 1], [], []>} : vector<40x128xbf16>, vector<128x256xbf16>, vector<40x256xf32> -> vector<40x256xf32>
    %c0_4 = arith.constant 0 : index
    %c0_5 = arith.constant 0 : index
    %8 = vector.load %arg6[%c0_4, %c0_5] : memref<1x256xf32, #tpu.memory_space<vmem>>, vector<1x256xf32>
    %9 = vector.broadcast %8 : vector<1x256xf32> to vector<40x256xf32>
    %10 = arith.addf %7, %9 : vector<40x256xf32>
    %cst_6 = arith.constant 5.000000e-01 : f32
    %11 = vector.broadcast %cst_6 : f32 to vector<40x256xf32>
    %12 = arith.mulf %11, %10 : vector<40x256xf32>
    %cst_7 = arith.constant 4.471500e-02 : f32
    %13 = vector.broadcast %cst_7 : f32 to vector<40x256xf32>
    %14 = arith.mulf %13, %10 : vector<40x256xf32>
    %15 = arith.mulf %14, %10 : vector<40x256xf32>
    %16 = arith.mulf %15, %10 : vector<40x256xf32>
    %17 = arith.addf %10, %16 : vector<40x256xf32>
    %cst_8 = arith.constant 0.797884583 : f32
    %18 = vector.broadcast %cst_8 : f32 to vector<40x256xf32>
    %19 = arith.mulf %18, %17 : vector<40x256xf32>
    %20 = math.tanh %19 : vector<40x256xf32>
    %cst_9 = arith.constant 1.000000e+00 : f32
    %21 = vector.broadcast %cst_9 : f32 to vector<40x256xf32>
    %22 = arith.addf %21, %20 : vector<40x256xf32>
    %23 = arith.mulf %12, %22 : vector<40x256xf32>
    %c0_10 = arith.constant 0 : index
    %c0_11 = arith.constant 0 : index
    %24 = vector.load %arg11[%c0_10, %c0_11] : memref<40x128xf32, #tpu.memory_space<vmem>>, vector<40x128xf32>
    %25 = arith.truncf %23 : vector<40x256xf32> to vector<40x256xbf16>
    %c0_12 = arith.constant 0 : index
    %c0_13 = arith.constant 0 : index
    %26 = vector.load %arg7[%c0_12, %c0_13] : memref<256x128xf32, #tpu.memory_space<vmem>>, vector<256x128xf32>
    %27 = arith.truncf %26 : vector<256x128xf32> to vector<256x128xbf16>
    %cst_14 = arith.constant dense<0.000000e+00> : vector<40x128xf32>
    %28 = tpu.matmul %25, %27, %cst_14 {dimension_numbers = #tpu.dot_dimension_numbers<[1], [0], [0], [1], [0, 0, 1, 1], [], []>} : vector<40x256xbf16>, vector<256x128xbf16>, vector<40x128xf32> -> vector<40x128xf32>
    %29 = arith.addf %24, %28 : vector<40x128xf32>
    %c0_15 = arith.constant 0 : index
    %c0_16 = arith.constant 0 : index
    %30 = vector.load %arg11[%c0_15, %c0_16] : memref<40x128xf32, #tpu.memory_space<vmem>>, vector<40x128xf32>
    tpu.vector_store %arg11[%c0_15, %c0_16], %29 {strides = array<i32>} : memref<40x128xf32, #tpu.memory_space<vmem>>, vector<40x128xf32>,
    %c0_i32_17 = arith.constant 0 : i32
    %31 = arith.cmpi eq, %arg1, %c0_i32_17 : i32
    %32 = arith.extui %31 : i1 to i32
    %c0_i32_18 = arith.constant 0 : i32
    %33 = arith.cmpi ne, %32, %c0_i32_18 : i32
    scf.if %33 {
      %c0_19 = arith.constant 0 : index
      %c0_20 = arith.constant 0 : index
      %34 = vector.load %arg11[%c0_19, %c0_20] : memref<40x128xf32, #tpu.memory_space<vmem>>, vector<40x128xf32>
      %c0_21 = arith.constant 0 : index
      %c0_22 = arith.constant 0 : index
      %35 = vector.load %arg8[%c0_21, %c0_22] : memref<1x128xf32, #tpu.memory_space<vmem>>, vector<1x128xf32>
      %36 = vector.broadcast %35 : vector<1x128xf32> to vector<40x128xf32>
      %37 = arith.addf %34, %36 : vector<40x128xf32>
      %c0_23 = arith.constant 0 : index
      %c0_24 = arith.constant 0 : index
      %38 = vector.load %arg9[%c0_23, %c0_24] : memref<40x128xf32, #tpu.memory_space<vmem>>, vector<40x128xf32>
      tpu.vector_store %arg9[%c0_23, %c0_24], %37 {strides = array<i32>} : memref<40x128xf32, #tpu.memory_space<vmem>>, vector<40x128xf32>,
    } else {
    }
    return
  }
  func.func @transform_0(%arg0: i32, %arg1: i32) -> (i32, i32) {
    %c0_i32 = arith.constant 0 : i32
    %c0_i32_0 = arith.constant 0 : i32
    return %arg0, %c0_i32 : i32, i32
  }
  func.func @transform_1(%arg0: i32, %arg1: i32) -> (i32, i32) {
    %c0_i32 = arith.constant 0 : i32
    %c0_i32_0 = arith.constant 0 : i32
    %c0_i32_1 = arith.constant 0 : i32
    return %c0_i32, %c0_i32_0 : i32, i32
  }
  func.func @transform_2(%arg0: i32, %arg1: i32) -> (i32, i32) {
    %c0_i32 = arith.constant 0 : i32
    %c0_i32_0 = arith.constant 0 : i32
    %c0_i32_1 = arith.constant 0 : i32
    return %c0_i32, %c0_i32_0 : i32, i32
  }
  func.func @transform_3(%arg0: i32, %arg1: i32) -> (i32, i32) {
    %c0_i32 = arith.constant 0 : i32
    %c0_i32_0 = arith.constant 0 : i32
    return %c0_i32, %arg1 : i32, i32
  }
  func.func @transform_4(%arg0: i32, %arg1: i32) -> (i32, i32) {
    %c0_i32 = arith.constant 0 : i32
    %c0_i32_0 = arith.constant 0 : i32
    return %c0_i32, %arg1 : i32, i32
  }
  func.func @transform_5(%arg0: i32, %arg1: i32) -> (i32, i32) {
    %c0_i32 = arith.constant 0 : i32
    %c0_i32_0 = arith.constant 0 : i32
    return %arg1, %c0_i32 : i32, i32
  }
  func.func @transform_6(%arg0: i32, %arg1: i32) -> (i32, i32) {
    %c0_i32 = arith.constant 0 : i32
    %c0_i32_0 = arith.constant 0 : i32
    %c0_i32_1 = arith.constant 0 : i32
    return %c0_i32, %c0_i32_0 : i32, i32
  }
  func.func @transform_7(%arg0: i32, %arg1: i32) -> (i32, i32) {
    %c0_i32 = arith.constant 0 : i32
    %c0_i32_0 = arith.constant 0 : i32
    return %arg0, %c0_i32 : i32, i32
  }
}

module attributes {stable_mosaic.version = 11 : i64} {
  func.func @ln_matmul_bias_kernel(%arg0: i32, %arg1: i32, %arg2: memref<24x128xf32, #tpu.memory_space<vmem>>, %arg3: memref<1x128xf32, #tpu.memory_space<vmem>>, %arg4: memref<1x128xf32, #tpu.memory_space<vmem>>, %arg5: memref<128x128xf32, #tpu.memory_space<vmem>>, %arg6: memref<1x128xf32, #tpu.memory_space<vmem>>, %arg7: memref<24x128xf32, #tpu.memory_space<vmem>>, %arg8: memref<24x128xf32, #tpu.memory_space<vmem>>) attributes {dimension_semantics = [#tpu.dimension_semantics<parallel>, #tpu.dimension_semantics<arbitrary>], iteration_bounds = array<i64: 1, 1>, scalar_prefetch = 0 : i64, scratch_operands = 1 : i64, tpu.core_type = #tpu.core_type<tc>, window_params = [{transform_indices = @transform_0, window_bounds = array<i64: 24, 128>}, {pipeline_mode = #tpu.pipeline_mode<synchronous>, transform_indices = @transform_1, window_bounds = array<i64: 1, 128>}, {pipeline_mode = #tpu.pipeline_mode<synchronous>, transform_indices = @transform_2, window_bounds = array<i64: 1, 128>}, {transform_indices = @transform_3, window_bounds = array<i64: 128, 128>}, {transform_indices = @transform_4, window_bounds = array<i64: 1, 128>}, {transform_indices = @transform_5, window_bounds = array<i64: 24, 128>}]} {
    %c0_i32 = arith.constant 0 : i32
    %0 = arith.cmpi eq, %arg1, %c0_i32 : i32
    %1 = arith.extui %0 : i1 to i32
    %c0_i32_0 = arith.constant 0 : i32
    %2 = arith.cmpi ne, %1, %c0_i32_0 : i32
    scf.if %2 {
      %c0_8 = arith.constant 0 : index
      %c0_9 = arith.constant 0 : index
      %12 = vector.load %arg2[%c0_8, %c0_9] : memref<24x128xf32, #tpu.memory_space<vmem>>, vector<24x128xf32>
      %c0_10 = arith.constant 0 : index
      %c0_11 = arith.constant 0 : index
      %13 = vector.load %arg3[%c0_10, %c0_11] : memref<1x128xf32, #tpu.memory_space<vmem>>, vector<1x128xf32>
      %c0_12 = arith.constant 0 : index
      %c0_13 = arith.constant 0 : index
      %14 = vector.load %arg4[%c0_12, %c0_13] : memref<1x128xf32, #tpu.memory_space<vmem>>, vector<1x128xf32>
      %cst_14 = arith.constant dense<0.000000e+00> : vector<24xf32>
      %15 = vector.multi_reduction <add>, %12, %cst_14 [1] : vector<24x128xf32> to vector<24xf32>
      %16 = vector.shape_cast %15 : vector<24xf32> to vector<24x1xf32>
      %cst_15 = arith.constant 1.280000e+02 : f32
      %17 = vector.broadcast %cst_15 : f32 to vector<24x1xf32>
      %18 = arith.divf %16, %17 : vector<24x1xf32>
      %19 = vector.broadcast %18 : vector<24x1xf32> to vector<24x128xf32>
      %20 = arith.subf %12, %19 : vector<24x128xf32>
      %21 = arith.mulf %20, %20 : vector<24x128xf32>
      %cst_16 = arith.constant dense<0.000000e+00> : vector<24xf32>
      %22 = vector.multi_reduction <add>, %21, %cst_16 [1] : vector<24x128xf32> to vector<24xf32>
      %23 = vector.shape_cast %22 : vector<24xf32> to vector<24x1xf32>
      %cst_17 = arith.constant 1.280000e+02 : f32
      %24 = vector.broadcast %cst_17 : f32 to vector<24x1xf32>
      %25 = arith.divf %23, %24 : vector<24x1xf32>
      %26 = vector.broadcast %18 : vector<24x1xf32> to vector<24x128xf32>
      %27 = arith.subf %12, %26 : vector<24x128xf32>
      %cst_18 = arith.constant 9.99999974E-6 : f32
      %28 = vector.broadcast %cst_18 : f32 to vector<24x1xf32>
      %29 = arith.addf %25, %28 : vector<24x1xf32>
      %30 = math.rsqrt %29 : vector<24x1xf32>
      %31 = vector.broadcast %30 : vector<24x1xf32> to vector<24x128xf32>
      %32 = arith.mulf %27, %31 : vector<24x128xf32>
      %33 = vector.broadcast %13 : vector<1x128xf32> to vector<24x128xf32>
      %34 = arith.mulf %32, %33 : vector<24x128xf32>
      %35 = vector.broadcast %14 : vector<1x128xf32> to vector<24x128xf32>
      %36 = arith.addf %34, %35 : vector<24x128xf32>
      %c0_19 = arith.constant 0 : index
      %c0_20 = arith.constant 0 : index
      %37 = vector.load %arg8[%c0_19, %c0_20] : memref<24x128xf32, #tpu.memory_space<vmem>>, vector<24x128xf32>
      tpu.vector_store %arg8[%c0_19, %c0_20], %36 {strides = array<i32>} : memref<24x128xf32, #tpu.memory_space<vmem>>, vector<24x128xf32>,
    } else {
    }
    %c0 = arith.constant 0 : index
    %c0_1 = arith.constant 0 : index
    %3 = vector.load %arg8[%c0, %c0_1] : memref<24x128xf32, #tpu.memory_space<vmem>>, vector<24x128xf32>
    %4 = arith.truncf %3 : vector<24x128xf32> to vector<24x128xbf16>
    %c0_2 = arith.constant 0 : index
    %c0_3 = arith.constant 0 : index
    %5 = vector.load %arg5[%c0_2, %c0_3] : memref<128x128xf32, #tpu.memory_space<vmem>>, vector<128x128xf32>
    %6 = arith.truncf %5 : vector<128x128xf32> to vector<128x128xbf16>
    %cst = arith.constant dense<0.000000e+00> : vector<24x128xf32>
    %7 = tpu.matmul %4, %6, %cst {dimension_numbers = #tpu.dot_dimension_numbers<[1], [0], [0], [1], [0, 0, 1, 1], [], []>} : vector<24x128xbf16>, vector<128x128xbf16>, vector<24x128xf32> -> vector<24x128xf32>
    %c0_4 = arith.constant 0 : index
    %c0_5 = arith.constant 0 : index
    %8 = vector.load %arg6[%c0_4, %c0_5] : memref<1x128xf32, #tpu.memory_space<vmem>>, vector<1x128xf32>
    %9 = vector.broadcast %8 : vector<1x128xf32> to vector<24x128xf32>
    %10 = arith.addf %7, %9 : vector<24x128xf32>
    %c0_6 = arith.constant 0 : index
    %c0_7 = arith.constant 0 : index
    %11 = vector.load %arg7[%c0_6, %c0_7] : memref<24x128xf32, #tpu.memory_space<vmem>>, vector<24x128xf32>
    tpu.vector_store %arg7[%c0_6, %c0_7], %10 {strides = array<i32>} : memref<24x128xf32, #tpu.memory_space<vmem>>, vector<24x128xf32>,
    return
  }
  func.func @transform_0(%arg0: i32, %arg1: i32) -> (i32, i32) {
    %c0_i32 = arith.constant 0 : i32
    %c0_i32_0 = arith.constant 0 : i32
    return %arg0, %c0_i32 : i32, i32
  }
  func.func @transform_1(%arg0: i32, %arg1: i32) -> (i32, i32) {
    %c0_i32 = arith.constant 0 : i32
    %c0_i32_0 = arith.constant 0 : i32
    %c0_i32_1 = arith.constant 0 : i32
    return %c0_i32, %c0_i32_0 : i32, i32
  }
  func.func @transform_2(%arg0: i32, %arg1: i32) -> (i32, i32) {
    %c0_i32 = arith.constant 0 : i32
    %c0_i32_0 = arith.constant 0 : i32
    %c0_i32_1 = arith.constant 0 : i32
    return %c0_i32, %c0_i32_0 : i32, i32
  }
  func.func @transform_3(%arg0: i32, %arg1: i32) -> (i32, i32) {
    %c0_i32 = arith.constant 0 : i32
    %c0_i32_0 = arith.constant 0 : i32
    return %c0_i32, %arg1 : i32, i32
  }
  func.func @transform_4(%arg0: i32, %arg1: i32) -> (i32, i32) {
    %c0_i32 = arith.constant 0 : i32
    %c0_i32_0 = arith.constant 0 : i32
    return %c0_i32, %arg1 : i32, i32
  }
  func.func @transform_5(%arg0: i32, %arg1: i32) -> (i32, i32) {
    %c0_i32 = arith.constant 0 : i32
    return %arg0, %arg1 : i32, i32
  }
}

</mosaic_0001>

<llo_original>
// kernel: vit_forward.8
$region0: #{vit_forward.8}
  #allocation0 [shape = 'u32[]', space=smem, size = 0x4, offset = 0x4, fixed_abs, tag = 'smem constant byte address 0x4 - core index']
  #allocation1 [shape = 'u32[144,128]{1,0:T(1,128)}', space=vmem, size = 0x12000, scoped, tag = 'internal scratch']
  #allocation2 [shape = 'f32[8,128]{1,0:T(8,128)}', space=vmem, size = 0x1000, scoped, tag = 'scratch operand']
  %s0 = inlined_call_operand.vmem [shape: f32[8,256], index: 0, kind: input, shape index: {}]
  %s1 = inlined_call_operand.vmem [shape: f32[256,128], index: 1, kind: input, shape index: {}]
  %s2 = inlined_call_operand.vmem [shape: f32[1,128], index: 2, kind: input, shape index: {}]
  %s3 = inlined_call_operand.vmem [shape: f32[8,128], index: 3, kind: output, shape index: {}]
  %s4 = sld [smem:[#allocation0]]
  $region30: #{vit_forward.8} parent=0
    _
  %s6 = ssub.s32 1, %s4
  %s7 = scalar_select 0, %s6, %s4
  // Predicated region
  $region2: #{vit_forward.8} parent=0 // pred_check
    _
  $region3: #{vit_forward.8} parent=0 // pred_check_branch
    %9 = sbr.rel (0) target = $region5
  $region4: #{vit_forward.8} parent=0 // pred_region
    _
  $region5: #{vit_forward.8} parent=0 // pred_fallthru
    _
  // Predicated region
  $region6: #{vit_forward.8} parent=0 // pred_check
    _
  $region7: #{vit_forward.8} parent=0 // pred_check_branch
    %11 = sbr.rel (0) target = $region9
  $region8: #{vit_forward.8} parent=0 // pred_region
    _
  $region9: #{vit_forward.8} parent=0 // pred_fallthru
    _
  // Predicated region
  $region10: #{vit_forward.8} parent=0 // pred_check
    _
  $region11: #{vit_forward.8} parent=0 // pred_check_branch
    %13 = sbr.rel (0) target = $region13
  $region12: #{vit_forward.8} parent=0 // pred_region
    _
  $region13: #{vit_forward.8} parent=0 // pred_fallthru
    _
  %p15 = scmp.eq.s32.totalorder 0, 0
  // Predicated region
  $region14: #{vit_forward.8} parent=0 // pred_check
    %p16 = pneg %p15
  $region15: #{vit_forward.8} parent=0 // pred_check_branch
    %18 = sbr.rel (%p16) target = $region17
  $region16: #{vit_forward.8} parent=0 // pred_region
    %19 = vst [vmem:[#allocation2] sm:$0xff] 0.0
  $region17: #{vit_forward.8} parent=0 // pred_fallthru
    _
  %v20 = vld [vmem:[#allocation2] sm:$0xff]
  %v21 = vld [vmem:[%s0] sm:$0xff]
  %v22 = vld [vmem:[%s0 + $0x8] sm:$0xff]
  %v23 = vpack.c.bf16 %v21, %v21
  %v24 = vpack.c.bf16 %v22, %v22
  %v25 = vld [vmem:[%s1] sm:$0xff]
  %v26 = vld [vmem:[%s1 + $0x8] sm:$0xff]
  %v27 = vld [vmem:[%s1 + $0x10] sm:$0xff]
  %v28 = vld [vmem:[%s1 + $0x18] sm:$0xff]
  %v29 = vld [vmem:[%s1 + $0x20] sm:$0xff]
  %v30 = vld [vmem:[%s1 + $0x28] sm:$0xff]
  %v31 = vld [vmem:[%s1 + $0x30] sm:$0xff]
  %v32 = vld [vmem:[%s1 + $0x38] sm:$0xff]
  %v33 = vld [vmem:[%s1 + $0x40] sm:$0xff]
  %v34 = vld [vmem:[%s1 + $0x48] sm:$0xff]
  %v35 = vld [vmem:[%s1 + $0x50] sm:$0xff]
  %v36 = vld [vmem:[%s1 + $0x58] sm:$0xff]
  %v37 = vld [vmem:[%s1 + $0x60] sm:$0xff]
  %v38 = vld [vmem:[%s1 + $0x68] sm:$0xff]
  %v39 = vld [vmem:[%s1 + $0x70] sm:$0xff]
  %v40 = vld [vmem:[%s1 + $0x78] sm:$0xff]
  %v41 = vld [vmem:[%s1 + $0x80] sm:$0xff]
  %v42 = vld [vmem:[%s1 + $0x88] sm:$0xff]
  %v43 = vld [vmem:[%s1 + $0x90] sm:$0xff]
  %v44 = vld [vmem:[%s1 + $0x98] sm:$0xff]
  %v45 = vld [vmem:[%s1 + $0xa0] sm:$0xff]
  %v46 = vld [vmem:[%s1 + $0xa8] sm:$0xff]
  %v47 = vld [vmem:[%s1 + $0xb0] sm:$0xff]
  %v48 = vld [vmem:[%s1 + $0xb8] sm:$0xff]
  %v49 = vld [vmem:[%s1 + $0xc0] sm:$0xff]
  %v50 = vld [vmem:[%s1 + $0xc8] sm:$0xff]
  %v51 = vld [vmem:[%s1 + $0xd0] sm:$0xff]
  %v52 = vld [vmem:[%s1 + $0xd8] sm:$0xff]
  %v53 = vld [vmem:[%s1 + $0xe0] sm:$0xff]
  %v54 = vld [vmem:[%s1 + $0xe8] sm:$0xff]
  %v55 = vld [vmem:[%s1 + $0xf0] sm:$0xff]
  %v56 = vld [vmem:[%s1 + $0xf8] sm:$0xff]
  %v57 = vpack.c.bf16 %v26, %v25
  %v58 = vpack.c.bf16 %v28, %v27
  %v59 = vpack.c.bf16 %v30, %v29
  %v60 = vpack.c.bf16 %v32, %v31
  %v61 = vpack.c.bf16 %v34, %v33
  %v62 = vpack.c.bf16 %v36, %v35
  %v63 = vpack.c.bf16 %v38, %v37
  %v64 = vpack.c.bf16 %v40, %v39
  %v65 = vpack.c.bf16 %v42, %v41
  %v66 = vpack.c.bf16 %v44, %v43
  %v67 = vpack.c.bf16 %v46, %v45
  %v68 = vpack.c.bf16 %v48, %v47
  %v69 = vpack.c.bf16 %v50, %v49
  %v70 = vpack.c.bf16 %v52, %v51
  %v71 = vpack.c.bf16 %v54, %v53
  %v72 = vpack.c.bf16 %v56, %v55
  %73 = vmatprep.subr.bf16.mxu0 0
  %74 = vmatpush1.bf16.msra.mxu0 %v57
  %75 = vmatprep.subr.bf16.mxu0 0
  %76 = vmatpush1.bf16.msra.mxu0 %v58
  %77 = vmatprep.subr.bf16.mxu0 0
  %78 = vmatpush1.bf16.msra.mxu0 %v59
  %79 = vmatprep.subr.bf16.mxu0 0
  %80 = vmatpush1.bf16.msra.mxu0 %v60
  %81 = vmatprep.subr.bf16.mxu0 0
  %82 = vmatpush1.bf16.msra.mxu0 %v61
  %83 = vmatprep.subr.bf16.mxu0 0
  %84 = vmatpush1.bf16.msra.mxu0 %v62
  %85 = vmatprep.subr.bf16.mxu0 0
  %86 = vmatpush1.bf16.msra.mxu0 %v63
  %87 = vmatprep.subr.bf16.mxu0 0
  %88 = vmatpush1.bf16.msra.mxu0 %v64
  %89 = vmatprep.subr.bf16.mxu0 0
  %90 = vmatpush1.bf16.msra.mxu0 %v65
  %91 = vmatprep.subr.bf16.mxu0 0
  %92 = vmatpush1.bf16.msra.mxu0 %v66
  %93 = vmatprep.subr.bf16.mxu0 0
  %94 = vmatpush1.bf16.msra.mxu0 %v67
  %95 = vmatprep.subr.bf16.mxu0 0
  %96 = vmatpush1.bf16.msra.mxu0 %v68
  %97 = vmatprep.subr.bf16.mxu0 0
  %98 = vmatpush1.bf16.msra.mxu0 %v69
  %99 = vmatprep.subr.bf16.mxu0 0
  %100 = vmatpush1.bf16.msra.mxu0 %v70
  %101 = vmatprep.subr.bf16.mxu0 0
  %102 = vmatpush1.bf16.msra.mxu0 %v71
  %103 = vmatprep.subr.bf16.mxu0 0
  %104 = vmatpush1.bf16.msra.mxu0 %v72
  %105 = vmatprep.mubr.bf16.mxu0 %v24
  %106 = vmatmul.mubr.bf16.gmra.mrb[0].mxu0 %v23
  %v107 = vpop.f32.mrb[0].mxu0
  %v108 = vadd.f32 0.0, %v107
  %v109 = vpop.f32.mrb[0].mxu0
  %v110 = vpop.f32.mrb[0].mxu0
  %v111 = vpop.f32.mrb[0].mxu0
  %112 = vdwg.mxu0
  %v113 = vadd.f32 %v20, %v108
  %114 = vst [vmem:[#allocation2] sm:$0xff] %v113
  // Predicated region
  $region18: #{vit_forward.8} parent=0 // pred_check
    %p115 = pneg %p15
  $region19: #{vit_forward.8} parent=0 // pred_check_branch
    %117 = sbr.rel (%p115) target = $region21
  $region20: #{vit_forward.8} parent=0 // pred_region
    %v118 = vld [vmem:[#allocation2] sm:$0xff]
    %v119 = vld [vmem:[%s2] sm:$0x1]
    %v121 = vlaneseq
    %v122 = vshrl.u32 %v121, 7
    %v123 = vsub.s32 0, %v122
    %v124 = vrot.slane %v119, %v123
    %v126 = vadd.f32 %v118, %v124
    %127 = vst [vmem:[%s3] sm:$0xff] %v126
  $region21: #{vit_forward.8} parent=0 // pred_fallthru
    _
  // Predicated region
  $region22: #{vit_forward.8} parent=0 // pred_check
    _
  $region23: #{vit_forward.8} parent=0 // pred_check_branch
    %129 = sbr.rel (0) target = $region25
  $region24: #{vit_forward.8} parent=0 // pred_region
    _
  $region25: #{vit_forward.8} parent=0 // pred_fallthru
    _
  // Predicated region
  $region26: #{vit_forward.8} parent=0 // pred_check
    _
  $region27: #{vit_forward.8} parent=0 // pred_check_branch
    %131 = sbr.rel (0) target = $region29
  $region28: #{vit_forward.8} parent=0 // pred_region
    _
  $region29: #{vit_forward.8} parent=0 // pred_fallthru
    _

// kernel: vit_forward.9
$region0: #{vit_forward.9}
  #allocation0 [shape = 'u32[]', space=smem, size = 0x4, offset = 0x4, fixed_abs, tag = 'smem constant byte address 0x4 - core index']
  #allocation1 [shape = 'u32[144,128]{1,0:T(1,128)}', space=vmem, size = 0x12000, scoped, tag = 'internal scratch']
  %s0 = inlined_call_operand.vmem [shape: f32[10,128], index: 0, kind: input, shape index: {}]
  %s1 = inlined_call_operand.vmem [shape: f32[1,128], index: 1, kind: input, shape index: {}]
  %s2 = inlined_call_operand.vmem [shape: f32[1,128], index: 2, kind: input, shape index: {}]
  %s3 = inlined_call_operand.vmem [shape: f32[128,128], index: 3, kind: input, shape index: {}]
  %s4 = inlined_call_operand.vmem [shape: f32[10,128], index: 4, kind: output, shape index: {0}]
  %s5 = inlined_call_operand.vmem [shape: f32[10,128], index: 5, kind: output, shape index: {1}]
  %s6 = inlined_call_operand.vmem [shape: f32[1,8,128], index: 6, kind: output, shape index: {2}]
  %7 = xla_tuple %s4, %s5, %s6
  %s8 = sld [smem:[#allocation0]]
  $region42: #{vit_forward.9} parent=0
    _
  %s10 = ssub.s32 1, %s8
  %s11 = scalar_select 0, %s10, %s8
  // Predicated region
  $region2: #{vit_forward.9} parent=0 // pred_check
    _
  $region3: #{vit_forward.9} parent=0 // pred_check_branch
    %13 = sbr.rel (0) target = $region5
  $region4: #{vit_forward.9} parent=0 // pred_region
    _
  $region5: #{vit_forward.9} parent=0 // pred_fallthru
    _
  // Predicated region
  $region6: #{vit_forward.9} parent=0 // pred_check
    _
  $region7: #{vit_forward.9} parent=0 // pred_check_branch
    %15 = sbr.rel (0) target = $region9
  $region8: #{vit_forward.9} parent=0 // pred_region
    _
  $region9: #{vit_forward.9} parent=0 // pred_fallthru
    _
  // Predicated region
  $region10: #{vit_forward.9} parent=0 // pred_check
    _
  $region11: #{vit_forward.9} parent=0 // pred_check_branch
    %17 = sbr.rel (0) target = $region13
  $region12: #{vit_forward.9} parent=0 // pred_region
    _
  $region13: #{vit_forward.9} parent=0 // pred_fallthru
    _
  // Predicated region
  $region14: #{vit_forward.9} parent=0 // pred_check
    _
  $region15: #{vit_forward.9} parent=0 // pred_check_branch
    %19 = sbr.rel (0) target = $region17
  $region16: #{vit_forward.9} parent=0 // pred_region
    _
  $region17: #{vit_forward.9} parent=0 // pred_fallthru
    _
  %v21 = vld [vmem:[%s0] sm:$0xff]
  %v22 = vld [vmem:[%s0 + $0x8] sm:$0x3]
  %v23 = vld [vmem:[%s1] sm:$0x1]
  %v24 = vld [vmem:[%s2] sm:$0x1]
  %25 = vadd.xlane.f32.xlu0 %v21
  %v26 = vpop.xlane.xlu0 %25
  %vm27 = vcmask 1041408
  %v28 = vsel %vm27, %v22, 0.0
  %29 = vadd.xlane.f32.xlu0 %v28
  %v30 = vpop.xlane.xlu0 %29
  %v31 = vrcp.pop 128.0
  %v32 = vmul.f32 %v26, %v31
  %v33 = vmul.f32 %v30, %v31
  %v34 = vsub.f32 %v21, %v32
  %v35 = vsub.f32 %v22, %v33
  %v36 = vmul.f32 %v34, %v34
  %v37 = vmul.f32 %v35, %v35
  %38 = vadd.xlane.f32.xlu0 %v36
  %v39 = vpop.xlane.xlu0 %38
  %v40 = vsel %vm27, %v37, 0.0
  %41 = vadd.xlane.f32.xlu0 %v40
  %v42 = vpop.xlane.xlu0 %41
  %v43 = vmul.f32 %v39, %v31
  %v44 = vmul.f32 %v42, %v31
  %v45 = vadd.f32 %v43, 1e-05
  %v46 = vadd.f32 %v44, 1e-05
  %v47 = vrsqrt.pop %v45
  %v48 = vrsqrt.pop %v46
  %v49 = vmul.f32 %v34, %v47
  %v50 = vmul.f32 %v35, %v48
  %v52 = vlaneseq
  %v53 = vshrl.u32 %v52, 7
  %v54 = vsub.s32 0, %v53
  %v55 = vrot.slane %v23, %v54
  %v57 = vmul.f32 %v49, %v55
  %v58 = vmul.f32 %v50, %v55
  %v60 = vlaneseq
  %v61 = vshrl.u32 %v60, 7
  %v62 = vsub.s32 0, %v61
  %v63 = vrot.slane %v24, %v62
  %v65 = vadd.f32 %v57, %v63
  %v66 = vadd.f32 %v58, %v63
  %v67 = vmul.f32 %v65, 0.29730177
  %v68 = vmul.f32 %v66, 0.29730177
  %v69 = vpack.c.bf16 %v68, %v67
  %v70 = vld [vmem:[%s3] sm:$0xff]
  %v71 = vld [vmem:[%s3 + $0x8] sm:$0xff]
  %v72 = vld [vmem:[%s3 + $0x10] sm:$0xff]
  %v73 = vld [vmem:[%s3 + $0x18] sm:$0xff]
  %v74 = vld [vmem:[%s3 + $0x20] sm:$0xff]
  %v75 = vld [vmem:[%s3 + $0x28] sm:$0xff]
  %v76 = vld [vmem:[%s3 + $0x30] sm:$0xff]
  %v77 = vld [vmem:[%s3 + $0x38] sm:$0xff]
  %v78 = vld [vmem:[%s3 + $0x40] sm:$0xff]
  %v79 = vld [vmem:[%s3 + $0x48] sm:$0xff]
  %v80 = vld [vmem:[%s3 + $0x50] sm:$0xff]
  %v81 = vld [vmem:[%s3 + $0x58] sm:$0xff]
  %v82 = vld [vmem:[%s3 + $0x60] sm:$0xff]
  %v83 = vld [vmem:[%s3 + $0x68] sm:$0xff]
  %v84 = vld [vmem:[%s3 + $0x70] sm:$0xff]
  %v85 = vld [vmem:[%s3 + $0x78] sm:$0xff]
  %v86 = vpack.c.bf16 %v71, %v70
  %v87 = vpack.c.bf16 %v73, %v72
  %v88 = vpack.c.bf16 %v75, %v74
  %v89 = vpack.c.bf16 %v77, %v76
  %v90 = vpack.c.bf16 %v79, %v78
  %v91 = vpack.c.bf16 %v81, %v80
  %v92 = vpack.c.bf16 %v83, %v82
  %v93 = vpack.c.bf16 %v85, %v84
  %94 = vmatprep.subr.bf16.mxu0 0
  %95 = vmatpush1.bf16.xpose.msra.mxu0 %v86
  %96 = vmatprep.subr.bf16.mxu0 0
  %97 = vmatpush1.bf16.xpose.msra.mxu0 %v87
  %98 = vmatprep.subr.bf16.mxu0 0
  %99 = vmatpush1.bf16.xpose.msra.mxu0 %v88
  %100 = vmatprep.subr.bf16.mxu0 0
  %101 = vmatpush1.bf16.xpose.msra.mxu0 %v89
  %102 = vmatprep.subr.bf16.mxu0 0
  %103 = vmatpush1.bf16.xpose.msra.mxu0 %v90
  %104 = vmatprep.subr.bf16.mxu0 0
  %105 = vmatpush1.bf16.xpose.msra.mxu0 %v91
  %106 = vmatprep.subr.bf16.mxu0 0
  %107 = vmatpush1.bf16.xpose.msra.mxu0 %v92
  %108 = vmatprep.subr.bf16.mxu0 0
  %109 = vmatpush1.bf16.xpose.msra.mxu0 %v93
  %110 = vmatprep.subr.bf16.mxu0 0
  %111 = vmatpush1.bf16.xpose.msra.mxu0 0
  %112 = vmatprep.subr.bf16.mxu0 0
  %113 = vmatpush1.bf16.xpose.msra.mxu0 0
  %114 = vmatprep.subr.bf16.mxu0 0
  %115 = vmatpush1.bf16.xpose.msra.mxu0 0
  %116 = vmatprep.subr.bf16.mxu0 0
  %117 = vmatpush1.bf16.xpose.msra.mxu0 0
  %118 = vmatprep.subr.bf16.mxu0 0
  %119 = vmatpush1.bf16.xpose.msra.mxu0 0
  %120 = vmatprep.subr.bf16.mxu0 0
  %121 = vmatpush1.bf16.xpose.msra.mxu0 0
  %122 = vmatprep.subr.bf16.mxu0 0
  %123 = vmatpush1.bf16.xpose.msra.mxu0 0
  %124 = vmatprep.subr.bf16.mxu0 0
  %125 = vmatpush1.bf16.xpose.msra.mxu0 0
  %126 = vmatprep.mubr.bf16.mxu0 0
  %127 = vmatmul.mubr.bf16.gmra.mrb[0].mxu0 %v69
  %v128 = vpop.f32.mrb[0].mxu0
  %v129 = vadd.f32 0.0, %v128
  %v130 = vpop.f32.mrb[0].mxu0
  %v131 = vpop.f32.mrb[0].mxu0
  %v132 = vadd.f32 0.0, %v131
  %v133 = vpop.f32.mrb[0].mxu0
  %134 = vdwg.mxu0
  %135 = vst [vmem:[%s4] sm:$0xff] %v65
  %136 = vst [vmem:[%s4 + $0x8] sm:$0x3] %v66
  %137 = vst [vmem:[%s5] sm:$0xff] %v129
  %138 = vst [vmem:[%s5 + $0x8] sm:$0x3] %v132
  %s139 = smul.u32 0, 10
  %v140 = vlaneseq
  %v141 = vshrl.u32 %v140, 7
  %v142 = vadd.s32 %v141, 8
  %v143 = vstv %s139
  %v144 = vadd.s32 %v143, %v141
  %v145 = vadd.s32 %v143, %v142
  %vm146 = vcmp.lt.s32.totalorder %v144, 10
  %vm147 = vcmp.lt.s32.totalorder %v145, 10
  %v148 = vsel %vm146, 1, 0
  %v149 = vsel %vm147, 1, 0
  %vm150 = vcmp.eq.s32.totalorder %v148, 1
  %vm151 = vcmp.eq.s32.totalorder %v149, 1
  %v152 = vsel %vm150, %v129, -inf
  %v153 = vsel %vm151, %v132, -inf
  %v154 = vsel %vm27, %v153, -inf
  %v155 = vmax.f32 %v152, %v154
  %156 = vmax.xlane.f32.xlu0 %v155
  %v157 = vpop.xlane.xlu0 %156
  %v158 = vrot.slane %v157, 4
  %v159 = vmax.f32 %v157, %v158
  %v160 = vrot.slane %v159, 2
  %v161 = vmax.f32 %v159, %v160
  %v162 = vrot.slane %v161, 1
  %v163 = vmax.f32 %v161, %v162
  %s164 = vtos %v163
  %v165 = vstv %s164
  %166 = vst [vmem:[%s6] sm:$0xff] %v165
  // Predicated region
  $region18: #{vit_forward.9} parent=0 // pred_check
    _
  $region19: #{vit_forward.9} parent=0 // pred_check_branch
    %168 = sbr.rel (0) target = $region21
  $region20: #{vit_forward.9} parent=0 // pred_region
    _
  $region21: #{vit_forward.9} parent=0 // pred_fallthru
    _
  // Predicated region
  $region22: #{vit_forward.9} parent=0 // pred_check
    _
  $region23: #{vit_forward.9} parent=0 // pred_check_branch
    %170 = sbr.rel (0) target = $region25
  $region24: #{vit_forward.9} parent=0 // pred_region
    _
  $region25: #{vit_forward.9} parent=0 // pred_fallthru
    _
  // Predicated region
  $region26: #{vit_forward.9} parent=0 // pred_check
    _
  $region27: #{vit_forward.9} parent=0 // pred_check_branch
    %172 = sbr.rel (0) target = $region29
  $region28: #{vit_forward.9} parent=0 // pred_region
    _
  $region29: #{vit_forward.9} parent=0 // pred_fallthru
    _
  // Predicated region
  $region30: #{vit_forward.9} parent=0 // pred_check
    _
  $region31: #{vit_forward.9} parent=0 // pred_check_branch
    %174 = sbr.rel (0) target = $region33
  $region32: #{vit_forward.9} parent=0 // pred_region
    _
  $region33: #{vit_forward.9} parent=0 // pred_fallthru
    _
  // Predicated region
  $region34: #{vit_forward.9} parent=0 // pred_check
    _
  $region35: #{vit_forward.9} parent=0 // pred_check_branch
    %176 = sbr.rel (0) target = $region37
  $region36: #{vit_forward.9} parent=0 // pred_region
    _
  $region37: #{vit_forward.9} parent=0 // pred_fallthru
    _
  // Predicated region
  $region38: #{vit_forward.9} parent=0 // pred_check
    _
  $region39: #{vit_forward.9} parent=0 // pred_check_branch
    %178 = sbr.rel (0) target = $region41
  $region40: #{vit_forward.9} parent=0 // pred_region
    _
  $region41: #{vit_forward.9} parent=0 // pred_fallthru
    _

// kernel: vit_forward.10
$region0: #{vit_forward.10}
  #allocation0 [shape = 'u32[]', space=smem, size = 0x4, offset = 0x4, fixed_abs, tag = 'smem constant byte address 0x4 - core index']
  #allocation1 [shape = 'u32[144,128]{1,0:T(1,128)}', space=vmem, size = 0x12000, scoped, tag = 'internal scratch']
  #allocation2 [shape = 'f32[1]{0:T(128)S(6)}', space=smem, size = 0x200, scoped, tag = 'scoped memory for vit_forward.10']
  %s0 = inlined_call_operand.<no memory space> [shape: f32[1], index: 0, kind: input, shape index: {}]
  %s1 = inlined_call_operand.vmem [shape: f32[2,5,128], index: 1, kind: input, shape index: {}]
  %s2 = inlined_call_operand.vmem [shape: f32[2,5,128], index: 2, kind: input, shape index: {}]
  %s3 = inlined_call_operand.vmem [shape: f32[2,5,128], index: 3, kind: output, shape index: {}]
  %s4 = sld [smem:[#allocation0]]
  $region22: #{vit_forward.10} parent=0
    _
  %s6 = ssub.s32 1, %s4
  %s7 = scalar_select 0, %s6, %s4
  %8 = sst [smem:[#allocation2]] %s0
  // Predicated region
  $region2: #{vit_forward.10} parent=0 // pred_check
    _
  $region3: #{vit_forward.10} parent=0 // pred_check_branch
    %10 = sbr.rel (0) target = $region5
  $region4: #{vit_forward.10} parent=0 // pred_region
    _
  $region5: #{vit_forward.10} parent=0 // pred_fallthru
    _
  // Predicated region
  $region6: #{vit_forward.10} parent=0 // pred_check
    _
  $region7: #{vit_forward.10} parent=0 // pred_check_branch
    %12 = sbr.rel (0) target = $region9
  $region8: #{vit_forward.10} parent=0 // pred_region
    _
  $region9: #{vit_forward.10} parent=0 // pred_fallthru
    _
  // Predicated region
  $region10: #{vit_forward.10} parent=0 // pred_check
    _
  $region11: #{vit_forward.10} parent=0 // pred_check_branch
    %14 = sbr.rel (0) target = $region13
  $region12: #{vit_forward.10} parent=0 // pred_region
    _
  $region13: #{vit_forward.10} parent=0 // pred_fallthru
    _
  %v16 = vld [vmem:[%s1] sm:$0x1f]
  %v17 = vld [vmem:[%s1 + $0x8] sm:$0x1f]
  %v18 = vld [vmem:[%s2] sm:$0x1f]
  %v19 = vld [vmem:[%s2 + $0x8] sm:$0x1f]
  %v20 = vmul.f32 %v16, %v16
  %v21 = vmul.f32 %v17, %v17
  %vm22 = vcmask 1044480
  %v23 = vsel %vm22, %v20, 0.0
  %24 = vadd.xlane.f32.xlu0 %v23
  %v25 = vpop.xlane.xlu0 %24
  %v26 = vsel %vm22, %v21, 0.0
  %27 = vadd.xlane.f32.xlu0 %v26
  %v28 = vpop.xlane.xlu0 %27
  %v29 = vmul.f32 %v25, 0.044194173
  %v30 = vmul.f32 %v28, 0.044194173
  %v31 = vsel %vm22, %v18, -inf
  %32 = vmax.xlane.f32.xlu0 %v31
  %v33 = vpop.xlane.xlu0 %32
  %v34 = vsel %vm22, %v19, -inf
  %35 = vmax.xlane.f32.xlu0 %v34
  %v36 = vpop.xlane.xlu0 %35
  %v37 = vsub.f32 %v18, %v29
  %v38 = vsub.f32 %v19, %v30
  %v39 = vsub.f32 %v37, %v33
  %v40 = vsub.f32 %v38, %v36
  %v41 = vmul.f32 %v39, 1.442695
  %v42 = vpow.pop %v41
  %v43 = vmul.f32 %v40, 1.442695
  %v44 = vpow.pop %v43
  %v45 = vadd.f32 %v42, 0.0001
  %v46 = vadd.f32 %v44, 0.0001
  %v47 = vmul.f32 %v45, 0.088388346
  %v48 = vmul.f32 %v46, 0.088388346
  %s49 = sld [smem:[#allocation2]]
  %v50 = vstv %s49
  %v51 = vsub.f32 %v33, %v50
  %v52 = vsub.f32 %v36, %v50
  %v53 = vmul.f32 %v51, 1.442695
  %v54 = vpow.pop %v53
  %v55 = vmul.f32 %v52, 1.442695
  %v56 = vpow.pop %v55
  %v57 = vmul.f32 %v54, 0.088388346
  %v58 = vmul.f32 %v56, 0.088388346
  %v59 = vmul.f32 %v42, %v57
  %v60 = vmul.f32 %v44, %v58
  %v61 = vadd.f32 %v59, 8.838835e-06
  %v62 = vadd.f32 %v60, 8.838835e-06
  %v63 = vsel %vm22, %v61, 0.0
  %v64 = vrot.slane %v63, 4
  %v65 = vadd.f32 %v63, %v64
  %v66 = vrot.slane %v65, 2
  %v67 = vadd.f32 %v65, %v66
  %v68 = vrot.slane %v67, 1
  %v69 = vadd.f32 %v67, %v68
  %v70 = vsel %vm22, %v62, 0.0
  %v71 = vrot.slane %v70, 4
  %v72 = vadd.f32 %v70, %v71
  %v73 = vrot.slane %v72, 2
  %v74 = vadd.f32 %v72, %v73
  %v75 = vrot.slane %v74, 1
  %v76 = vadd.f32 %v74, %v75
  %v77 = vmul.f32 %v47, %v69
  %v78 = vmul.f32 %v48, %v76
  %v79 = vsel %vm22, %v77, 0.0
  %80 = vadd.xlane.f32.xlu0 %v79
  %v81 = vpop.xlane.xlu0 %80
  %v82 = vsel %vm22, %v78, 0.0
  %83 = vadd.xlane.f32.xlu0 %v82
  %v84 = vpop.xlane.xlu0 %83
  %v85 = vpack.c.bf16 %v61, %v61
  %v86 = vpack.c.bf16 %v16, %v16
  %87 = vxpose.xlu0.c.b16.start [1/8] %v85, 128
  %88 = vxpose.xlu0.c.b16.cont [2/8] 0, 128
  %89 = vxpose.xlu0.c.b16.cont [3/8] 0, 128
  %90 = vxpose.xlu0.c.b16.cont [4/8] 0, 128
  %91 = vxpose.xlu0.c.b16.cont [5/8] 0, 128
  %92 = vxpose.xlu0.c.b16.cont [6/8] 0, 128
  %93 = vxpose.xlu0.c.b16.cont [7/8] 0, 128
  %94 = vxpose.xlu0.c.b16.end [8/8] 0, 128
  %v95 = vpop.trf.xlu0
  %v96 = vpop.trf.xlu0
  %v97 = vpop.trf.xlu0
  %v98 = vpop.trf.xlu0
  %v99 = vpop.trf.xlu0
  %v100 = vpop.trf.xlu0
  %v101 = vpop.trf.xlu0
  %v102 = vpop.trf.xlu0
  %vm103 = vcmask 39936
  %v105 = vsel %vm103, %v95, 0
  %v108 = vsel %vm103, %v96, 0
  %v111 = vsel %vm103, %v97, 0
  %v114 = vsel %vm103, %v98, 0
  %v117 = vsel %vm103, %v99, 0
  %v120 = vsel %vm103, %v100, 0
  %v123 = vsel %vm103, %v101, 0
  %v126 = vsel %vm103, %v102, 0
  %vm128 = vcmask 1041408
  %vm129 = vcmask 1042432
  %v130 = vsel %vm128, 4294967295, 65535
  %v131 = vsel %vm129, %v130, 0
  %v133 = vand.u32 %v86, %v131
  %135 = vmatprep.subr.bf16.mxu0 0
  %136 = vmatpush1.bf16.msra.mxu0 %v133
  %137 = vmatprep.subr.bf16.mxu0 0
  %138 = vmatpush1.bf16.msra.mxu0 0
  %139 = vmatprep.subr.bf16.mxu0 0
  %140 = vmatpush1.bf16.msra.mxu0 0
  %141 = vmatprep.subr.bf16.mxu0 0
  %142 = vmatpush1.bf16.msra.mxu0 0
  %143 = vmatprep.subr.bf16.mxu0 0
  %144 = vmatpush1.bf16.msra.mxu0 0
  %145 = vmatprep.subr.bf16.mxu0 0
  %146 = vmatpush1.bf16.msra.mxu0 0
  %147 = vmatprep.subr.bf16.mxu0 0
  %148 = vmatpush1.bf16.msra.mxu0 0
  %149 = vmatprep.subr.bf16.mxu0 0
  %150 = vmatpush1.bf16.msra.mxu0 0
  %151 = vmatprep.subr.bf16.mxu0 0
  %152 = vmatpush1.bf16.msra.mxu0 0
  %153 = vmatprep.subr.bf16.mxu0 0
  %154 = vmatpush1.bf16.msra.mxu0 0
  %155 = vmatprep.subr.bf16.mxu0 0
  %156 = vmatpush1.bf16.msra.mxu0 0
  %157 = vmatprep.subr.bf16.mxu0 0
  %158 = vmatpush1.bf16.msra.mxu0 0
  %159 = vmatprep.subr.bf16.mxu0 0
  %160 = vmatpush1.bf16.msra.mxu0 0
  %161 = vmatprep.subr.bf16.mxu0 0
  %162 = vmatpush1.bf16.msra.mxu0 0
  %163 = vmatprep.subr.bf16.mxu0 0
  %164 = vmatpush1.bf16.msra.mxu0 0
  %165 = vmatprep.subr.bf16.mxu0 0
  %166 = vmatpush1.bf16.msra.mxu0 0
  %167 = vmatprep.mubr.bf16.mxu0 0
  %168 = vmatmul.mubr.bf16.gmra.mrb[0].mxu0 %v105
  %v169 = vpop.f32.mrb[0].mxu0
  %v170 = vadd.f32 0.0, %v169
  %v171 = vpop.f32.mrb[0].mxu0
  %v172 = vpop.f32.mrb[0].mxu0
  %v173 = vadd.f32 0.0, %v172
  %v174 = vpop.f32.mrb[0].mxu0
  %175 = vmatprep.mubr.bf16.mxu0 0
  %176 = vmatmul.mubr.bf16.gmra.mrb[0].mxu0 %v108
  %v177 = vpop.f32.mrb[0].mxu0
  %v178 = vadd.f32 0.0, %v177
  %v179 = vpop.f32.mrb[0].mxu0
  %v180 = vpop.f32.mrb[0].mxu0
  %v181 = vadd.f32 0.0, %v180
  %v182 = vpop.f32.mrb[0].mxu0
  %183 = vmatprep.mubr.bf16.mxu0 0
  %184 = vmatmul.mubr.bf16.gmra.mrb[0].mxu0 %v111
  %v185 = vpop.f32.mrb[0].mxu0
  %v186 = vadd.f32 0.0, %v185
  %v187 = vpop.f32.mrb[0].mxu0
  %v188 = vpop.f32.mrb[0].mxu0
  %v189 = vadd.f32 0.0, %v188
  %v190 = vpop.f32.mrb[0].mxu0
  %191 = vmatprep.mubr.bf16.mxu0 0
  %192 = vmatmul.mubr.bf16.gmra.mrb[0].mxu0 %v114
  %v193 = vpop.f32.mrb[0].mxu0
  %v194 = vadd.f32 0.0, %v193
  %v195 = vpop.f32.mrb[0].mxu0
  %v196 = vpop.f32.mrb[0].mxu0
  %v197 = vadd.f32 0.0, %v196
  %v198 = vpop.f32.mrb[0].mxu0
  %199 = vmatprep.mubr.bf16.mxu0 0
  %200 = vmatmul.mubr.bf16.gmra.mrb[0].mxu0 %v117
  %v201 = vpop.f32.mrb[0].mxu0
  %v202 = vadd.f32 0.0, %v201
  %v203 = vpop.f32.mrb[0].mxu0
  %v204 = vpop.f32.mrb[0].mxu0
  %v205 = vadd.f32 0.0, %v204
  %v206 = vpop.f32.mrb[0].mxu0
  %207 = vmatprep.mubr.bf16.mxu0 0
  %208 = vmatmul.mubr.bf16.gmra.mrb[0].mxu0 %v120
  %v209 = vpop.f32.mrb[0].mxu0
  %v210 = vadd.f32 0.0, %v209
  %v211 = vpop.f32.mrb[0].mxu0
  %v212 = vpop.f32.mrb[0].mxu0
  %v213 = vadd.f32 0.0, %v212
  %v214 = vpop.f32.mrb[0].mxu0
  %215 = vmatprep.mubr.bf16.mxu0 0
  %216 = vmatmul.mubr.bf16.gmra.mrb[0].mxu0 %v123
  %v217 = vpop.f32.mrb[0].mxu0
  %v218 = vadd.f32 0.0, %v217
  %v219 = vpop.f32.mrb[0].mxu0
  %v220 = vpop.f32.mrb[0].mxu0
  %v221 = vadd.f32 0.0, %v220
  %v222 = vpop.f32.mrb[0].mxu0
  %223 = vmatprep.mubr.bf16.mxu0 0
  %224 = vmatmul.mubr.bf16.gmra.mrb[0].mxu0 %v126
  %v225 = vpop.f32.mrb[0].mxu0
  %v226 = vadd.f32 0.0, %v225
  %v227 = vpop.f32.mrb[0].mxu0
  %v228 = vpop.f32.mrb[0].mxu0
  %v229 = vadd.f32 0.0, %v228
  %v230 = vpop.f32.mrb[0].mxu0
  %231 = vdwg.mxu0
  %v232 = vpack.c.bf16 %v47, %v47
  %v233 = vpack.c.bf16 %v173, %v170
  %v234 = vpack.c.bf16 %v181, %v178
  %v235 = vpack.c.bf16 %v189, %v186
  %v236 = vpack.c.bf16 %v197, %v194
  %v237 = vpack.c.bf16 %v205, %v202
  %v238 = vpack.c.bf16 %v213, %v210
  %v239 = vpack.c.bf16 %v221, %v218
  %v240 = vpack.c.bf16 %v229, %v226
  %241 = vmatprep.subr.bf16.mxu0 0
  %242 = vmatpush1.bf16.msra.mxu0 %v233
  %243 = vmatprep.subr.bf16.mxu0 0
  %244 = vmatpush1.bf16.msra.mxu0 %v234
  %245 = vmatprep.subr.bf16.mxu0 0
  %246 = vmatpush1.bf16.msra.mxu0 %v235
  %247 = vmatprep.subr.bf16.mxu0 0
  %248 = vmatpush1.bf16.msra.mxu0 %v236
  %249 = vmatprep.subr.bf16.mxu0 0
  %250 = vmatpush1.bf16.msra.mxu0 %v237
  %251 = vmatprep.subr.bf16.mxu0 0
  %252 = vmatpush1.bf16.msra.mxu0 %v238
  %253 = vmatprep.subr.bf16.mxu0 0
  %254 = vmatpush1.bf16.msra.mxu0 %v239
  %255 = vmatprep.subr.bf16.mxu0 0
  %256 = vmatpush1.bf16.msra.mxu0 %v240
  %257 = vmatprep.subr.bf16.mxu0 0
  %258 = vmatpush1.bf16.msra.mxu0 0
  %259 = vmatprep.subr.bf16.mxu0 0
  %260 = vmatpush1.bf16.msra.mxu0 0
  %261 = vmatprep.subr.bf16.mxu0 0
  %262 = vmatpush1.bf16.msra.mxu0 0
  %263 = vmatprep.subr.bf16.mxu0 0
  %264 = vmatpush1.bf16.msra.mxu0 0
  %265 = vmatprep.subr.bf16.mxu0 0
  %266 = vmatpush1.bf16.msra.mxu0 0
  %267 = vmatprep.subr.bf16.mxu0 0
  %268 = vmatpush1.bf16.msra.mxu0 0
  %269 = vmatprep.subr.bf16.mxu0 0
  %270 = vmatpush1.bf16.msra.mxu0 0
  %271 = vmatprep.subr.bf16.mxu0 0
  %272 = vmatpush1.bf16.msra.mxu0 0
  %273 = vmatprep.mubr.bf16.mxu0 0
  %274 = vmatmul.mubr.bf16.gmra.mrb[0].mxu0 %v232
  %v275 = vpop.f32.mrb[0].mxu0
  %v276 = vadd.f32 0.0, %v275
  %v277 = vpop.f32.mrb[0].mxu0
  %v278 = vpop.f32.mrb[0].mxu0
  %v279 = vpop.f32.mrb[0].mxu0
  %280 = vdwg.mxu0
  %v281 = vrcp.pop %v81
  %v282 = vmul.f32 %v276, %v281
  %283 = vst [vmem:[%s3] sm:$0x1f] %v282
  %v284 = vpack.c.bf16 %v62, %v62
  %v285 = vpack.c.bf16 %v17, %v17
  %286 = vxpose.xlu0.c.b16.start [1/8] %v284, 128
  %287 = vxpose.xlu0.c.b16.cont [2/8] 0, 128
  %288 = vxpose.xlu0.c.b16.cont [3/8] 0, 128
  %289 = vxpose.xlu0.c.b16.cont [4/8] 0, 128
  %290 = vxpose.xlu0.c.b16.cont [5/8] 0, 128
  %291 = vxpose.xlu0.c.b16.cont [6/8] 0, 128
  %292 = vxpose.xlu0.c.b16.cont [7/8] 0, 128
  %293 = vxpose.xlu0.c.b16.end [8/8] 0, 128
  %v294 = vpop.trf.xlu0
  %v295 = vpop.trf.xlu0
  %v296 = vpop.trf.xlu0
  %v297 = vpop.trf.xlu0
  %v298 = vpop.trf.xlu0
  %v299 = vpop.trf.xlu0
  %v300 = vpop.trf.xlu0
  %v301 = vpop.trf.xlu0
  %v303 = vsel %vm103, %v294, 0
  %v306 = vsel %vm103, %v295, 0
  %v309 = vsel %vm103, %v296, 0
  %v312 = vsel %vm103, %v297, 0
  %v315 = vsel %vm103, %v298, 0
  %v318 = vsel %vm103, %v299, 0
  %v321 = vsel %vm103, %v300, 0
  %v324 = vsel %vm103, %v301, 0
  %v327 = vand.u32 %v285, %v131
  %329 = vmatprep.subr.bf16.mxu0 0
  %330 = vmatpush1.bf16.msra.mxu0 %v327
  %331 = vmatprep.subr.bf16.mxu0 0
  %332 = vmatpush1.bf16.msra.mxu0 0
  %333 = vmatprep.subr.bf16.mxu0 0
  %334 = vmatpush1.bf16.msra.mxu0 0
  %335 = vmatprep.subr.bf16.mxu0 0
  %336 = vmatpush1.bf16.msra.mxu0 0
  %337 = vmatprep.subr.bf16.mxu0 0
  %338 = vmatpush1.bf16.msra.mxu0 0
  %339 = vmatprep.subr.bf16.mxu0 0
  %340 = vmatpush1.bf16.msra.mxu0 0
  %341 = vmatprep.subr.bf16.mxu0 0
  %342 = vmatpush1.bf16.msra.mxu0 0
  %343 = vmatprep.subr.bf16.mxu0 0
  %344 = vmatpush1.bf16.msra.mxu0 0
  %345 = vmatprep.subr.bf16.mxu0 0
  %346 = vmatpush1.bf16.msra.mxu0 0
  %347 = vmatprep.subr.bf16.mxu0 0
  %348 = vmatpush1.bf16.msra.mxu0 0
  %349 = vmatprep.subr.bf16.mxu0 0
  %350 = vmatpush1.bf16.msra.mxu0 0
  %351 = vmatprep.subr.bf16.mxu0 0
  %352 = vmatpush1.bf16.msra.mxu0 0
  %353 = vmatprep.subr.bf16.mxu0 0
  %354 = vmatpush1.bf16.msra.mxu0 0
  %355 = vmatprep.subr.bf16.mxu0 0
  %356 = vmatpush1.bf16.msra.mxu0 0
  %357 = vmatprep.subr.bf16.mxu0 0
  %358 = vmatpush1.bf16.msra.mxu0 0
  %359 = vmatprep.subr.bf16.mxu0 0
  %360 = vmatpush1.bf16.msra.mxu0 0
  %361 = vmatprep.mubr.bf16.mxu0 0
  %362 = vmatmul.mubr.bf16.gmra.mrb[0].mxu0 %v303
  %v363 = vpop.f32.mrb[0].mxu0
  %v364 = vadd.f32 0.0, %v363
  %v365 = vpop.f32.mrb[0].mxu0
  %v366 = vpop.f32.mrb[0].mxu0
  %v367 = vadd.f32 0.0, %v366
  %v368 = vpop.f32.mrb[0].mxu0
  %369 = vmatprep.mubr.bf16.mxu0 0
  %370 = vmatmul.mubr.bf16.gmra.mrb[0].mxu0 %v306
  %v371 = vpop.f32.mrb[0].mxu0
  %v372 = vadd.f32 0.0, %v371
  %v373 = vpop.f32.mrb[0].mxu0
  %v374 = vpop.f32.mrb[0].mxu0
  %v375 = vadd.f32 0.0, %v374
  %v376 = vpop.f32.mrb[0].mxu0
  %377 = vmatprep.mubr.bf16.mxu0 0
  %378 = vmatmul.mubr.bf16.gmra.mrb[0].mxu0 %v309
  %v379 = vpop.f32.mrb[0].mxu0
  %v380 = vadd.f32 0.0, %v379
  %v381 = vpop.f32.mrb[0].mxu0
  %v382 = vpop.f32.mrb[0].mxu0
  %v383 = vadd.f32 0.0, %v382
  %v384 = vpop.f32.mrb[0].mxu0
  %385 = vmatprep.mubr.bf16.mxu0 0
  %386 = vmatmul.mubr.bf16.gmra.mrb[0].mxu0 %v312
  %v387 = vpop.f32.mrb[0].mxu0
  %v388 = vadd.f32 0.0, %v387
  %v389 = vpop.f32.mrb[0].mxu0
  %v390 = vpop.f32.mrb[0].mxu0
  %v391 = vadd.f32 0.0, %v390
  %v392 = vpop.f32.mrb[0].mxu0
  %393 = vmatprep.mubr.bf16.mxu0 0
  %394 = vmatmul.mubr.bf16.gmra.mrb[0].mxu0 %v315
  %v395 = vpop.f32.mrb[0].mxu0
  %v396 = vadd.f32 0.0, %v395
  %v397 = vpop.f32.mrb[0].mxu0
  %v398 = vpop.f32.mrb[0].mxu0
  %v399 = vadd.f32 0.0, %v398
  %v400 = vpop.f32.mrb[0].mxu0
  %401 = vmatprep.mubr.bf16.mxu0 0
  %402 = vmatmul.mubr.bf16.gmra.mrb[0].mxu0 %v318
  %v403 = vpop.f32.mrb[0].mxu0
  %v404 = vadd.f32 0.0, %v403
  %v405 = vpop.f32.mrb[0].mxu0
  %v406 = vpop.f32.mrb[0].mxu0
  %v407 = vadd.f32 0.0, %v406
  %v408 = vpop.f32.mrb[0].mxu0
  %409 = vmatprep.mubr.bf16.mxu0 0
  %410 = vmatmul.mubr.bf16.gmra.mrb[0].mxu0 %v321
  %v411 = vpop.f32.mrb[0].mxu0
  %v412 = vadd.f32 0.0, %v411
  %v413 = vpop.f32.mrb[0].mxu0
  %v414 = vpop.f32.mrb[0].mxu0
  %v415 = vadd.f32 0.0, %v414
  %v416 = vpop.f32.mrb[0].mxu0
  %417 = vmatprep.mubr.bf16.mxu0 0
  %418 = vmatmul.mubr.bf16.gmra.mrb[0].mxu0 %v324
  %v419 = vpop.f32.mrb[0].mxu0
  %v420 = vadd.f32 0.0, %v419
  %v421 = vpop.f32.mrb[0].mxu0
  %v422 = vpop.f32.mrb[0].mxu0
  %v423 = vadd.f32 0.0, %v422
  %v424 = vpop.f32.mrb[0].mxu0
  %425 = vdwg.mxu0
  %v426 = vpack.c.bf16 %v48, %v48
  %v427 = vpack.c.bf16 %v367, %v364
  %v428 = vpack.c.bf16 %v375, %v372
  %v429 = vpack.c.bf16 %v383, %v380
  %v430 = vpack.c.bf16 %v391, %v388
  %v431 = vpack.c.bf16 %v399, %v396
  %v432 = vpack.c.bf16 %v407, %v404
  %v433 = vpack.c.bf16 %v415, %v412
  %v434 = vpack.c.bf16 %v423, %v420
  %435 = vmatprep.subr.bf16.mxu0 0
  %436 = vmatpush1.bf16.msra.mxu0 %v427
  %437 = vmatprep.subr.bf16.mxu0 0
  %438 = vmatpush1.bf16.msra.mxu0 %v428
  %439 = vmatprep.subr.bf16.mxu0 0
  %440 = vmatpush1.bf16.msra.mxu0 %v429
  %441 = vmatprep.subr.bf16.mxu0 0
  %442 = vmatpush1.bf16.msra.mxu0 %v430
  %443 = vmatprep.subr.bf16.mxu0 0
  %444 = vmatpush1.bf16.msra.mxu0 %v431
  %445 = vmatprep.subr.bf16.mxu0 0
  %446 = vmatpush1.bf16.msra.mxu0 %v432
  %447 = vmatprep.subr.bf16.mxu0 0
  %448 = vmatpush1.bf16.msra.mxu0 %v433
  %449 = vmatprep.subr.bf16.mxu0 0
  %450 = vmatpush1.bf16.msra.mxu0 %v434
  %451 = vmatprep.subr.bf16.mxu0 0
  %452 = vmatpush1.bf16.msra.mxu0 0
  %453 = vmatprep.subr.bf16.mxu0 0
  %454 = vmatpush1.bf16.msra.mxu0 0
  %455 = vmatprep.subr.bf16.mxu0 0
  %456 = vmatpush1.bf16.msra.mxu0 0
  %457 = vmatprep.subr.bf16.mxu0 0
  %458 = vmatpush1.bf16.msra.mxu0 0
  %459 = vmatprep.subr.bf16.mxu0 0
  %460 = vmatpush1.bf16.msra.mxu0 0
  %461 = vmatprep.subr.bf16.mxu0 0
  %462 = vmatpush1.bf16.msra.mxu0 0
  %463 = vmatprep.subr.bf16.mxu0 0
  %464 = vmatpush1.bf16.msra.mxu0 0
  %465 = vmatprep.subr.bf16.mxu0 0
  %466 = vmatpush1.bf16.msra.mxu0 0
  %467 = vmatprep.mubr.bf16.mxu0 0
  %468 = vmatmul.mubr.bf16.gmra.mrb[0].mxu0 %v426
  %v469 = vpop.f32.mrb[0].mxu0
  %v470 = vadd.f32 0.0, %v469
  %v471 = vpop.f32.mrb[0].mxu0
  %v472 = vpop.f32.mrb[0].mxu0
  %v473 = vpop.f32.mrb[0].mxu0
  %474 = vdwg.mxu0
  %v475 = vrcp.pop %v84
  %v476 = vmul.f32 %v470, %v475
  %s477 = scalar_lea.vmem %s3, 8
  %478 = vst [vmem:[%s477] sm:$0x1f] %v476
  // Predicated region
  $region14: #{vit_forward.10} parent=0 // pred_check
    _
  $region15: #{vit_forward.10} parent=0 // pred_check_branch
    %480 = sbr.rel (0) target = $region17
  $region16: #{vit_forward.10} parent=0 // pred_region
    _
  $region17: #{vit_forward.10} parent=0 // pred_fallthru
    _
  // Predicated region
  $region18: #{vit_forward.10} parent=0 // pred_check
    _
  $region19: #{vit_forward.10} parent=0 // pred_check_branch
    %482 = sbr.rel (0) target = $region21
  $region20: #{vit_forward.10} parent=0 // pred_region
    _
  $region21: #{vit_forward.10} parent=0 // pred_fallthru
    _

// kernel: vit_forward.11
$region0: #{vit_forward.11}
  #allocation0 [shape = 'u32[]', space=smem, size = 0x4, offset = 0x4, fixed_abs, tag = 'smem constant byte address 0x4 - core index']
  #allocation1 [shape = 'u32[144,128]{1,0:T(1,128)}', space=vmem, size = 0x12000, scoped, tag = 'internal scratch']
  #allocation2 [shape = 'f32[24,128]{1,0:T(8,128)}', space=vmem, size = 0x3000, scoped, tag = 'scratch operand']
  #allocation3 [shape = 'f32[24,128]{1,0:T(8,128)}', space=vmem, size = 0x3000, scoped, tag = 'scratch operand']
  %s0 = inlined_call_operand.vmem [shape: f32[24,128], index: 0, kind: input, shape index: {}]
  %s1 = inlined_call_operand.vmem [shape: f32[1,128], index: 1, kind: input, shape index: {}]
  %s2 = inlined_call_operand.vmem [shape: f32[1,128], index: 2, kind: input, shape index: {}]
  %s3 = inlined_call_operand.vmem [shape: f32[128,256], index: 3, kind: input, shape index: {}]
  %s4 = inlined_call_operand.vmem [shape: f32[1,256], index: 4, kind: input, shape index: {}]
  %s5 = inlined_call_operand.vmem [shape: f32[256,128], index: 5, kind: input, shape index: {}]
  %s6 = inlined_call_operand.vmem [shape: f32[1,128], index: 6, kind: input, shape index: {}]
  %s7 = inlined_call_operand.vmem [shape: f32[24,128], index: 7, kind: output, shape index: {}]
  %s8 = sld [smem:[#allocation0]]
  $region46: #{vit_forward.11} parent=0
    _
  %s10 = ssub.s32 1, %s8
  %s11 = scalar_select 0, %s10, %s8
  // Predicated region
  $region2: #{vit_forward.11} parent=0 // pred_check
    _
  $region3: #{vit_forward.11} parent=0 // pred_check_branch
    %13 = sbr.rel (0) target = $region5
  $region4: #{vit_forward.11} parent=0 // pred_region
    _
  $region5: #{vit_forward.11} parent=0 // pred_fallthru
    _
  // Predicated region
  $region6: #{vit_forward.11} parent=0 // pred_check
    _
  $region7: #{vit_forward.11} parent=0 // pred_check_branch
    %15 = sbr.rel (0) target = $region9
  $region8: #{vit_forward.11} parent=0 // pred_region
    _
  $region9: #{vit_forward.11} parent=0 // pred_fallthru
    _
  // Predicated region
  $region10: #{vit_forward.11} parent=0 // pred_check
    _
  $region11: #{vit_forward.11} parent=0 // pred_check_branch
    %17 = sbr.rel (0) target = $region13
  $region12: #{vit_forward.11} parent=0 // pred_region
    _
  $region13: #{vit_forward.11} parent=0 // pred_fallthru
    _
  // Predicated region
  $region14: #{vit_forward.11} parent=0 // pred_check
    _
  $region15: #{vit_forward.11} parent=0 // pred_check_branch
    %19 = sbr.rel (0) target = $region17
  $region16: #{vit_forward.11} parent=0 // pred_region
    _
  $region17: #{vit_forward.11} parent=0 // pred_fallthru
    _
  // Predicated region
  $region18: #{vit_forward.11} parent=0 // pred_check
    _
  $region19: #{vit_forward.11} parent=0 // pred_check_branch
    %21 = sbr.rel (0) target = $region21
  $region20: #{vit_forward.11} parent=0 // pred_region
    _
  $region21: #{vit_forward.11} parent=0 // pred_fallthru
    _
  // Predicated region
  $region22: #{vit_forward.11} parent=0 // pred_check
    _
  $region23: #{vit_forward.11} parent=0 // pred_check_branch
    %23 = sbr.rel (0) target = $region25
  $region24: #{vit_forward.11} parent=0 // pred_region
    _
  $region25: #{vit_forward.11} parent=0 // pred_fallthru
    _
  // Predicated region
  $region26: #{vit_forward.11} parent=0 // pred_check
    _
  $region27: #{vit_forward.11} parent=0 // pred_check_branch
    %25 = sbr.rel (0) target = $region29
  $region28: #{vit_forward.11} parent=0 // pred_region
    _
  $region29: #{vit_forward.11} parent=0 // pred_fallthru
    _
  %p27 = scmp.eq.s32.totalorder 0, 0
  // Predicated region
  $region30: #{vit_forward.11} parent=0 // pred_check
    %p28 = pneg %p27
  $region31: #{vit_forward.11} parent=0 // pred_check_branch
    %30 = sbr.rel (%p28) target = $region33
  $region32: #{vit_forward.11} parent=0 // pred_region
    %v31 = vld [vmem:[%s0] sm:$0xff]
    %v32 = vld [vmem:[%s0 + $0x8] sm:$0xff]
    %v33 = vld [vmem:[%s0 + $0x10] sm:$0xff]
    %v34 = vld [vmem:[%s1] sm:$0x1]
    %v35 = vld [vmem:[%s2] sm:$0x1]
    %36 = vadd.xlane.f32.xlu0 %v31
    %v37 = vpop.xlane.xlu0 %36
    %38 = vadd.xlane.f32.xlu0 %v32
    %v39 = vpop.xlane.xlu0 %38
    %40 = vadd.xlane.f32.xlu0 %v33
    %v41 = vpop.xlane.xlu0 %40
    %v42 = vrcp.pop 128.0
    %v43 = vmul.f32 %v37, %v42
    %v44 = vmul.f32 %v39, %v42
    %v45 = vmul.f32 %v41, %v42
    %v46 = vsub.f32 %v31, %v43
    %v47 = vsub.f32 %v32, %v44
    %v48 = vsub.f32 %v33, %v45
    %v49 = vmul.f32 %v46, %v46
    %v50 = vmul.f32 %v47, %v47
    %v51 = vmul.f32 %v48, %v48
    %52 = vadd.xlane.f32.xlu0 %v49
    %v53 = vpop.xlane.xlu0 %52
    %54 = vadd.xlane.f32.xlu0 %v50
    %v55 = vpop.xlane.xlu0 %54
    %56 = vadd.xlane.f32.xlu0 %v51
    %v57 = vpop.xlane.xlu0 %56
    %v58 = vmul.f32 %v53, %v42
    %v59 = vmul.f32 %v55, %v42
    %v60 = vmul.f32 %v57, %v42
    %v61 = vadd.f32 %v58, 1e-05
    %v62 = vadd.f32 %v59, 1e-05
    %v63 = vadd.f32 %v60, 1e-05
    %v64 = vrsqrt.pop %v61
    %v65 = vrsqrt.pop %v62
    %v66 = vrsqrt.pop %v63
    %v67 = vmul.f32 %v46, %v64
    %v68 = vmul.f32 %v47, %v65
    %v69 = vmul.f32 %v48, %v66
    %v71 = vlaneseq
    %v72 = vshrl.u32 %v71, 7
    %v73 = vsub.s32 0, %v72
    %v74 = vrot.slane %v34, %v73
    %v76 = vmul.f32 %v67, %v74
    %v77 = vmul.f32 %v68, %v74
    %v78 = vmul.f32 %v69, %v74
    %v80 = vlaneseq
    %v81 = vshrl.u32 %v80, 7
    %v82 = vsub.s32 0, %v81
    %v83 = vrot.slane %v35, %v82
    %v85 = vadd.f32 %v76, %v83
    %v86 = vadd.f32 %v77, %v83
    %v87 = vadd.f32 %v78, %v83
    %88 = vst [vmem:[#allocation2] sm:$0xff] %v85
    %89 = vst [vmem:[#allocation2 + $0x8] sm:$0xff] %v86
    %90 = vst [vmem:[#allocation2 + $0x10] sm:$0xff] %v87
    %91 = vst [vmem:[#allocation3] sm:$0xff] 0.0
    %92 = vst [vmem:[#allocation3 + $0x8] sm:$0xff] 0.0
    %93 = vst [vmem:[#allocation3 + $0x10] sm:$0xff] 0.0
  $region33: #{vit_forward.11} parent=0 // pred_fallthru
    _
  %v94 = vld [vmem:[#allocation2] sm:$0xff]
  %v95 = vld [vmem:[#allocation2 + $0x8] sm:$0xff]
  %v96 = vld [vmem:[#allocation2 + $0x10] sm:$0xff]
  %v97 = vpack.c.bf16 %v95, %v94
  %v98 = vpack.c.bf16 %v96, %v96
  %v99 = vld [vmem:[%s3] sm:$0xff]
  %v100 = vld [vmem:[%s3 + $0x8] sm:$0xff]
  %v101 = vld [vmem:[%s3 + $0x10] sm:$0xff]
  %v102 = vld [vmem:[%s3 + $0x18] sm:$0xff]
  %v103 = vld [vmem:[%s3 + $0x20] sm:$0xff]
  %v104 = vld [vmem:[%s3 + $0x28] sm:$0xff]
  %v105 = vld [vmem:[%s3 + $0x30] sm:$0xff]
  %v106 = vld [vmem:[%s3 + $0x38] sm:$0xff]
  %v107 = vld [vmem:[%s3 + $0x40] sm:$0xff]
  %v108 = vld [vmem:[%s3 + $0x48] sm:$0xff]
  %v109 = vld [vmem:[%s3 + $0x50] sm:$0xff]
  %v110 = vld [vmem:[%s3 + $0x58] sm:$0xff]
  %v111 = vld [vmem:[%s3 + $0x60] sm:$0xff]
  %v112 = vld [vmem:[%s3 + $0x68] sm:$0xff]
  %v113 = vld [vmem:[%s3 + $0x70] sm:$0xff]
  %v114 = vld [vmem:[%s3 + $0x78] sm:$0xff]
  %v115 = vld [vmem:[%s3 + $0x80] sm:$0xff]
  %v116 = vld [vmem:[%s3 + $0x88] sm:$0xff]
  %v117 = vld [vmem:[%s3 + $0x90] sm:$0xff]
  %v118 = vld [vmem:[%s3 + $0x98] sm:$0xff]
  %v119 = vld [vmem:[%s3 + $0xa0] sm:$0xff]
  %v120 = vld [vmem:[%s3 + $0xa8] sm:$0xff]
  %v121 = vld [vmem:[%s3 + $0xb0] sm:$0xff]
  %v122 = vld [vmem:[%s3 + $0xb8] sm:$0xff]
  %v123 = vld [vmem:[%s3 + $0xc0] sm:$0xff]
  %v124 = vld [vmem:[%s3 + $0xc8] sm:$0xff]
  %v125 = vld [vmem:[%s3 + $0xd0] sm:$0xff]
  %v126 = vld [vmem:[%s3 + $0xd8] sm:$0xff]
  %v127 = vld [vmem:[%s3 + $0xe0] sm:$0xff]
  %v128 = vld [vmem:[%s3 + $0xe8] sm:$0xff]
  %v129 = vld [vmem:[%s3 + $0xf0] sm:$0xff]
  %v130 = vld [vmem:[%s3 + $0xf8] sm:$0xff]
  %v131 = vpack.c.bf16 %v101, %v99
  %v132 = vpack.c.bf16 %v102, %v100
  %v133 = vpack.c.bf16 %v105, %v103
  %v134 = vpack.c.bf16 %v106, %v104
  %v135 = vpack.c.bf16 %v109, %v107
  %v136 = vpack.c.bf16 %v110, %v108
  %v137 = vpack.c.bf16 %v113, %v111
  %v138 = vpack.c.bf16 %v114, %v112
  %v139 = vpack.c.bf16 %v117, %v115
  %v140 = vpack.c.bf16 %v118, %v116
  %v141 = vpack.c.bf16 %v121, %v119
  %v142 = vpack.c.bf16 %v122, %v120
  %v143 = vpack.c.bf16 %v125, %v123
  %v144 = vpack.c.bf16 %v126, %v124
  %v145 = vpack.c.bf16 %v129, %v127
  %v146 = vpack.c.bf16 %v130, %v128
  %v147 = vld [vmem:[%s4] sm:$0x3]
  %v149 = vlaneseq
  %v150 = vshrl.u32 %v149, 7
  %v151 = vsub.s32 0, %v150
  %v152 = vrot.slane %v147, %v151
  %v153 = vlaneseq
  %v154 = vshrl.u32 %v153, 7
  %v155 = vsub.s32 1, %v154
  %v156 = vrot.slane %v147, %v155
  %159 = vmatprep.subr.bf16.mxu0 %v132
  %160 = vmatpush1.bf16.msra.mxu0 %v131
  %161 = vmatprep.subr.bf16.mxu0 %v134
  %162 = vmatpush1.bf16.msra.mxu0 %v133
  %163 = vmatprep.subr.bf16.mxu0 %v136
  %164 = vmatpush1.bf16.msra.mxu0 %v135
  %165 = vmatprep.subr.bf16.mxu0 %v138
  %166 = vmatpush1.bf16.msra.mxu0 %v137
  %167 = vmatprep.subr.bf16.mxu0 %v140
  %168 = vmatpush1.bf16.msra.mxu0 %v139
  %169 = vmatprep.subr.bf16.mxu0 %v142
  %170 = vmatpush1.bf16.msra.mxu0 %v141
  %171 = vmatprep.subr.bf16.mxu0 %v144
  %172 = vmatpush1.bf16.msra.mxu0 %v143
  %173 = vmatprep.subr.bf16.mxu0 %v146
  %174 = vmatpush1.bf16.msra.mxu0 %v145
  %175 = vmatprep.subr.bf16.mxu0 0
  %176 = vmatpush1.bf16.msra.mxu0 0
  %177 = vmatprep.subr.bf16.mxu0 0
  %178 = vmatpush1.bf16.msra.mxu0 0
  %179 = vmatprep.subr.bf16.mxu0 0
  %180 = vmatpush1.bf16.msra.mxu0 0
  %181 = vmatprep.subr.bf16.mxu0 0
  %182 = vmatpush1.bf16.msra.mxu0 0
  %183 = vmatprep.subr.bf16.mxu0 0
  %184 = vmatpush1.bf16.msra.mxu0 0
  %185 = vmatprep.subr.bf16.mxu0 0
  %186 = vmatpush1.bf16.msra.mxu0 0
  %187 = vmatprep.subr.bf16.mxu0 0
  %188 = vmatpush1.bf16.msra.mxu0 0
  %189 = vmatprep.subr.bf16.mxu0 0
  %190 = vmatpush1.bf16.msra.mxu0 0
  %191 = vmatprep.mubr.bf16.mxu0 0
  %192 = vmatmul.mubr.bf16.gmra.mrb[0].mxu0 %v97
  %v193 = vpop.f32.mrb[0].mxu0
  %v194 = vadd.f32 %v152, %v193
  %v195 = vpop.f32.mrb[0].mxu0
  %v196 = vadd.f32 %v156, %v195
  %v197 = vpop.f32.mrb[0].mxu0
  %v198 = vadd.f32 %v152, %v197
  %v199 = vpop.f32.mrb[0].mxu0
  %v200 = vadd.f32 %v156, %v199
  %201 = vmatprep.mubr.bf16.mxu0 0
  %202 = vmatmul.mubr.bf16.gmra.mrb[0].mxu0 %v98
  %v203 = vpop.f32.mrb[0].mxu0
  %v204 = vadd.f32 %v152, %v203
  %v205 = vpop.f32.mrb[0].mxu0
  %v206 = vadd.f32 %v156, %v205
  %v207 = vpop.f32.mrb[0].mxu0
  %v208 = vpop.f32.mrb[0].mxu0
  %209 = vdwg.mxu0
  %v210 = vmul.f32 %v194, 0.5
  %v211 = vmul.f32 %v196, 0.5
  %v212 = vmul.f32 %v198, 0.5
  %v213 = vmul.f32 %v200, 0.5
  %v214 = vmul.f32 %v204, 0.5
  %v215 = vmul.f32 %v206, 0.5
  %v216 = vmul.f32 %v194, 0.044715
  %v217 = vmul.f32 %v196, 0.044715
  %v218 = vmul.f32 %v198, 0.044715
  %v219 = vmul.f32 %v200, 0.044715
  %v220 = vmul.f32 %v204, 0.044715
  %v221 = vmul.f32 %v206, 0.044715
  %v222 = vmul.f32 %v216, %v194
  %v223 = vmul.f32 %v217, %v196
  %v224 = vmul.f32 %v218, %v198
  %v225 = vmul.f32 %v219, %v200
  %v226 = vmul.f32 %v220, %v204
  %v227 = vmul.f32 %v221, %v206
  %v228 = vmul.f32 %v222, %v194
  %v229 = vmul.f32 %v223, %v196
  %v230 = vmul.f32 %v224, %v198
  %v231 = vmul.f32 %v225, %v200
  %v232 = vmul.f32 %v226, %v204
  %v233 = vmul.f32 %v227, %v206
  %v234 = vadd.f32 %v194, %v228
  %v235 = vadd.f32 %v196, %v229
  %v236 = vadd.f32 %v198, %v230
  %v237 = vadd.f32 %v200, %v231
  %v238 = vadd.f32 %v204, %v232
  %v239 = vadd.f32 %v206, %v233
  %v240 = vmul.f32 %v234, 0.7978846
  %v241 = vmul.f32 %v235, 0.7978846
  %v242 = vmul.f32 %v236, 0.7978846
  %v243 = vmul.f32 %v237, 0.7978846
  %v244 = vmul.f32 %v238, 0.7978846
  %v245 = vmul.f32 %v239, 0.7978846
  %v246 = vtanh.pop %v240
  %v247 = vtanh.pop %v241
  %v248 = vtanh.pop %v242
  %v249 = vtanh.pop %v243
  %v250 = vtanh.pop %v244
  %v251 = vtanh.pop %v245
  %v252 = vadd.f32 %v246, 1.0
  %v253 = vadd.f32 %v247, 1.0
  %v254 = vadd.f32 %v248, 1.0
  %v255 = vadd.f32 %v249, 1.0
  %v256 = vadd.f32 %v250, 1.0
  %v257 = vadd.f32 %v251, 1.0
  %v258 = vmul.f32 %v210, %v252
  %v259 = vmul.f32 %v211, %v253
  %v260 = vmul.f32 %v212, %v254
  %v261 = vmul.f32 %v213, %v255
  %v262 = vmul.f32 %v214, %v256
  %v263 = vmul.f32 %v215, %v257
  %v264 = vld [vmem:[#allocation3] sm:$0xff]
  %v265 = vld [vmem:[#allocation3 + $0x8] sm:$0xff]
  %v266 = vld [vmem:[#allocation3 + $0x10] sm:$0xff]
  %v267 = vpack.c.bf16 %v260, %v258
  %v268 = vpack.c.bf16 %v261, %v259
  %v269 = vpack.c.bf16 %v262, %v262
  %v270 = vpack.c.bf16 %v263, %v263
  %v271 = vld [vmem:[%s5] sm:$0xff]
  %v272 = vld [vmem:[%s5 + $0x8] sm:$0xff]
  %v273 = vld [vmem:[%s5 + $0x10] sm:$0xff]
  %v274 = vld [vmem:[%s5 + $0x18] sm:$0xff]
  %v275 = vld [vmem:[%s5 + $0x20] sm:$0xff]
  %v276 = vld [vmem:[%s5 + $0x28] sm:$0xff]
  %v277 = vld [vmem:[%s5 + $0x30] sm:$0xff]
  %v278 = vld [vmem:[%s5 + $0x38] sm:$0xff]
  %v279 = vld [vmem:[%s5 + $0x40] sm:$0xff]
  %v280 = vld [vmem:[%s5 + $0x48] sm:$0xff]
  %v281 = vld [vmem:[%s5 + $0x50] sm:$0xff]
  %v282 = vld [vmem:[%s5 + $0x58] sm:$0xff]
  %v283 = vld [vmem:[%s5 + $0x60] sm:$0xff]
  %v284 = vld [vmem:[%s5 + $0x68] sm:$0xff]
  %v285 = vld [vmem:[%s5 + $0x70] sm:$0xff]
  %v286 = vld [vmem:[%s5 + $0x78] sm:$0xff]
  %v287 = vld [vmem:[%s5 + $0x80] sm:$0xff]
  %v288 = vld [vmem:[%s5 + $0x88] sm:$0xff]
  %v289 = vld [vmem:[%s5 + $0x90] sm:$0xff]
  %v290 = vld [vmem:[%s5 + $0x98] sm:$0xff]
  %v291 = vld [vmem:[%s5 + $0xa0] sm:$0xff]
  %v292 = vld [vmem:[%s5 + $0xa8] sm:$0xff]
  %v293 = vld [vmem:[%s5 + $0xb0] sm:$0xff]
  %v294 = vld [vmem:[%s5 + $0xb8] sm:$0xff]
  %v295 = vld [vmem:[%s5 + $0xc0] sm:$0xff]
  %v296 = vld [vmem:[%s5 + $0xc8] sm:$0xff]
  %v297 = vld [vmem:[%s5 + $0xd0] sm:$0xff]
  %v298 = vld [vmem:[%s5 + $0xd8] sm:$0xff]
  %v299 = vld [vmem:[%s5 + $0xe0] sm:$0xff]
  %v300 = vld [vmem:[%s5 + $0xe8] sm:$0xff]
  %v301 = vld [vmem:[%s5 + $0xf0] sm:$0xff]
  %v302 = vld [vmem:[%s5 + $0xf8] sm:$0xff]
  %v303 = vpack.c.bf16 %v272, %v271
  %v304 = vpack.c.bf16 %v274, %v273
  %v305 = vpack.c.bf16 %v276, %v275
  %v306 = vpack.c.bf16 %v278, %v277
  %v307 = vpack.c.bf16 %v280, %v279
  %v308 = vpack.c.bf16 %v282, %v281
  %v309 = vpack.c.bf16 %v284, %v283
  %v310 = vpack.c.bf16 %v286, %v285
  %v311 = vpack.c.bf16 %v288, %v287
  %v312 = vpack.c.bf16 %v290, %v289
  %v313 = vpack.c.bf16 %v292, %v291
  %v314 = vpack.c.bf16 %v294, %v293
  %v315 = vpack.c.bf16 %v296, %v295
  %v316 = vpack.c.bf16 %v298, %v297
  %v317 = vpack.c.bf16 %v300, %v299
  %v318 = vpack.c.bf16 %v302, %v301
  %319 = vmatprep.subr.bf16.mxu0 0
  %320 = vmatpush1.bf16.msra.mxu0 %v303
  %321 = vmatprep.subr.bf16.mxu0 0
  %322 = vmatpush1.bf16.msra.mxu0 %v304
  %323 = vmatprep.subr.bf16.mxu0 0
  %324 = vmatpush1.bf16.msra.mxu0 %v305
  %325 = vmatprep.subr.bf16.mxu0 0
  %326 = vmatpush1.bf16.msra.mxu0 %v306
  %327 = vmatprep.subr.bf16.mxu0 0
  %328 = vmatpush1.bf16.msra.mxu0 %v307
  %329 = vmatprep.subr.bf16.mxu0 0
  %330 = vmatpush1.bf16.msra.mxu0 %v308
  %331 = vmatprep.subr.bf16.mxu0 0
  %332 = vmatpush1.bf16.msra.mxu0 %v309
  %333 = vmatprep.subr.bf16.mxu0 0
  %334 = vmatpush1.bf16.msra.mxu0 %v310
  %335 = vmatprep.subr.bf16.mxu0 0
  %336 = vmatpush1.bf16.msra.mxu0 %v311
  %337 = vmatprep.subr.bf16.mxu0 0
  %338 = vmatpush1.bf16.msra.mxu0 %v312
  %339 = vmatprep.subr.bf16.mxu0 0
  %340 = vmatpush1.bf16.msra.mxu0 %v313
  %341 = vmatprep.subr.bf16.mxu0 0
  %342 = vmatpush1.bf16.msra.mxu0 %v314
  %343 = vmatprep.subr.bf16.mxu0 0
  %344 = vmatpush1.bf16.msra.mxu0 %v315
  %345 = vmatprep.subr.bf16.mxu0 0
  %346 = vmatpush1.bf16.msra.mxu0 %v316
  %347 = vmatprep.subr.bf16.mxu0 0
  %348 = vmatpush1.bf16.msra.mxu0 %v317
  %349 = vmatprep.subr.bf16.mxu0 0
  %350 = vmatpush1.bf16.msra.mxu0 %v318
  %351 = vmatprep.mubr.bf16.mxu0 %v268
  %352 = vmatmul.mubr.bf16.gmra.mrb[0].mxu0 %v267
  %v353 = vpop.f32.mrb[0].mxu0
  %v354 = vadd.f32 0.0, %v353
  %v355 = vpop.f32.mrb[0].mxu0
  %v356 = vpop.f32.mrb[0].mxu0
  %v357 = vadd.f32 0.0, %v356
  %v358 = vpop.f32.mrb[0].mxu0
  %359 = vmatprep.mubr.bf16.mxu0 %v270
  %360 = vmatmul.mubr.bf16.gmra.mrb[0].mxu0 %v269
  %v361 = vpop.f32.mrb[0].mxu0
  %v362 = vadd.f32 0.0, %v361
  %v363 = vpop.f32.mrb[0].mxu0
  %v364 = vpop.f32.mrb[0].mxu0
  %v365 = vpop.f32.mrb[0].mxu0
  %366 = vdwg.mxu0
  %v367 = vadd.f32 %v264, %v354
  %v368 = vadd.f32 %v265, %v357
  %v369 = vadd.f32 %v266, %v362
  %370 = vst [vmem:[#allocation3] sm:$0xff] %v367
  %371 = vst [vmem:[#allocation3 + $0x8] sm:$0xff] %v368
  %372 = vst [vmem:[#allocation3 + $0x10] sm:$0xff] %v369
  // Predicated region
  $region34: #{vit_forward.11} parent=0 // pred_check
    %p373 = pneg %p27
  $region35: #{vit_forward.11} parent=0 // pred_check_branch
    %375 = sbr.rel (%p373) target = $region37
  $region36: #{vit_forward.11} parent=0 // pred_region
    %v376 = vld [vmem:[#allocation3] sm:$0xff]
    %v377 = vld [vmem:[#allocation3 + $0x8] sm:$0xff]
    %v378 = vld [vmem:[#allocation3 + $0x10] sm:$0xff]
    %v379 = vld [vmem:[%s6] sm:$0x1]
    %v381 = vlaneseq
    %v382 = vshrl.u32 %v381, 7
    %v383 = vsub.s32 0, %v382
    %v384 = vrot.slane %v379, %v383
    %v386 = vadd.f32 %v376, %v384
    %v387 = vadd.f32 %v377, %v384
    %v388 = vadd.f32 %v378, %v384
    %389 = vst [vmem:[%s7] sm:$0xff] %v386
    %390 = vst [vmem:[%s7 + $0x8] sm:$0xff] %v387
    %391 = vst [vmem:[%s7 + $0x10] sm:$0xff] %v388
  $region37: #{vit_forward.11} parent=0 // pred_fallthru
    _
  // Predicated region
  $region38: #{vit_forward.11} parent=0 // pred_check
    _
  $region39: #{vit_forward.11} parent=0 // pred_check_branch
    %393 = sbr.rel (0) target = $region41
  $region40: #{vit_forward.11} parent=0 // pred_region
    _
  $region41: #{vit_forward.11} parent=0 // pred_fallthru
    _
  // Predicated region
  $region42: #{vit_forward.11} parent=0 // pred_check
    _
  $region43: #{vit_forward.11} parent=0 // pred_check_branch
    %395 = sbr.rel (0) target = $region45
  $region44: #{vit_forward.11} parent=0 // pred_region
    _
  $region45: #{vit_forward.11} parent=0 // pred_fallthru
    _

// kernel: squeeze.1
$region0: #{squeeze.1}
  %s0 = inlined_call_operand.vmem [shape: f32[2,1,2,5,128], index: 0, kind: input, shape index: {}]
  %s1 = inlined_call_operand.vmem [shape: f32[20,128], index: 1, kind: output, shape index: {}]
  %v2 = vld [vmem:[%s0] sm:$0x1f]
  %3 = vst [vmem:[%s1] sm:$0x1f] %v2
  %s4 = scalar_lea.vmem %s0, 8
  %v5 = vld [vmem:[%s4] sm:$0x1f]
  %s6 = scalar_lea.vmem %s1, 5
  %7 = vst [vmem:[%s6] sm:$0x1f] %v5
  %s8 = scalar_lea.vmem %s0, 16
  %v9 = vld [vmem:[%s8] sm:$0x1f]
  %s10 = scalar_lea.vmem %s1, 10
  %11 = vst [vmem:[%s10] sm:$0x1f] %v9
  %s12 = scalar_lea.vmem %s0, 24
  %v13 = vld [vmem:[%s12] sm:$0x1f]
  %s14 = scalar_lea.vmem %s1, 15
  %15 = vst [vmem:[%s14] sm:$0x1f] %v13

// kernel: vit_forward.12
$region0: #{vit_forward.12}
  #allocation0 [shape = 'u32[]', space=smem, size = 0x4, offset = 0x4, fixed_abs, tag = 'smem constant byte address 0x4 - core index']
  #allocation1 [shape = 'u32[144,128]{1,0:T(1,128)}', space=vmem, size = 0x12000, scoped, tag = 'internal scratch']
  %s0 = inlined_call_operand.vmem [shape: f32[20,128], index: 0, kind: input, shape index: {}]
  %s1 = inlined_call_operand.vmem [shape: f32[1,128], index: 1, kind: input, shape index: {}]
  %s2 = inlined_call_operand.vmem [shape: f32[1,128], index: 2, kind: input, shape index: {}]
  %s3 = inlined_call_operand.vmem [shape: f32[128,128], index: 3, kind: input, shape index: {}]
  %s4 = inlined_call_operand.vmem [shape: f32[20,128], index: 4, kind: output, shape index: {0}]
  %s5 = inlined_call_operand.vmem [shape: f32[20,128], index: 5, kind: output, shape index: {1}]
  %s6 = inlined_call_operand.vmem [shape: f32[1,8,128], index: 6, kind: output, shape index: {2}]
  %7 = xla_tuple %s4, %s5, %s6
  %s8 = sld [smem:[#allocation0]]
  $region42: #{vit_forward.12} parent=0
    _
  %s10 = ssub.s32 1, %s8
  %s11 = scalar_select 0, %s10, %s8
  // Predicated region
  $region2: #{vit_forward.12} parent=0 // pred_check
    _
  $region3: #{vit_forward.12} parent=0 // pred_check_branch
    %13 = sbr.rel (0) target = $region5
  $region4: #{vit_forward.12} parent=0 // pred_region
    _
  $region5: #{vit_forward.12} parent=0 // pred_fallthru
    _
  // Predicated region
  $region6: #{vit_forward.12} parent=0 // pred_check
    _
  $region7: #{vit_forward.12} parent=0 // pred_check_branch
    %15 = sbr.rel (0) target = $region9
  $region8: #{vit_forward.12} parent=0 // pred_region
    _
  $region9: #{vit_forward.12} parent=0 // pred_fallthru
    _
  // Predicated region
  $region10: #{vit_forward.12} parent=0 // pred_check
    _
  $region11: #{vit_forward.12} parent=0 // pred_check_branch
    %17 = sbr.rel (0) target = $region13
  $region12: #{vit_forward.12} parent=0 // pred_region
    _
  $region13: #{vit_forward.12} parent=0 // pred_fallthru
    _
  // Predicated region
  $region14: #{vit_forward.12} parent=0 // pred_check
    _
  $region15: #{vit_forward.12} parent=0 // pred_check_branch
    %19 = sbr.rel (0) target = $region17
  $region16: #{vit_forward.12} parent=0 // pred_region
    _
  $region17: #{vit_forward.12} parent=0 // pred_fallthru
    _
  %v21 = vld [vmem:[%s0] sm:$0xff]
  %v22 = vld [vmem:[%s0 + $0x8] sm:$0xff]
  %v23 = vld [vmem:[%s0 + $0x10] sm:$0xf]
  %v24 = vld [vmem:[%s1] sm:$0x1]
  %v25 = vld [vmem:[%s2] sm:$0x1]
  %26 = vadd.xlane.f32.xlu0 %v21
  %v27 = vpop.xlane.xlu0 %26
  %28 = vadd.xlane.f32.xlu0 %v22
  %v29 = vpop.xlane.xlu0 %28
  %vm30 = vcmask 1043456
  %v31 = vsel %vm30, %v23, 0.0
  %32 = vadd.xlane.f32.xlu0 %v31
  %v33 = vpop.xlane.xlu0 %32
  %v34 = vrcp.pop 128.0
  %v35 = vmul.f32 %v27, %v34
  %v36 = vmul.f32 %v29, %v34
  %v37 = vmul.f32 %v33, %v34
  %v38 = vsub.f32 %v21, %v35
  %v39 = vsub.f32 %v22, %v36
  %v40 = vsub.f32 %v23, %v37
  %v41 = vmul.f32 %v38, %v38
  %v42 = vmul.f32 %v39, %v39
  %v43 = vmul.f32 %v40, %v40
  %44 = vadd.xlane.f32.xlu0 %v41
  %v45 = vpop.xlane.xlu0 %44
  %46 = vadd.xlane.f32.xlu0 %v42
  %v47 = vpop.xlane.xlu0 %46
  %v48 = vsel %vm30, %v43, 0.0
  %49 = vadd.xlane.f32.xlu0 %v48
  %v50 = vpop.xlane.xlu0 %49
  %v51 = vmul.f32 %v45, %v34
  %v52 = vmul.f32 %v47, %v34
  %v53 = vmul.f32 %v50, %v34
  %v54 = vadd.f32 %v51, 1e-05
  %v55 = vadd.f32 %v52, 1e-05
  %v56 = vadd.f32 %v53, 1e-05
  %v57 = vrsqrt.pop %v54
  %v58 = vrsqrt.pop %v55
  %v59 = vrsqrt.pop %v56
  %v60 = vmul.f32 %v38, %v57
  %v61 = vmul.f32 %v39, %v58
  %v62 = vmul.f32 %v40, %v59
  %v64 = vlaneseq
  %v65 = vshrl.u32 %v64, 7
  %v66 = vsub.s32 0, %v65
  %v67 = vrot.slane %v24, %v66
  %v69 = vmul.f32 %v60, %v67
  %v70 = vmul.f32 %v61, %v67
  %v71 = vmul.f32 %v62, %v67
  %v73 = vlaneseq
  %v74 = vshrl.u32 %v73, 7
  %v75 = vsub.s32 0, %v74
  %v76 = vrot.slane %v25, %v75
  %v78 = vadd.f32 %v69, %v76
  %v79 = vadd.f32 %v70, %v76
  %v80 = vadd.f32 %v71, %v76
  %v81 = vmul.f32 %v78, 0.29730177
  %v82 = vmul.f32 %v79, 0.29730177
  %v83 = vmul.f32 %v80, 0.29730177
  %v84 = vpack.c.bf16 %v82, %v81
  %v85 = vpack.c.bf16 %v83, %v83
  %v86 = vld [vmem:[%s3] sm:$0xff]
  %v87 = vld [vmem:[%s3 + $0x8] sm:$0xff]
  %v88 = vld [vmem:[%s3 + $0x10] sm:$0xff]
  %v89 = vld [vmem:[%s3 + $0x18] sm:$0xff]
  %v90 = vld [vmem:[%s3 + $0x20] sm:$0xff]
  %v91 = vld [vmem:[%s3 + $0x28] sm:$0xff]
  %v92 = vld [vmem:[%s3 + $0x30] sm:$0xff]
  %v93 = vld [vmem:[%s3 + $0x38] sm:$0xff]
  %v94 = vld [vmem:[%s3 + $0x40] sm:$0xff]
  %v95 = vld [vmem:[%s3 + $0x48] sm:$0xff]
  %v96 = vld [vmem:[%s3 + $0x50] sm:$0xff]
  %v97 = vld [vmem:[%s3 + $0x58] sm:$0xff]
  %v98 = vld [vmem:[%s3 + $0x60] sm:$0xff]
  %v99 = vld [vmem:[%s3 + $0x68] sm:$0xff]
  %v100 = vld [vmem:[%s3 + $0x70] sm:$0xff]
  %v101 = vld [vmem:[%s3 + $0x78] sm:$0xff]
  %v102 = vpack.c.bf16 %v87, %v86
  %v103 = vpack.c.bf16 %v89, %v88
  %v104 = vpack.c.bf16 %v91, %v90
  %v105 = vpack.c.bf16 %v93, %v92
  %v106 = vpack.c.bf16 %v95, %v94
  %v107 = vpack.c.bf16 %v97, %v96
  %v108 = vpack.c.bf16 %v99, %v98
  %v109 = vpack.c.bf16 %v101, %v100
  %110 = vmatprep.subr.bf16.mxu0 0
  %111 = vmatpush1.bf16.xpose.msra.mxu0 %v102
  %112 = vmatprep.subr.bf16.mxu0 0
  %113 = vmatpush1.bf16.xpose.msra.mxu0 %v103
  %114 = vmatprep.subr.bf16.mxu0 0
  %115 = vmatpush1.bf16.xpose.msra.mxu0 %v104
  %116 = vmatprep.subr.bf16.mxu0 0
  %117 = vmatpush1.bf16.xpose.msra.mxu0 %v105
  %118 = vmatprep.subr.bf16.mxu0 0
  %119 = vmatpush1.bf16.xpose.msra.mxu0 %v106
  %120 = vmatprep.subr.bf16.mxu0 0
  %121 = vmatpush1.bf16.xpose.msra.mxu0 %v107
  %122 = vmatprep.subr.bf16.mxu0 0
  %123 = vmatpush1.bf16.xpose.msra.mxu0 %v108
  %124 = vmatprep.subr.bf16.mxu0 0
  %125 = vmatpush1.bf16.xpose.msra.mxu0 %v109
  %126 = vmatprep.subr.bf16.mxu0 0
  %127 = vmatpush1.bf16.xpose.msra.mxu0 0
  %128 = vmatprep.subr.bf16.mxu0 0
  %129 = vmatpush1.bf16.xpose.msra.mxu0 0
  %130 = vmatprep.subr.bf16.mxu0 0
  %131 = vmatpush1.bf16.xpose.msra.mxu0 0
  %132 = vmatprep.subr.bf16.mxu0 0
  %133 = vmatpush1.bf16.xpose.msra.mxu0 0
  %134 = vmatprep.subr.bf16.mxu0 0
  %135 = vmatpush1.bf16.xpose.msra.mxu0 0
  %136 = vmatprep.subr.bf16.mxu0 0
  %137 = vmatpush1.bf16.xpose.msra.mxu0 0
  %138 = vmatprep.subr.bf16.mxu0 0
  %139 = vmatpush1.bf16.xpose.msra.mxu0 0
  %140 = vmatprep.subr.bf16.mxu0 0
  %141 = vmatpush1.bf16.xpose.msra.mxu0 0
  %142 = vmatprep.mubr.bf16.mxu0 0
  %143 = vmatmul.mubr.bf16.gmra.mrb[0].mxu0 %v84
  %v144 = vpop.f32.mrb[0].mxu0
  %v145 = vadd.f32 0.0, %v144
  %v146 = vpop.f32.mrb[0].mxu0
  %v147 = vpop.f32.mrb[0].mxu0
  %v148 = vadd.f32 0.0, %v147
  %v149 = vpop.f32.mrb[0].mxu0
  %150 = vmatprep.mubr.bf16.mxu0 0
  %151 = vmatmul.mubr.bf16.gmra.mrb[0].mxu0 %v85
  %v152 = vpop.f32.mrb[0].mxu0
  %v153 = vadd.f32 0.0, %v152
  %v154 = vpop.f32.mrb[0].mxu0
  %v155 = vpop.f32.mrb[0].mxu0
  %v156 = vpop.f32.mrb[0].mxu0
  %157 = vdwg.mxu0
  %158 = vst [vmem:[%s4] sm:$0xff] %v78
  %159 = vst [vmem:[%s4 + $0x8] sm:$0xff] %v79
  %160 = vst [vmem:[%s4 + $0x10] sm:$0xf] %v80
  %161 = vst [vmem:[%s5] sm:$0xff] %v145
  %162 = vst [vmem:[%s5 + $0x8] sm:$0xff] %v148
  %163 = vst [vmem:[%s5 + $0x10] sm:$0xf] %v153
  %s164 = smul.u32 0, 20
  %v165 = vlaneseq
  %v166 = vshrl.u32 %v165, 7
  %v167 = vadd.s32 %v166, 8
  %v168 = vadd.s32 %v166, 16
  %v169 = vstv %s164
  %v170 = vadd.s32 %v169, %v166
  %v171 = vadd.s32 %v169, %v167
  %v172 = vadd.s32 %v169, %v168
  %vm173 = vcmp.lt.s32.totalorder %v170, 20
  %vm174 = vcmp.lt.s32.totalorder %v171, 20
  %vm175 = vcmp.lt.s32.totalorder %v172, 20
  %v176 = vsel %vm173, 1, 0
  %v177 = vsel %vm174, 1, 0
  %v178 = vsel %vm175, 1, 0
  %vm179 = vcmp.eq.s32.totalorder %v176, 1
  %vm180 = vcmp.eq.s32.totalorder %v177, 1
  %vm181 = vcmp.eq.s32.totalorder %v178, 1
  %v182 = vsel %vm179, %v145, -inf
  %v183 = vsel %vm180, %v148, -inf
  %v184 = vsel %vm181, %v153, -inf
  %v185 = vsel %vm30, %v184, -inf
  %v186 = vmax.f32 %v182, %v183
  %v187 = vmax.f32 %v186, %v185
  %188 = vmax.xlane.f32.xlu0 %v187
  %v189 = vpop.xlane.xlu0 %188
  %v190 = vrot.slane %v189, 4
  %v191 = vmax.f32 %v189, %v190
  %v192 = vrot.slane %v191, 2
  %v193 = vmax.f32 %v191, %v192
  %v194 = vrot.slane %v193, 1
  %v195 = vmax.f32 %v193, %v194
  %s196 = vtos %v195
  %v197 = vstv %s196
  %198 = vst [vmem:[%s6] sm:$0xff] %v197
  // Predicated region
  $region18: #{vit_forward.12} parent=0 // pred_check
    _
  $region19: #{vit_forward.12} parent=0 // pred_check_branch
    %200 = sbr.rel (0) target = $region21
  $region20: #{vit_forward.12} parent=0 // pred_region
    _
  $region21: #{vit_forward.12} parent=0 // pred_fallthru
    _
  // Predicated region
  $region22: #{vit_forward.12} parent=0 // pred_check
    _
  $region23: #{vit_forward.12} parent=0 // pred_check_branch
    %202 = sbr.rel (0) target = $region25
  $region24: #{vit_forward.12} parent=0 // pred_region
    _
  $region25: #{vit_forward.12} parent=0 // pred_fallthru
    _
  // Predicated region
  $region26: #{vit_forward.12} parent=0 // pred_check
    _
  $region27: #{vit_forward.12} parent=0 // pred_check_branch
    %204 = sbr.rel (0) target = $region29
  $region28: #{vit_forward.12} parent=0 // pred_region
    _
  $region29: #{vit_forward.12} parent=0 // pred_fallthru
    _
  // Predicated region
  $region30: #{vit_forward.12} parent=0 // pred_check
    _
  $region31: #{vit_forward.12} parent=0 // pred_check_branch
    %206 = sbr.rel (0) target = $region33
  $region32: #{vit_forward.12} parent=0 // pred_region
    _
  $region33: #{vit_forward.12} parent=0 // pred_fallthru
    _
  // Predicated region
  $region34: #{vit_forward.12} parent=0 // pred_check
    _
  $region35: #{vit_forward.12} parent=0 // pred_check_branch
    %208 = sbr.rel (0) target = $region37
  $region36: #{vit_forward.12} parent=0 // pred_region
    _
  $region37: #{vit_forward.12} parent=0 // pred_fallthru
    _
  // Predicated region
  $region38: #{vit_forward.12} parent=0 // pred_check
    _
  $region39: #{vit_forward.12} parent=0 // pred_check_branch
    %210 = sbr.rel (0) target = $region41
  $region40: #{vit_forward.12} parent=0 // pred_region
    _
  $region41: #{vit_forward.12} parent=0 // pred_fallthru
    _

// kernel: vit_forward.14
$region0: #{vit_forward.14}
  #allocation0 [shape = 'u32[]', space=smem, size = 0x4, offset = 0x4, fixed_abs, tag = 'smem constant byte address 0x4 - core index']
  #allocation1 [shape = 'u32[144,128]{1,0:T(1,128)}', space=vmem, size = 0x12000, scoped, tag = 'internal scratch']
  #allocation2 [shape = 'f32[40,128]{1,0:T(8,128)}', space=vmem, size = 0x5000, scoped, tag = 'scratch operand']
  #allocation3 [shape = 'f32[40,128]{1,0:T(8,128)}', space=vmem, size = 0x5000, scoped, tag = 'scratch operand']
  %s0 = inlined_call_operand.vmem [shape: f32[40,128], index: 0, kind: input, shape index: {}]
  %s1 = inlined_call_operand.vmem [shape: f32[1,128], index: 1, kind: input, shape index: {}]
  %s2 = inlined_call_operand.vmem [shape: f32[1,128], index: 2, kind: input, shape index: {}]
  %s3 = inlined_call_operand.vmem [shape: f32[128,256], index: 3, kind: input, shape index: {}]
  %s4 = inlined_call_operand.vmem [shape: f32[1,256], index: 4, kind: input, shape index: {}]
  %s5 = inlined_call_operand.vmem [shape: f32[256,128], index: 5, kind: input, shape index: {}]
  %s6 = inlined_call_operand.vmem [shape: f32[1,128], index: 6, kind: input, shape index: {}]
  %s7 = inlined_call_operand.vmem [shape: f32[40,128], index: 7, kind: output, shape index: {}]
  %s8 = sld [smem:[#allocation0]]
  $region46: #{vit_forward.14} parent=0
    _
  %s10 = ssub.s32 1, %s8
  %s11 = scalar_select 0, %s10, %s8
  // Predicated region
  $region2: #{vit_forward.14} parent=0 // pred_check
    _
  $region3: #{vit_forward.14} parent=0 // pred_check_branch
    %13 = sbr.rel (0) target = $region5
  $region4: #{vit_forward.14} parent=0 // pred_region
    _
  $region5: #{vit_forward.14} parent=0 // pred_fallthru
    _
  // Predicated region
  $region6: #{vit_forward.14} parent=0 // pred_check
    _
  $region7: #{vit_forward.14} parent=0 // pred_check_branch
    %15 = sbr.rel (0) target = $region9
  $region8: #{vit_forward.14} parent=0 // pred_region
    _
  $region9: #{vit_forward.14} parent=0 // pred_fallthru
    _
  // Predicated region
  $region10: #{vit_forward.14} parent=0 // pred_check
    _
  $region11: #{vit_forward.14} parent=0 // pred_check_branch
    %17 = sbr.rel (0) target = $region13
  $region12: #{vit_forward.14} parent=0 // pred_region
    _
  $region13: #{vit_forward.14} parent=0 // pred_fallthru
    _
  // Predicated region
  $region14: #{vit_forward.14} parent=0 // pred_check
    _
  $region15: #{vit_forward.14} parent=0 // pred_check_branch
    %19 = sbr.rel (0) target = $region17
  $region16: #{vit_forward.14} parent=0 // pred_region
    _
  $region17: #{vit_forward.14} parent=0 // pred_fallthru
    _
  // Predicated region
  $region18: #{vit_forward.14} parent=0 // pred_check
    _
  $region19: #{vit_forward.14} parent=0 // pred_check_branch
    %21 = sbr.rel (0) target = $region21
  $region20: #{vit_forward.14} parent=0 // pred_region
    _
  $region21: #{vit_forward.14} parent=0 // pred_fallthru
    _
  // Predicated region
  $region22: #{vit_forward.14} parent=0 // pred_check
    _
  $region23: #{vit_forward.14} parent=0 // pred_check_branch
    %23 = sbr.rel (0) target = $region25
  $region24: #{vit_forward.14} parent=0 // pred_region
    _
  $region25: #{vit_forward.14} parent=0 // pred_fallthru
    _
  // Predicated region
  $region26: #{vit_forward.14} parent=0 // pred_check
    _
  $region27: #{vit_forward.14} parent=0 // pred_check_branch
    %25 = sbr.rel (0) target = $region29
  $region28: #{vit_forward.14} parent=0 // pred_region
    _
  $region29: #{vit_forward.14} parent=0 // pred_fallthru
    _
  %p27 = scmp.eq.s32.totalorder 0, 0
  // Predicated region
  $region30: #{vit_forward.14} parent=0 // pred_check
    %p28 = pneg %p27
  $region31: #{vit_forward.14} parent=0 // pred_check_branch
    %30 = sbr.rel (%p28) target = $region33
  $region32: #{vit_forward.14} parent=0 // pred_region
    %v31 = vld [vmem:[%s0] sm:$0xff]
    %v32 = vld [vmem:[%s0 + $0x8] sm:$0xff]
    %v33 = vld [vmem:[%s0 + $0x10] sm:$0xff]
    %v34 = vld [vmem:[%s0 + $0x18] sm:$0xff]
    %v35 = vld [vmem:[%s0 + $0x20] sm:$0xff]
    %v36 = vld [vmem:[%s1] sm:$0x1]
    %v37 = vld [vmem:[%s2] sm:$0x1]
    %38 = vadd.xlane.f32.xlu0 %v31
    %v39 = vpop.xlane.xlu0 %38
    %40 = vadd.xlane.f32.xlu0 %v32
    %v41 = vpop.xlane.xlu0 %40
    %42 = vadd.xlane.f32.xlu0 %v33
    %v43 = vpop.xlane.xlu0 %42
    %44 = vadd.xlane.f32.xlu0 %v34
    %v45 = vpop.xlane.xlu0 %44
    %46 = vadd.xlane.f32.xlu0 %v35
    %v47 = vpop.xlane.xlu0 %46
    %v48 = vrcp.pop 128.0
    %v49 = vmul.f32 %v39, %v48
    %v50 = vmul.f32 %v41, %v48
    %v51 = vmul.f32 %v43, %v48
    %v52 = vmul.f32 %v45, %v48
    %v53 = vmul.f32 %v47, %v48
    %v54 = vsub.f32 %v31, %v49
    %v55 = vsub.f32 %v32, %v50
    %v56 = vsub.f32 %v33, %v51
    %v57 = vsub.f32 %v34, %v52
    %v58 = vsub.f32 %v35, %v53
    %v59 = vmul.f32 %v54, %v54
    %v60 = vmul.f32 %v55, %v55
    %v61 = vmul.f32 %v56, %v56
    %v62 = vmul.f32 %v57, %v57
    %v63 = vmul.f32 %v58, %v58
    %64 = vadd.xlane.f32.xlu0 %v59
    %v65 = vpop.xlane.xlu0 %64
    %66 = vadd.xlane.f32.xlu0 %v60
    %v67 = vpop.xlane.xlu0 %66
    %68 = vadd.xlane.f32.xlu0 %v61
    %v69 = vpop.xlane.xlu0 %68
    %70 = vadd.xlane.f32.xlu0 %v62
    %v71 = vpop.xlane.xlu0 %70
    %72 = vadd.xlane.f32.xlu0 %v63
    %v73 = vpop.xlane.xlu0 %72
    %v74 = vmul.f32 %v65, %v48
    %v75 = vmul.f32 %v67, %v48
    %v76 = vmul.f32 %v69, %v48
    %v77 = vmul.f32 %v71, %v48
    %v78 = vmul.f32 %v73, %v48
    %v79 = vadd.f32 %v74, 1e-05
    %v80 = vadd.f32 %v75, 1e-05
    %v81 = vadd.f32 %v76, 1e-05
    %v82 = vadd.f32 %v77, 1e-05
    %v83 = vadd.f32 %v78, 1e-05
    %v84 = vrsqrt.pop %v79
    %v85 = vrsqrt.pop %v80
    %v86 = vrsqrt.pop %v81
    %v87 = vrsqrt.pop %v82
    %v88 = vrsqrt.pop %v83
    %v89 = vmul.f32 %v54, %v84
    %v90 = vmul.f32 %v55, %v85
    %v91 = vmul.f32 %v56, %v86
    %v92 = vmul.f32 %v57, %v87
    %v93 = vmul.f32 %v58, %v88
    %v95 = vlaneseq
    %v96 = vshrl.u32 %v95, 7
    %v97 = vsub.s32 0, %v96
    %v98 = vrot.slane %v36, %v97
    %v100 = vmul.f32 %v89, %v98
    %v101 = vmul.f32 %v90, %v98
    %v102 = vmul.f32 %v91, %v98
    %v103 = vmul.f32 %v92, %v98
    %v104 = vmul.f32 %v93, %v98
    %v106 = vlaneseq
    %v107 = vshrl.u32 %v106, 7
    %v108 = vsub.s32 0, %v107
    %v109 = vrot.slane %v37, %v108
    %v111 = vadd.f32 %v100, %v109
    %v112 = vadd.f32 %v101, %v109
    %v113 = vadd.f32 %v102, %v109
    %v114 = vadd.f32 %v103, %v109
    %v115 = vadd.f32 %v104, %v109
    %116 = vst [vmem:[#allocation2] sm:$0xff] %v111
    %117 = vst [vmem:[#allocation2 + $0x8] sm:$0xff] %v112
    %118 = vst [vmem:[#allocation2 + $0x10] sm:$0xff] %v113
    %119 = vst [vmem:[#allocation2 + $0x18] sm:$0xff] %v114
    %120 = vst [vmem:[#allocation2 + $0x20] sm:$0xff] %v115
    %121 = vst [vmem:[#allocation3] sm:$0xff] 0.0
    %122 = vst [vmem:[#allocation3 + $0x8] sm:$0xff] 0.0
    %123 = vst [vmem:[#allocation3 + $0x10] sm:$0xff] 0.0
    %124 = vst [vmem:[#allocation3 + $0x18] sm:$0xff] 0.0
    %125 = vst [vmem:[#allocation3 + $0x20] sm:$0xff] 0.0
  $region33: #{vit_forward.14} parent=0 // pred_fallthru
    _
  %v126 = vld [vmem:[#allocation2] sm:$0xff]
  %v127 = vld [vmem:[#allocation2 + $0x8] sm:$0xff]
  %v128 = vld [vmem:[#allocation2 + $0x10] sm:$0xff]
  %v129 = vld [vmem:[#allocation2 + $0x18] sm:$0xff]
  %v130 = vld [vmem:[#allocation2 + $0x20] sm:$0xff]
  %v131 = vpack.c.bf16 %v127, %v126
  %v132 = vpack.c.bf16 %v129, %v128
  %v133 = vpack.c.bf16 %v130, %v130
  %v134 = vld [vmem:[%s3] sm:$0xff]
  %v135 = vld [vmem:[%s3 + $0x8] sm:$0xff]
  %v136 = vld [vmem:[%s3 + $0x10] sm:$0xff]
  %v137 = vld [vmem:[%s3 + $0x18] sm:$0xff]
  %v138 = vld [vmem:[%s3 + $0x20] sm:$0xff]
  %v139 = vld [vmem:[%s3 + $0x28] sm:$0xff]
  %v140 = vld [vmem:[%s3 + $0x30] sm:$0xff]
  %v141 = vld [vmem:[%s3 + $0x38] sm:$0xff]
  %v142 = vld [vmem:[%s3 + $0x40] sm:$0xff]
  %v143 = vld [vmem:[%s3 + $0x48] sm:$0xff]
  %v144 = vld [vmem:[%s3 + $0x50] sm:$0xff]
  %v145 = vld [vmem:[%s3 + $0x58] sm:$0xff]
  %v146 = vld [vmem:[%s3 + $0x60] sm:$0xff]
  %v147 = vld [vmem:[%s3 + $0x68] sm:$0xff]
  %v148 = vld [vmem:[%s3 + $0x70] sm:$0xff]
  %v149 = vld [vmem:[%s3 + $0x78] sm:$0xff]
  %v150 = vld [vmem:[%s3 + $0x80] sm:$0xff]
  %v151 = vld [vmem:[%s3 + $0x88] sm:$0xff]
  %v152 = vld [vmem:[%s3 + $0x90] sm:$0xff]
  %v153 = vld [vmem:[%s3 + $0x98] sm:$0xff]
  %v154 = vld [vmem:[%s3 + $0xa0] sm:$0xff]
  %v155 = vld [vmem:[%s3 + $0xa8] sm:$0xff]
  %v156 = vld [vmem:[%s3 + $0xb0] sm:$0xff]
  %v157 = vld [vmem:[%s3 + $0xb8] sm:$0xff]
  %v158 = vld [vmem:[%s3 + $0xc0] sm:$0xff]
  %v159 = vld [vmem:[%s3 + $0xc8] sm:$0xff]
  %v160 = vld [vmem:[%s3 + $0xd0] sm:$0xff]
  %v161 = vld [vmem:[%s3 + $0xd8] sm:$0xff]
  %v162 = vld [vmem:[%s3 + $0xe0] sm:$0xff]
  %v163 = vld [vmem:[%s3 + $0xe8] sm:$0xff]
  %v164 = vld [vmem:[%s3 + $0xf0] sm:$0xff]
  %v165 = vld [vmem:[%s3 + $0xf8] sm:$0xff]
  %v166 = vpack.c.bf16 %v136, %v134
  %v167 = vpack.c.bf16 %v137, %v135
  %v168 = vpack.c.bf16 %v140, %v138
  %v169 = vpack.c.bf16 %v141, %v139
  %v170 = vpack.c.bf16 %v144, %v142
  %v171 = vpack.c.bf16 %v145, %v143
  %v172 = vpack.c.bf16 %v148, %v146
  %v173 = vpack.c.bf16 %v149, %v147
  %v174 = vpack.c.bf16 %v152, %v150
  %v175 = vpack.c.bf16 %v153, %v151
  %v176 = vpack.c.bf16 %v156, %v154
  %v177 = vpack.c.bf16 %v157, %v155
  %v178 = vpack.c.bf16 %v160, %v158
  %v179 = vpack.c.bf16 %v161, %v159
  %v180 = vpack.c.bf16 %v164, %v162
  %v181 = vpack.c.bf16 %v165, %v163
  %v182 = vld [vmem:[%s4] sm:$0x3]
  %v184 = vlaneseq
  %v185 = vshrl.u32 %v184, 7
  %v186 = vsub.s32 0, %v185
  %v187 = vrot.slane %v182, %v186
  %v188 = vlaneseq
  %v189 = vshrl.u32 %v188, 7
  %v190 = vsub.s32 1, %v189
  %v191 = vrot.slane %v182, %v190
  %194 = vmatprep.subr.bf16.mxu0 %v167
  %195 = vmatpush1.bf16.msra.mxu0 %v166
  %196 = vmatprep.subr.bf16.mxu0 %v169
  %197 = vmatpush1.bf16.msra.mxu0 %v168
  %198 = vmatprep.subr.bf16.mxu0 %v171
  %199 = vmatpush1.bf16.msra.mxu0 %v170
  %200 = vmatprep.subr.bf16.mxu0 %v173
  %201 = vmatpush1.bf16.msra.mxu0 %v172
  %202 = vmatprep.subr.bf16.mxu0 %v175
  %203 = vmatpush1.bf16.msra.mxu0 %v174
  %204 = vmatprep.subr.bf16.mxu0 %v177
  %205 = vmatpush1.bf16.msra.mxu0 %v176
  %206 = vmatprep.subr.bf16.mxu0 %v179
  %207 = vmatpush1.bf16.msra.mxu0 %v178
  %208 = vmatprep.subr.bf16.mxu0 %v181
  %209 = vmatpush1.bf16.msra.mxu0 %v180
  %210 = vmatprep.subr.bf16.mxu0 0
  %211 = vmatpush1.bf16.msra.mxu0 0
  %212 = vmatprep.subr.bf16.mxu0 0
  %213 = vmatpush1.bf16.msra.mxu0 0
  %214 = vmatprep.subr.bf16.mxu0 0
  %215 = vmatpush1.bf16.msra.mxu0 0
  %216 = vmatprep.subr.bf16.mxu0 0
  %217 = vmatpush1.bf16.msra.mxu0 0
  %218 = vmatprep.subr.bf16.mxu0 0
  %219 = vmatpush1.bf16.msra.mxu0 0
  %220 = vmatprep.subr.bf16.mxu0 0
  %221 = vmatpush1.bf16.msra.mxu0 0
  %222 = vmatprep.subr.bf16.mxu0 0
  %223 = vmatpush1.bf16.msra.mxu0 0
  %224 = vmatprep.subr.bf16.mxu0 0
  %225 = vmatpush1.bf16.msra.mxu0 0
  %226 = vmatprep.mubr.bf16.mxu0 0
  %227 = vmatmul.mubr.bf16.gmra.mrb[0].mxu0 %v131
  %v228 = vpop.f32.mrb[0].mxu0
  %v229 = vadd.f32 %v187, %v228
  %v230 = vpop.f32.mrb[0].mxu0
  %v231 = vadd.f32 %v191, %v230
  %v232 = vpop.f32.mrb[0].mxu0
  %v233 = vadd.f32 %v187, %v232
  %v234 = vpop.f32.mrb[0].mxu0
  %v235 = vadd.f32 %v191, %v234
  %236 = vmatprep.mubr.bf16.mxu0 0
  %237 = vmatmul.mubr.bf16.gmra.mrb[0].mxu0 %v132
  %v238 = vpop.f32.mrb[0].mxu0
  %v239 = vadd.f32 %v187, %v238
  %v240 = vpop.f32.mrb[0].mxu0
  %v241 = vadd.f32 %v191, %v240
  %v242 = vpop.f32.mrb[0].mxu0
  %v243 = vadd.f32 %v187, %v242
  %v244 = vpop.f32.mrb[0].mxu0
  %v245 = vadd.f32 %v191, %v244
  %246 = vmatprep.mubr.bf16.mxu0 0
  %247 = vmatmul.mubr.bf16.gmra.mrb[0].mxu0 %v133
  %v248 = vpop.f32.mrb[0].mxu0
  %v249 = vadd.f32 %v187, %v248
  %v250 = vpop.f32.mrb[0].mxu0
  %v251 = vadd.f32 %v191, %v250
  %v252 = vpop.f32.mrb[0].mxu0
  %v253 = vpop.f32.mrb[0].mxu0
  %254 = vdwg.mxu0
  %v255 = vmul.f32 %v229, 0.5
  %v256 = vmul.f32 %v231, 0.5
  %v257 = vmul.f32 %v233, 0.5
  %v258 = vmul.f32 %v235, 0.5
  %v259 = vmul.f32 %v239, 0.5
  %v260 = vmul.f32 %v241, 0.5
  %v261 = vmul.f32 %v243, 0.5
  %v262 = vmul.f32 %v245, 0.5
  %v263 = vmul.f32 %v249, 0.5
  %v264 = vmul.f32 %v251, 0.5
  %v265 = vmul.f32 %v229, 0.044715
  %v266 = vmul.f32 %v231, 0.044715
  %v267 = vmul.f32 %v233, 0.044715
  %v268 = vmul.f32 %v235, 0.044715
  %v269 = vmul.f32 %v239, 0.044715
  %v270 = vmul.f32 %v241, 0.044715
  %v271 = vmul.f32 %v243, 0.044715
  %v272 = vmul.f32 %v245, 0.044715
  %v273 = vmul.f32 %v249, 0.044715
  %v274 = vmul.f32 %v251, 0.044715
  %v275 = vmul.f32 %v265, %v229
  %v276 = vmul.f32 %v266, %v231
  %v277 = vmul.f32 %v267, %v233
  %v278 = vmul.f32 %v268, %v235
  %v279 = vmul.f32 %v269, %v239
  %v280 = vmul.f32 %v270, %v241
  %v281 = vmul.f32 %v271, %v243
  %v282 = vmul.f32 %v272, %v245
  %v283 = vmul.f32 %v273, %v249
  %v284 = vmul.f32 %v274, %v251
  %v285 = vmul.f32 %v275, %v229
  %v286 = vmul.f32 %v276, %v231
  %v287 = vmul.f32 %v277, %v233
  %v288 = vmul.f32 %v278, %v235
  %v289 = vmul.f32 %v279, %v239
  %v290 = vmul.f32 %v280, %v241
  %v291 = vmul.f32 %v281, %v243
  %v292 = vmul.f32 %v282, %v245
  %v293 = vmul.f32 %v283, %v249
  %v294 = vmul.f32 %v284, %v251
  %v295 = vadd.f32 %v229, %v285
  %v296 = vadd.f32 %v231, %v286
  %v297 = vadd.f32 %v233, %v287
  %v298 = vadd.f32 %v235, %v288
  %v299 = vadd.f32 %v239, %v289
  %v300 = vadd.f32 %v241, %v290
  %v301 = vadd.f32 %v243, %v291
  %v302 = vadd.f32 %v245, %v292
  %v303 = vadd.f32 %v249, %v293
  %v304 = vadd.f32 %v251, %v294
  %v305 = vmul.f32 %v295, 0.7978846
  %v306 = vmul.f32 %v296, 0.7978846
  %v307 = vmul.f32 %v297, 0.7978846
  %v308 = vmul.f32 %v298, 0.7978846
  %v309 = vmul.f32 %v299, 0.7978846
  %v310 = vmul.f32 %v300, 0.7978846
  %v311 = vmul.f32 %v301, 0.7978846
  %v312 = vmul.f32 %v302, 0.7978846
  %v313 = vmul.f32 %v303, 0.7978846
  %v314 = vmul.f32 %v304, 0.7978846
  %v315 = vtanh.pop %v305
  %v316 = vtanh.pop %v306
  %v317 = vtanh.pop %v307
  %v318 = vtanh.pop %v308
  %v319 = vtanh.pop %v309
  %v320 = vtanh.pop %v310
  %v321 = vtanh.pop %v311
  %v322 = vtanh.pop %v312
  %v323 = vtanh.pop %v313
  %v324 = vtanh.pop %v314
  %v325 = vadd.f32 %v315, 1.0
  %v326 = vadd.f32 %v316, 1.0
  %v327 = vadd.f32 %v317, 1.0
  %v328 = vadd.f32 %v318, 1.0
  %v329 = vadd.f32 %v319, 1.0
  %v330 = vadd.f32 %v320, 1.0
  %v331 = vadd.f32 %v321, 1.0
  %v332 = vadd.f32 %v322, 1.0
  %v333 = vadd.f32 %v323, 1.0
  %v334 = vadd.f32 %v324, 1.0
  %v335 = vmul.f32 %v255, %v325
  %v336 = vmul.f32 %v256, %v326
  %v337 = vmul.f32 %v257, %v327
  %v338 = vmul.f32 %v258, %v328
  %v339 = vmul.f32 %v259, %v329
  %v340 = vmul.f32 %v260, %v330
  %v341 = vmul.f32 %v261, %v331
  %v342 = vmul.f32 %v262, %v332
  %v343 = vmul.f32 %v263, %v333
  %v344 = vmul.f32 %v264, %v334
  %v345 = vld [vmem:[#allocation3] sm:$0xff]
  %v346 = vld [vmem:[#allocation3 + $0x8] sm:$0xff]
  %v347 = vld [vmem:[#allocation3 + $0x10] sm:$0xff]
  %v348 = vld [vmem:[#allocation3 + $0x18] sm:$0xff]
  %v349 = vld [vmem:[#allocation3 + $0x20] sm:$0xff]
  %v350 = vpack.c.bf16 %v337, %v335
  %v351 = vpack.c.bf16 %v338, %v336
  %v352 = vpack.c.bf16 %v341, %v339
  %v353 = vpack.c.bf16 %v342, %v340
  %v354 = vpack.c.bf16 %v343, %v343
  %v355 = vpack.c.bf16 %v344, %v344
  %v356 = vld [vmem:[%s5] sm:$0xff]
  %v357 = vld [vmem:[%s5 + $0x8] sm:$0xff]
  %v358 = vld [vmem:[%s5 + $0x10] sm:$0xff]
  %v359 = vld [vmem:[%s5 + $0x18] sm:$0xff]
  %v360 = vld [vmem:[%s5 + $0x20] sm:$0xff]
  %v361 = vld [vmem:[%s5 + $0x28] sm:$0xff]
  %v362 = vld [vmem:[%s5 + $0x30] sm:$0xff]
  %v363 = vld [vmem:[%s5 + $0x38] sm:$0xff]
  %v364 = vld [vmem:[%s5 + $0x40] sm:$0xff]
  %v365 = vld [vmem:[%s5 + $0x48] sm:$0xff]
  %v366 = vld [vmem:[%s5 + $0x50] sm:$0xff]
  %v367 = vld [vmem:[%s5 + $0x58] sm:$0xff]
  %v368 = vld [vmem:[%s5 + $0x60] sm:$0xff]
  %v369 = vld [vmem:[%s5 + $0x68] sm:$0xff]
  %v370 = vld [vmem:[%s5 + $0x70] sm:$0xff]
  %v371 = vld [vmem:[%s5 + $0x78] sm:$0xff]
  %v372 = vld [vmem:[%s5 + $0x80] sm:$0xff]
  %v373 = vld [vmem:[%s5 + $0x88] sm:$0xff]
  %v374 = vld [vmem:[%s5 + $0x90] sm:$0xff]
  %v375 = vld [vmem:[%s5 + $0x98] sm:$0xff]
  %v376 = vld [vmem:[%s5 + $0xa0] sm:$0xff]
  %v377 = vld [vmem:[%s5 + $0xa8] sm:$0xff]
  %v378 = vld [vmem:[%s5 + $0xb0] sm:$0xff]
  %v379 = vld [vmem:[%s5 + $0xb8] sm:$0xff]
  %v380 = vld [vmem:[%s5 + $0xc0] sm:$0xff]
  %v381 = vld [vmem:[%s5 + $0xc8] sm:$0xff]
  %v382 = vld [vmem:[%s5 + $0xd0] sm:$0xff]
  %v383 = vld [vmem:[%s5 + $0xd8] sm:$0xff]
  %v384 = vld [vmem:[%s5 + $0xe0] sm:$0xff]
  %v385 = vld [vmem:[%s5 + $0xe8] sm:$0xff]
  %v386 = vld [vmem:[%s5 + $0xf0] sm:$0xff]
  %v387 = vld [vmem:[%s5 + $0xf8] sm:$0xff]
  %v388 = vpack.c.bf16 %v357, %v356
  %v389 = vpack.c.bf16 %v359, %v358
  %v390 = vpack.c.bf16 %v361, %v360
  %v391 = vpack.c.bf16 %v363, %v362
  %v392 = vpack.c.bf16 %v365, %v364
  %v393 = vpack.c.bf16 %v367, %v366
  %v394 = vpack.c.bf16 %v369, %v368
  %v395 = vpack.c.bf16 %v371, %v370
  %v396 = vpack.c.bf16 %v373, %v372
  %v397 = vpack.c.bf16 %v375, %v374
  %v398 = vpack.c.bf16 %v377, %v376
  %v399 = vpack.c.bf16 %v379, %v378
  %v400 = vpack.c.bf16 %v381, %v380
  %v401 = vpack.c.bf16 %v383, %v382
  %v402 = vpack.c.bf16 %v385, %v384
  %v403 = vpack.c.bf16 %v387, %v386
  %404 = vmatprep.subr.bf16.mxu0 0
  %405 = vmatpush1.bf16.msra.mxu0 %v388
  %406 = vmatprep.subr.bf16.mxu0 0
  %407 = vmatpush1.bf16.msra.mxu0 %v389
  %408 = vmatprep.subr.bf16.mxu0 0
  %409 = vmatpush1.bf16.msra.mxu0 %v390
  %410 = vmatprep.subr.bf16.mxu0 0
  %411 = vmatpush1.bf16.msra.mxu0 %v391
  %412 = vmatprep.subr.bf16.mxu0 0
  %413 = vmatpush1.bf16.msra.mxu0 %v392
  %414 = vmatprep.subr.bf16.mxu0 0
  %415 = vmatpush1.bf16.msra.mxu0 %v393
  %416 = vmatprep.subr.bf16.mxu0 0
  %417 = vmatpush1.bf16.msra.mxu0 %v394
  %418 = vmatprep.subr.bf16.mxu0 0
  %419 = vmatpush1.bf16.msra.mxu0 %v395
  %420 = vmatprep.subr.bf16.mxu0 0
  %421 = vmatpush1.bf16.msra.mxu0 %v396
  %422 = vmatprep.subr.bf16.mxu0 0
  %423 = vmatpush1.bf16.msra.mxu0 %v397
  %424 = vmatprep.subr.bf16.mxu0 0
  %425 = vmatpush1.bf16.msra.mxu0 %v398
  %426 = vmatprep.subr.bf16.mxu0 0
  %427 = vmatpush1.bf16.msra.mxu0 %v399
  %428 = vmatprep.subr.bf16.mxu0 0
  %429 = vmatpush1.bf16.msra.mxu0 %v400
  %430 = vmatprep.subr.bf16.mxu0 0
  %431 = vmatpush1.bf16.msra.mxu0 %v401
  %432 = vmatprep.subr.bf16.mxu0 0
  %433 = vmatpush1.bf16.msra.mxu0 %v402
  %434 = vmatprep.subr.bf16.mxu0 0
  %435 = vmatpush1.bf16.msra.mxu0 %v403
  %436 = vmatprep.mubr.bf16.mxu0 %v351
  %437 = vmatmul.mubr.bf16.gmra.mrb[0].mxu0 %v350
  %v438 = vpop.f32.mrb[0].mxu0
  %v439 = vadd.f32 0.0, %v438
  %v440 = vpop.f32.mrb[0].mxu0
  %v441 = vpop.f32.mrb[0].mxu0
  %v442 = vadd.f32 0.0, %v441
  %v443 = vpop.f32.mrb[0].mxu0
  %444 = vmatprep.mubr.bf16.mxu0 %v353
  %445 = vmatmul.mubr.bf16.gmra.mrb[0].mxu0 %v352
  %v446 = vpop.f32.mrb[0].mxu0
  %v447 = vadd.f32 0.0, %v446
  %v448 = vpop.f32.mrb[0].mxu0
  %v449 = vpop.f32.mrb[0].mxu0
  %v450 = vadd.f32 0.0, %v449
  %v451 = vpop.f32.mrb[0].mxu0
  %452 = vmatprep.mubr.bf16.mxu0 %v355
  %453 = vmatmul.mubr.bf16.gmra.mrb[0].mxu0 %v354
  %v454 = vpop.f32.mrb[0].mxu0
  %v455 = vadd.f32 0.0, %v454
  %v456 = vpop.f32.mrb[0].mxu0
  %v457 = vpop.f32.mrb[0].mxu0
  %v458 = vpop.f32.mrb[0].mxu0
  %459 = vdwg.mxu0
  %v460 = vadd.f32 %v345, %v439
  %v461 = vadd.f32 %v346, %v442
  %v462 = vadd.f32 %v347, %v447
  %v463 = vadd.f32 %v348, %v450
  %v464 = vadd.f32 %v349, %v455
  %465 = vst [vmem:[#allocation3] sm:$0xff] %v460
  %466 = vst [vmem:[#allocation3 + $0x8] sm:$0xff] %v461
  %467 = vst [vmem:[#allocation3 + $0x10] sm:$0xff] %v462
  %468 = vst [vmem:[#allocation3 + $0x18] sm:$0xff] %v463
  %469 = vst [vmem:[#allocation3 + $0x20] sm:$0xff] %v464
  // Predicated region
  $region34: #{vit_forward.14} parent=0 // pred_check
    %p470 = pneg %p27
  $region35: #{vit_forward.14} parent=0 // pred_check_branch
    %472 = sbr.rel (%p470) target = $region37
  $region36: #{vit_forward.14} parent=0 // pred_region
    %v473 = vld [vmem:[#allocation3] sm:$0xff]
    %v474 = vld [vmem:[#allocation3 + $0x8] sm:$0xff]
    %v475 = vld [vmem:[#allocation3 + $0x10] sm:$0xff]
    %v476 = vld [vmem:[#allocation3 + $0x18] sm:$0xff]
    %v477 = vld [vmem:[#allocation3 + $0x20] sm:$0xff]
    %v478 = vld [vmem:[%s6] sm:$0x1]
    %v480 = vlaneseq
    %v481 = vshrl.u32 %v480, 7
    %v482 = vsub.s32 0, %v481
    %v483 = vrot.slane %v478, %v482
    %v485 = vadd.f32 %v473, %v483
    %v486 = vadd.f32 %v474, %v483
    %v487 = vadd.f32 %v475, %v483
    %v488 = vadd.f32 %v476, %v483
    %v489 = vadd.f32 %v477, %v483
    %490 = vst [vmem:[%s7] sm:$0xff] %v485
    %491 = vst [vmem:[%s7 + $0x8] sm:$0xff] %v486
    %492 = vst [vmem:[%s7 + $0x10] sm:$0xff] %v487
    %493 = vst [vmem:[%s7 + $0x18] sm:$0xff] %v488
    %494 = vst [vmem:[%s7 + $0x20] sm:$0xff] %v489
  $region37: #{vit_forward.14} parent=0 // pred_fallthru
    _
  // Predicated region
  $region38: #{vit_forward.14} parent=0 // pred_check
    _
  $region39: #{vit_forward.14} parent=0 // pred_check_branch
    %496 = sbr.rel (0) target = $region41
  $region40: #{vit_forward.14} parent=0 // pred_region
    _
  $region41: #{vit_forward.14} parent=0 // pred_fallthru
    _
  // Predicated region
  $region42: #{vit_forward.14} parent=0 // pred_check
    _
  $region43: #{vit_forward.14} parent=0 // pred_check_branch
    %498 = sbr.rel (0) target = $region45
  $region44: #{vit_forward.14} parent=0 // pred_region
    _
  $region45: #{vit_forward.14} parent=0 // pred_fallthru
    _

// kernel: vit_forward.15
$region0: #{vit_forward.15}
  #allocation0 [shape = 'u32[]', space=smem, size = 0x4, offset = 0x4, fixed_abs, tag = 'smem constant byte address 0x4 - core index']
  #allocation1 [shape = 'u32[144,128]{1,0:T(1,128)}', space=vmem, size = 0x12000, scoped, tag = 'internal scratch']
  #allocation2 [shape = 'f32[24,128]{1,0:T(8,128)}', space=vmem, size = 0x3000, scoped, tag = 'scratch operand']
  %s0 = inlined_call_operand.vmem [shape: f32[24,128], index: 0, kind: input, shape index: {}]
  %s1 = inlined_call_operand.vmem [shape: f32[1,128], index: 1, kind: input, shape index: {}]
  %s2 = inlined_call_operand.vmem [shape: f32[1,128], index: 2, kind: input, shape index: {}]
  %s3 = inlined_call_operand.vmem [shape: f32[128,128], index: 3, kind: input, shape index: {}]
  %s4 = inlined_call_operand.vmem [shape: f32[1,128], index: 4, kind: input, shape index: {}]
  %s5 = inlined_call_operand.vmem [shape: f32[24,128], index: 5, kind: output, shape index: {}]
  %s6 = sld [smem:[#allocation0]]
  $region34: #{vit_forward.15} parent=0
    _
  %s8 = ssub.s32 1, %s6
  %s9 = scalar_select 0, %s8, %s6
  // Predicated region
  $region2: #{vit_forward.15} parent=0 // pred_check
    _
  $region3: #{vit_forward.15} parent=0 // pred_check_branch
    %11 = sbr.rel (0) target = $region5
  $region4: #{vit_forward.15} parent=0 // pred_region
    _
  $region5: #{vit_forward.15} parent=0 // pred_fallthru
    _
  // Predicated region
  $region6: #{vit_forward.15} parent=0 // pred_check
    _
  $region7: #{vit_forward.15} parent=0 // pred_check_branch
    %13 = sbr.rel (0) target = $region9
  $region8: #{vit_forward.15} parent=0 // pred_region
    _
  $region9: #{vit_forward.15} parent=0 // pred_fallthru
    _
  // Predicated region
  $region10: #{vit_forward.15} parent=0 // pred_check
    _
  $region11: #{vit_forward.15} parent=0 // pred_check_branch
    %15 = sbr.rel (0) target = $region13
  $region12: #{vit_forward.15} parent=0 // pred_region
    _
  $region13: #{vit_forward.15} parent=0 // pred_fallthru
    _
  // Predicated region
  $region14: #{vit_forward.15} parent=0 // pred_check
    _
  $region15: #{vit_forward.15} parent=0 // pred_check_branch
    %17 = sbr.rel (0) target = $region17
  $region16: #{vit_forward.15} parent=0 // pred_region
    _
  $region17: #{vit_forward.15} parent=0 // pred_fallthru
    _
  // Predicated region
  $region18: #{vit_forward.15} parent=0 // pred_check
    _
  $region19: #{vit_forward.15} parent=0 // pred_check_branch
    %19 = sbr.rel (0) target = $region21
  $region20: #{vit_forward.15} parent=0 // pred_region
    _
  $region21: #{vit_forward.15} parent=0 // pred_fallthru
    _
  %p21 = scmp.eq.s32.totalorder 0, 0
  // Predicated region
  $region22: #{vit_forward.15} parent=0 // pred_check
    %p22 = pneg %p21
  $region23: #{vit_forward.15} parent=0 // pred_check_branch
    %24 = sbr.rel (%p22) target = $region25
  $region24: #{vit_forward.15} parent=0 // pred_region
    %v25 = vld [vmem:[%s0] sm:$0xff]
    %v26 = vld [vmem:[%s0 + $0x8] sm:$0xff]
    %v27 = vld [vmem:[%s0 + $0x10] sm:$0xff]
    %v28 = vld [vmem:[%s1] sm:$0x1]
    %v29 = vld [vmem:[%s2] sm:$0x1]
    %30 = vadd.xlane.f32.xlu0 %v25
    %v31 = vpop.xlane.xlu0 %30
    %32 = vadd.xlane.f32.xlu0 %v26
    %v33 = vpop.xlane.xlu0 %32
    %34 = vadd.xlane.f32.xlu0 %v27
    %v35 = vpop.xlane.xlu0 %34
    %v36 = vrcp.pop 128.0
    %v37 = vmul.f32 %v31, %v36
    %v38 = vmul.f32 %v33, %v36
    %v39 = vmul.f32 %v35, %v36
    %v40 = vsub.f32 %v25, %v37
    %v41 = vsub.f32 %v26, %v38
    %v42 = vsub.f32 %v27, %v39
    %v43 = vmul.f32 %v40, %v40
    %v44 = vmul.f32 %v41, %v41
    %v45 = vmul.f32 %v42, %v42
    %46 = vadd.xlane.f32.xlu0 %v43
    %v47 = vpop.xlane.xlu0 %46
    %48 = vadd.xlane.f32.xlu0 %v44
    %v49 = vpop.xlane.xlu0 %48
    %50 = vadd.xlane.f32.xlu0 %v45
    %v51 = vpop.xlane.xlu0 %50
    %v52 = vmul.f32 %v47, %v36
    %v53 = vmul.f32 %v49, %v36
    %v54 = vmul.f32 %v51, %v36
    %v55 = vadd.f32 %v52, 1e-05
    %v56 = vadd.f32 %v53, 1e-05
    %v57 = vadd.f32 %v54, 1e-05
    %v58 = vrsqrt.pop %v55
    %v59 = vrsqrt.pop %v56
    %v60 = vrsqrt.pop %v57
    %v61 = vmul.f32 %v40, %v58
    %v62 = vmul.f32 %v41, %v59
    %v63 = vmul.f32 %v42, %v60
    %v65 = vlaneseq
    %v66 = vshrl.u32 %v65, 7
    %v67 = vsub.s32 0, %v66
    %v68 = vrot.slane %v28, %v67
    %v70 = vmul.f32 %v61, %v68
    %v71 = vmul.f32 %v62, %v68
    %v72 = vmul.f32 %v63, %v68
    %v74 = vlaneseq
    %v75 = vshrl.u32 %v74, 7
    %v76 = vsub.s32 0, %v75
    %v77 = vrot.slane %v29, %v76
    %v79 = vadd.f32 %v70, %v77
    %v80 = vadd.f32 %v71, %v77
    %v81 = vadd.f32 %v72, %v77
    %82 = vst [vmem:[#allocation2] sm:$0xff] %v79
    %83 = vst [vmem:[#allocation2 + $0x8] sm:$0xff] %v80
    %84 = vst [vmem:[#allocation2 + $0x10] sm:$0xff] %v81
  $region25: #{vit_forward.15} parent=0 // pred_fallthru
    _
  %v85 = vld [vmem:[#allocation2] sm:$0xff]
  %v86 = vld [vmem:[#allocation2 + $0x8] sm:$0xff]
  %v87 = vld [vmem:[#allocation2 + $0x10] sm:$0xff]
  %v88 = vpack.c.bf16 %v86, %v85
  %v89 = vpack.c.bf16 %v87, %v87
  %v90 = vld [vmem:[%s3] sm:$0xff]
  %v91 = vld [vmem:[%s3 + $0x8] sm:$0xff]
  %v92 = vld [vmem:[%s3 + $0x10] sm:$0xff]
  %v93 = vld [vmem:[%s3 + $0x18] sm:$0xff]
  %v94 = vld [vmem:[%s3 + $0x20] sm:$0xff]
  %v95 = vld [vmem:[%s3 + $0x28] sm:$0xff]
  %v96 = vld [vmem:[%s3 + $0x30] sm:$0xff]
  %v97 = vld [vmem:[%s3 + $0x38] sm:$0xff]
  %v98 = vld [vmem:[%s3 + $0x40] sm:$0xff]
  %v99 = vld [vmem:[%s3 + $0x48] sm:$0xff]
  %v100 = vld [vmem:[%s3 + $0x50] sm:$0xff]
  %v101 = vld [vmem:[%s3 + $0x58] sm:$0xff]
  %v102 = vld [vmem:[%s3 + $0x60] sm:$0xff]
  %v103 = vld [vmem:[%s3 + $0x68] sm:$0xff]
  %v104 = vld [vmem:[%s3 + $0x70] sm:$0xff]
  %v105 = vld [vmem:[%s3 + $0x78] sm:$0xff]
  %v106 = vpack.c.bf16 %v91, %v90
  %v107 = vpack.c.bf16 %v93, %v92
  %v108 = vpack.c.bf16 %v95, %v94
  %v109 = vpack.c.bf16 %v97, %v96
  %v110 = vpack.c.bf16 %v99, %v98
  %v111 = vpack.c.bf16 %v101, %v100
  %v112 = vpack.c.bf16 %v103, %v102
  %v113 = vpack.c.bf16 %v105, %v104
  %v114 = vld [vmem:[%s4] sm:$0x1]
  %v116 = vlaneseq
  %v117 = vshrl.u32 %v116, 7
  %v118 = vsub.s32 0, %v117
  %v119 = vrot.slane %v114, %v118
  %121 = vmatprep.subr.bf16.mxu0 0
  %122 = vmatpush1.bf16.msra.mxu0 %v106
  %123 = vmatprep.subr.bf16.mxu0 0
  %124 = vmatpush1.bf16.msra.mxu0 %v107
  %125 = vmatprep.subr.bf16.mxu0 0
  %126 = vmatpush1.bf16.msra.mxu0 %v108
  %127 = vmatprep.subr.bf16.mxu0 0
  %128 = vmatpush1.bf16.msra.mxu0 %v109
  %129 = vmatprep.subr.bf16.mxu0 0
  %130 = vmatpush1.bf16.msra.mxu0 %v110
  %131 = vmatprep.subr.bf16.mxu0 0
  %132 = vmatpush1.bf16.msra.mxu0 %v111
  %133 = vmatprep.subr.bf16.mxu0 0
  %134 = vmatpush1.bf16.msra.mxu0 %v112
  %135 = vmatprep.subr.bf16.mxu0 0
  %136 = vmatpush1.bf16.msra.mxu0 %v113
  %137 = vmatprep.subr.bf16.mxu0 0
  %138 = vmatpush1.bf16.msra.mxu0 0
  %139 = vmatprep.subr.bf16.mxu0 0
  %140 = vmatpush1.bf16.msra.mxu0 0
  %141 = vmatprep.subr.bf16.mxu0 0
  %142 = vmatpush1.bf16.msra.mxu0 0
  %143 = vmatprep.subr.bf16.mxu0 0
  %144 = vmatpush1.bf16.msra.mxu0 0
  %145 = vmatprep.subr.bf16.mxu0 0
  %146 = vmatpush1.bf16.msra.mxu0 0
  %147 = vmatprep.subr.bf16.mxu0 0
  %148 = vmatpush1.bf16.msra.mxu0 0
  %149 = vmatprep.subr.bf16.mxu0 0
  %150 = vmatpush1.bf16.msra.mxu0 0
  %151 = vmatprep.subr.bf16.mxu0 0
  %152 = vmatpush1.bf16.msra.mxu0 0
  %153 = vmatprep.mubr.bf16.mxu0 0
  %154 = vmatmul.mubr.bf16.gmra.mrb[0].mxu0 %v88
  %v155 = vpop.f32.mrb[0].mxu0
  %v156 = vadd.f32 %v119, %v155
  %v157 = vpop.f32.mrb[0].mxu0
  %v158 = vpop.f32.mrb[0].mxu0
  %v159 = vadd.f32 %v119, %v158
  %v160 = vpop.f32.mrb[0].mxu0
  %161 = vmatprep.mubr.bf16.mxu0 0
  %162 = vmatmul.mubr.bf16.gmra.mrb[0].mxu0 %v89
  %v163 = vpop.f32.mrb[0].mxu0
  %v164 = vadd.f32 %v119, %v163
  %v165 = vpop.f32.mrb[0].mxu0
  %v166 = vpop.f32.mrb[0].mxu0
  %v167 = vpop.f32.mrb[0].mxu0
  %168 = vdwg.mxu0
  %169 = vst [vmem:[%s5] sm:$0xff] %v156
  %170 = vst [vmem:[%s5 + $0x8] sm:$0xff] %v159
  %171 = vst [vmem:[%s5 + $0x10] sm:$0xff] %v164
  // Predicated region
  $region26: #{vit_forward.15} parent=0 // pred_check
    _
  $region27: #{vit_forward.15} parent=0 // pred_check_branch
    %173 = sbr.rel (0) target = $region29
  $region28: #{vit_forward.15} parent=0 // pred_region
    _
  $region29: #{vit_forward.15} parent=0 // pred_fallthru
    _
  // Predicated region
  $region30: #{vit_forward.15} parent=0 // pred_check
    _
  $region31: #{vit_forward.15} parent=0 // pred_check_branch
    %175 = sbr.rel (0) target = $region33
  $region32: #{vit_forward.15} parent=0 // pred_region
    _
  $region33: #{vit_forward.15} parent=0 // pred_fallthru
    _

// kernel: vit_forward.13
$region0: #{vit_forward.13}
  #allocation0 [shape = 'u32[]', space=smem, size = 0x4, offset = 0x4, fixed_abs, tag = 'smem constant byte address 0x4 - core index']
  #allocation1 [shape = 'u32[144,128]{1,0:T(1,128)}', space=vmem, size = 0x12000, scoped, tag = 'internal scratch']
  #allocation2 [shape = 'f32[1]{0:T(128)S(6)}', space=smem, size = 0x200, scoped, tag = 'scoped memory for vit_forward.13']
  %s0 = inlined_call_operand.<no memory space> [shape: f32[1], index: 0, kind: input, shape index: {}]
  %s1 = inlined_call_operand.vmem [shape: f32[4,5,128], index: 1, kind: input, shape index: {}]
  %s2 = inlined_call_operand.vmem [shape: f32[4,5,128], index: 2, kind: input, shape index: {}]
  %s3 = inlined_call_operand.vmem [shape: f32[4,5,128], index: 3, kind: output, shape index: {}]
  %s4 = sld [smem:[#allocation0]]
  $region22: #{vit_forward.13} parent=0
    _
  %s6 = ssub.s32 1, %s4
  %s7 = scalar_select 0, %s6, %s4
  %8 = sst [smem:[#allocation2]] %s0
  // Predicated region
  $region2: #{vit_forward.13} parent=0 // pred_check
    _
  $region3: #{vit_forward.13} parent=0 // pred_check_branch
    %10 = sbr.rel (0) target = $region5
  $region4: #{vit_forward.13} parent=0 // pred_region
    _
  $region5: #{vit_forward.13} parent=0 // pred_fallthru
    _
  // Predicated region
  $region6: #{vit_forward.13} parent=0 // pred_check
    _
  $region7: #{vit_forward.13} parent=0 // pred_check_branch
    %12 = sbr.rel (0) target = $region9
  $region8: #{vit_forward.13} parent=0 // pred_region
    _
  $region9: #{vit_forward.13} parent=0 // pred_fallthru
    _
  // Predicated region
  $region10: #{vit_forward.13} parent=0 // pred_check
    _
  $region11: #{vit_forward.13} parent=0 // pred_check_branch
    %14 = sbr.rel (0) target = $region13
  $region12: #{vit_forward.13} parent=0 // pred_region
    _
  $region13: #{vit_forward.13} parent=0 // pred_fallthru
    _
  %v16 = vld [vmem:[%s1] sm:$0x1f]
  %v17 = vld [vmem:[%s1 + $0x8] sm:$0x1f]
  %v18 = vld [vmem:[%s1 + $0x10] sm:$0x1f]
  %v19 = vld [vmem:[%s1 + $0x18] sm:$0x1f]
  %v20 = vld [vmem:[%s2] sm:$0x1f]
  %v21 = vld [vmem:[%s2 + $0x8] sm:$0x1f]
  %v22 = vld [vmem:[%s2 + $0x10] sm:$0x1f]
  %v23 = vld [vmem:[%s2 + $0x18] sm:$0x1f]
  %v24 = vmul.f32 %v16, %v16
  %v25 = vmul.f32 %v17, %v17
  %v26 = vmul.f32 %v18, %v18
  %v27 = vmul.f32 %v19, %v19
  %vm28 = vcmask 1044480
  %v29 = vsel %vm28, %v24, 0.0
  %30 = vadd.xlane.f32.xlu0 %v29
  %v31 = vpop.xlane.xlu0 %30
  %v32 = vsel %vm28, %v25, 0.0
  %33 = vadd.xlane.f32.xlu0 %v32
  %v34 = vpop.xlane.xlu0 %33
  %v35 = vsel %vm28, %v26, 0.0
  %36 = vadd.xlane.f32.xlu0 %v35
  %v37 = vpop.xlane.xlu0 %36
  %v38 = vsel %vm28, %v27, 0.0
  %39 = vadd.xlane.f32.xlu0 %v38
  %v40 = vpop.xlane.xlu0 %39
  %v41 = vmul.f32 %v31, 0.044194173
  %v42 = vmul.f32 %v34, 0.044194173
  %v43 = vmul.f32 %v37, 0.044194173
  %v44 = vmul.f32 %v40, 0.044194173
  %v45 = vsel %vm28, %v20, -inf
  %46 = vmax.xlane.f32.xlu0 %v45
  %v47 = vpop.xlane.xlu0 %46
  %v48 = vsel %vm28, %v21, -inf
  %49 = vmax.xlane.f32.xlu0 %v48
  %v50 = vpop.xlane.xlu0 %49
  %v51 = vsel %vm28, %v22, -inf
  %52 = vmax.xlane.f32.xlu0 %v51
  %v53 = vpop.xlane.xlu0 %52
  %v54 = vsel %vm28, %v23, -inf
  %55 = vmax.xlane.f32.xlu0 %v54
  %v56 = vpop.xlane.xlu0 %55
  %v57 = vsub.f32 %v20, %v41
  %v58 = vsub.f32 %v21, %v42
  %v59 = vsub.f32 %v22, %v43
  %v60 = vsub.f32 %v23, %v44
  %v61 = vsub.f32 %v57, %v47
  %v62 = vsub.f32 %v58, %v50
  %v63 = vsub.f32 %v59, %v53
  %v64 = vsub.f32 %v60, %v56
  %v65 = vmul.f32 %v61, 1.442695
  %v66 = vpow.pop %v65
  %v67 = vmul.f32 %v62, 1.442695
  %v68 = vpow.pop %v67
  %v69 = vmul.f32 %v63, 1.442695
  %v70 = vpow.pop %v69
  %v71 = vmul.f32 %v64, 1.442695
  %v72 = vpow.pop %v71
  %v73 = vadd.f32 %v66, 0.0001
  %v74 = vadd.f32 %v68, 0.0001
  %v75 = vadd.f32 %v70, 0.0001
  %v76 = vadd.f32 %v72, 0.0001
  %v77 = vmul.f32 %v73, 0.088388346
  %v78 = vmul.f32 %v74, 0.088388346
  %v79 = vmul.f32 %v75, 0.088388346
  %v80 = vmul.f32 %v76, 0.088388346
  %s81 = sld [smem:[#allocation2]]
  %v82 = vstv %s81
  %v83 = vsub.f32 %v47, %v82
  %v84 = vsub.f32 %v50, %v82
  %v85 = vsub.f32 %v53, %v82
  %v86 = vsub.f32 %v56, %v82
  %v87 = vmul.f32 %v83, 1.442695
  %v88 = vpow.pop %v87
  %v89 = vmul.f32 %v84, 1.442695
  %v90 = vpow.pop %v89
  %v91 = vmul.f32 %v85, 1.442695
  %v92 = vpow.pop %v91
  %v93 = vmul.f32 %v86, 1.442695
  %v94 = vpow.pop %v93
  %v95 = vmul.f32 %v88, 0.088388346
  %v96 = vmul.f32 %v90, 0.088388346
  %v97 = vmul.f32 %v92, 0.088388346
  %v98 = vmul.f32 %v94, 0.088388346
  %v99 = vmul.f32 %v66, %v95
  %v100 = vmul.f32 %v68, %v96
  %v101 = vmul.f32 %v70, %v97
  %v102 = vmul.f32 %v72, %v98
  %v103 = vadd.f32 %v99, 8.838835e-06
  %v104 = vadd.f32 %v100, 8.838835e-06
  %v105 = vadd.f32 %v101, 8.838835e-06
  %v106 = vadd.f32 %v102, 8.838835e-06
  %v107 = vsel %vm28, %v103, 0.0
  %v108 = vrot.slane %v107, 4
  %v109 = vadd.f32 %v107, %v108
  %v110 = vrot.slane %v109, 2
  %v111 = vadd.f32 %v109, %v110
  %v112 = vrot.slane %v111, 1
  %v113 = vadd.f32 %v111, %v112
  %v114 = vsel %vm28, %v104, 0.0
  %v115 = vrot.slane %v114, 4
  %v116 = vadd.f32 %v114, %v115
  %v117 = vrot.slane %v116, 2
  %v118 = vadd.f32 %v116, %v117
  %v119 = vrot.slane %v118, 1
  %v120 = vadd.f32 %v118, %v119
  %v121 = vsel %vm28, %v105, 0.0
  %v122 = vrot.slane %v121, 4
  %v123 = vadd.f32 %v121, %v122
  %v124 = vrot.slane %v123, 2
  %v125 = vadd.f32 %v123, %v124
  %v126 = vrot.slane %v125, 1
  %v127 = vadd.f32 %v125, %v126
  %v128 = vsel %vm28, %v106, 0.0
  %v129 = vrot.slane %v128, 4
  %v130 = vadd.f32 %v128, %v129
  %v131 = vrot.slane %v130, 2
  %v132 = vadd.f32 %v130, %v131
  %v133 = vrot.slane %v132, 1
  %v134 = vadd.f32 %v132, %v133
  %v135 = vmul.f32 %v77, %v113
  %v136 = vmul.f32 %v78, %v120
  %v137 = vmul.f32 %v79, %v127
  %v138 = vmul.f32 %v80, %v134
  %v139 = vsel %vm28, %v135, 0.0
  %140 = vadd.xlane.f32.xlu0 %v139
  %v141 = vpop.xlane.xlu0 %140
  %v142 = vsel %vm28, %v136, 0.0
  %143 = vadd.xlane.f32.xlu0 %v142
  %v144 = vpop.xlane.xlu0 %143
  %v145 = vsel %vm28, %v137, 0.0
  %146 = vadd.xlane.f32.xlu0 %v145
  %v147 = vpop.xlane.xlu0 %146
  %v148 = vsel %vm28, %v138, 0.0
  %149 = vadd.xlane.f32.xlu0 %v148
  %v150 = vpop.xlane.xlu0 %149
  %v151 = vpack.c.bf16 %v103, %v103
  %v152 = vpack.c.bf16 %v16, %v16
  %153 = vxpose.xlu0.c.b16.start [1/8] %v151, 128
  %154 = vxpose.xlu0.c.b16.cont [2/8] 0, 128
  %155 = vxpose.xlu0.c.b16.cont [3/8] 0, 128
  %156 = vxpose.xlu0.c.b16.cont [4/8] 0, 128
  %157 = vxpose.xlu0.c.b16.cont [5/8] 0, 128
  %158 = vxpose.xlu0.c.b16.cont [6/8] 0, 128
  %159 = vxpose.xlu0.c.b16.cont [7/8] 0, 128
  %160 = vxpose.xlu0.c.b16.end [8/8] 0, 128
  %v161 = vpop.trf.xlu0
  %v162 = vpop.trf.xlu0
  %v163 = vpop.trf.xlu0
  %v164 = vpop.trf.xlu0
  %v165 = vpop.trf.xlu0
  %v166 = vpop.trf.xlu0
  %v167 = vpop.trf.xlu0
  %v168 = vpop.trf.xlu0
  %vm169 = vcmask 39936
  %v171 = vsel %vm169, %v161, 0
  %v174 = vsel %vm169, %v162, 0
  %v177 = vsel %vm169, %v163, 0
  %v180 = vsel %vm169, %v164, 0
  %v183 = vsel %vm169, %v165, 0
  %v186 = vsel %vm169, %v166, 0
  %v189 = vsel %vm169, %v167, 0
  %v192 = vsel %vm169, %v168, 0
  %vm194 = vcmask 1041408
  %vm195 = vcmask 1042432
  %v196 = vsel %vm194, 4294967295, 65535
  %v197 = vsel %vm195, %v196, 0
  %v199 = vand.u32 %v152, %v197
  %201 = vmatprep.subr.bf16.mxu0 0
  %202 = vmatpush1.bf16.msra.mxu0 %v199
  %203 = vmatprep.subr.bf16.mxu0 0
  %204 = vmatpush1.bf16.msra.mxu0 0
  %205 = vmatprep.subr.bf16.mxu0 0
  %206 = vmatpush1.bf16.msra.mxu0 0
  %207 = vmatprep.subr.bf16.mxu0 0
  %208 = vmatpush1.bf16.msra.mxu0 0
  %209 = vmatprep.subr.bf16.mxu0 0
  %210 = vmatpush1.bf16.msra.mxu0 0
  %211 = vmatprep.subr.bf16.mxu0 0
  %212 = vmatpush1.bf16.msra.mxu0 0
  %213 = vmatprep.subr.bf16.mxu0 0
  %214 = vmatpush1.bf16.msra.mxu0 0
  %215 = vmatprep.subr.bf16.mxu0 0
  %216 = vmatpush1.bf16.msra.mxu0 0
  %217 = vmatprep.subr.bf16.mxu0 0
  %218 = vmatpush1.bf16.msra.mxu0 0
  %219 = vmatprep.subr.bf16.mxu0 0
  %220 = vmatpush1.bf16.msra.mxu0 0
  %221 = vmatprep.subr.bf16.mxu0 0
  %222 = vmatpush1.bf16.msra.mxu0 0
  %223 = vmatprep.subr.bf16.mxu0 0
  %224 = vmatpush1.bf16.msra.mxu0 0
  %225 = vmatprep.subr.bf16.mxu0 0
  %226 = vmatpush1.bf16.msra.mxu0 0
  %227 = vmatprep.subr.bf16.mxu0 0
  %228 = vmatpush1.bf16.msra.mxu0 0
  %229 = vmatprep.subr.bf16.mxu0 0
  %230 = vmatpush1.bf16.msra.mxu0 0
  %231 = vmatprep.subr.bf16.mxu0 0
  %232 = vmatpush1.bf16.msra.mxu0 0
  %233 = vmatprep.mubr.bf16.mxu0 0
  %234 = vmatmul.mubr.bf16.gmra.mrb[0].mxu0 %v171
  %v235 = vpop.f32.mrb[0].mxu0
  %v236 = vadd.f32 0.0, %v235
  %v237 = vpop.f32.mrb[0].mxu0
  %v238 = vpop.f32.mrb[0].mxu0
  %v239 = vadd.f32 0.0, %v238
  %v240 = vpop.f32.mrb[0].mxu0
  %241 = vmatprep.mubr.bf16.mxu0 0
  %242 = vmatmul.mubr.bf16.gmra.mrb[0].mxu0 %v174
  %v243 = vpop.f32.mrb[0].mxu0
  %v244 = vadd.f32 0.0, %v243
  %v245 = vpop.f32.mrb[0].mxu0
  %v246 = vpop.f32.mrb[0].mxu0
  %v247 = vadd.f32 0.0, %v246
  %v248 = vpop.f32.mrb[0].mxu0
  %249 = vmatprep.mubr.bf16.mxu0 0
  %250 = vmatmul.mubr.bf16.gmra.mrb[0].mxu0 %v177
  %v251 = vpop.f32.mrb[0].mxu0
  %v252 = vadd.f32 0.0, %v251
  %v253 = vpop.f32.mrb[0].mxu0
  %v254 = vpop.f32.mrb[0].mxu0
  %v255 = vadd.f32 0.0, %v254
  %v256 = vpop.f32.mrb[0].mxu0
  %257 = vmatprep.mubr.bf16.mxu0 0
  %258 = vmatmul.mubr.bf16.gmra.mrb[0].mxu0 %v180
  %v259 = vpop.f32.mrb[0].mxu0
  %v260 = vadd.f32 0.0, %v259
  %v261 = vpop.f32.mrb[0].mxu0
  %v262 = vpop.f32.mrb[0].mxu0
  %v263 = vadd.f32 0.0, %v262
  %v264 = vpop.f32.mrb[0].mxu0
  %265 = vmatprep.mubr.bf16.mxu0 0
  %266 = vmatmul.mubr.bf16.gmra.mrb[0].mxu0 %v183
  %v267 = vpop.f32.mrb[0].mxu0
  %v268 = vadd.f32 0.0, %v267
  %v269 = vpop.f32.mrb[0].mxu0
  %v270 = vpop.f32.mrb[0].mxu0
  %v271 = vadd.f32 0.0, %v270
  %v272 = vpop.f32.mrb[0].mxu0
  %273 = vmatprep.mubr.bf16.mxu0 0
  %274 = vmatmul.mubr.bf16.gmra.mrb[0].mxu0 %v186
  %v275 = vpop.f32.mrb[0].mxu0
  %v276 = vadd.f32 0.0, %v275
  %v277 = vpop.f32.mrb[0].mxu0
  %v278 = vpop.f32.mrb[0].mxu0
  %v279 = vadd.f32 0.0, %v278
  %v280 = vpop.f32.mrb[0].mxu0
  %281 = vmatprep.mubr.bf16.mxu0 0
  %282 = vmatmul.mubr.bf16.gmra.mrb[0].mxu0 %v189
  %v283 = vpop.f32.mrb[0].mxu0
  %v284 = vadd.f32 0.0, %v283
  %v285 = vpop.f32.mrb[0].mxu0
  %v286 = vpop.f32.mrb[0].mxu0
  %v287 = vadd.f32 0.0, %v286
  %v288 = vpop.f32.mrb[0].mxu0
  %289 = vmatprep.mubr.bf16.mxu0 0
  %290 = vmatmul.mubr.bf16.gmra.mrb[0].mxu0 %v192
  %v291 = vpop.f32.mrb[0].mxu0
  %v292 = vadd.f32 0.0, %v291
  %v293 = vpop.f32.mrb[0].mxu0
  %v294 = vpop.f32.mrb[0].mxu0
  %v295 = vadd.f32 0.0, %v294
  %v296 = vpop.f32.mrb[0].mxu0
  %297 = vdwg.mxu0
  %v298 = vpack.c.bf16 %v77, %v77
  %v299 = vpack.c.bf16 %v239, %v236
  %v300 = vpack.c.bf16 %v247, %v244
  %v301 = vpack.c.bf16 %v255, %v252
  %v302 = vpack.c.bf16 %v263, %v260
  %v303 = vpack.c.bf16 %v271, %v268
  %v304 = vpack.c.bf16 %v279, %v276
  %v305 = vpack.c.bf16 %v287, %v284
  %v306 = vpack.c.bf16 %v295, %v292
  %307 = vmatprep.subr.bf16.mxu0 0
  %308 = vmatpush1.bf16.msra.mxu0 %v299
  %309 = vmatprep.subr.bf16.mxu0 0
  %310 = vmatpush1.bf16.msra.mxu0 %v300
  %311 = vmatprep.subr.bf16.mxu0 0
  %312 = vmatpush1.bf16.msra.mxu0 %v301
  %313 = vmatprep.subr.bf16.mxu0 0
  %314 = vmatpush1.bf16.msra.mxu0 %v302
  %315 = vmatprep.subr.bf16.mxu0 0
  %316 = vmatpush1.bf16.msra.mxu0 %v303
  %317 = vmatprep.subr.bf16.mxu0 0
  %318 = vmatpush1.bf16.msra.mxu0 %v304
  %319 = vmatprep.subr.bf16.mxu0 0
  %320 = vmatpush1.bf16.msra.mxu0 %v305
  %321 = vmatprep.subr.bf16.mxu0 0
  %322 = vmatpush1.bf16.msra.mxu0 %v306
  %323 = vmatprep.subr.bf16.mxu0 0
  %324 = vmatpush1.bf16.msra.mxu0 0
  %325 = vmatprep.subr.bf16.mxu0 0
  %326 = vmatpush1.bf16.msra.mxu0 0
  %327 = vmatprep.subr.bf16.mxu0 0
  %328 = vmatpush1.bf16.msra.mxu0 0
  %329 = vmatprep.subr.bf16.mxu0 0
  %330 = vmatpush1.bf16.msra.mxu0 0
  %331 = vmatprep.subr.bf16.mxu0 0
  %332 = vmatpush1.bf16.msra.mxu0 0
  %333 = vmatprep.subr.bf16.mxu0 0
  %334 = vmatpush1.bf16.msra.mxu0 0
  %335 = vmatprep.subr.bf16.mxu0 0
  %336 = vmatpush1.bf16.msra.mxu0 0
  %337 = vmatprep.subr.bf16.mxu0 0
  %338 = vmatpush1.bf16.msra.mxu0 0
  %339 = vmatprep.mubr.bf16.mxu0 0
  %340 = vmatmul.mubr.bf16.gmra.mrb[0].mxu0 %v298
  %v341 = vpop.f32.mrb[0].mxu0
  %v342 = vadd.f32 0.0, %v341
  %v343 = vpop.f32.mrb[0].mxu0
  %v344 = vpop.f32.mrb[0].mxu0
  %v345 = vpop.f32.mrb[0].mxu0
  %346 = vdwg.mxu0
  %v347 = vrcp.pop %v141
  %v348 = vmul.f32 %v342, %v347
  %349 = vst [vmem:[%s3] sm:$0x1f] %v348
  %v350 = vpack.c.bf16 %v104, %v104
  %v351 = vpack.c.bf16 %v17, %v17
  %352 = vxpose.xlu0.c.b16.start [1/8] %v350, 128
  %353 = vxpose.xlu0.c.b16.cont [2/8] 0, 128
  %354 = vxpose.xlu0.c.b16.cont [3/8] 0, 128
  %355 = vxpose.xlu0.c.b16.cont [4/8] 0, 128
  %356 = vxpose.xlu0.c.b16.cont [5/8] 0, 128
  %357 = vxpose.xlu0.c.b16.cont [6/8] 0, 128
  %358 = vxpose.xlu0.c.b16.cont [7/8] 0, 128
  %359 = vxpose.xlu0.c.b16.end [8/8] 0, 128
  %v360 = vpop.trf.xlu0
  %v361 = vpop.trf.xlu0
  %v362 = vpop.trf.xlu0
  %v363 = vpop.trf.xlu0
  %v364 = vpop.trf.xlu0
  %v365 = vpop.trf.xlu0
  %v366 = vpop.trf.xlu0
  %v367 = vpop.trf.xlu0
  %v369 = vsel %vm169, %v360, 0
  %v372 = vsel %vm169, %v361, 0
  %v375 = vsel %vm169, %v362, 0
  %v378 = vsel %vm169, %v363, 0
  %v381 = vsel %vm169, %v364, 0
  %v384 = vsel %vm169, %v365, 0
  %v387 = vsel %vm169, %v366, 0
  %v390 = vsel %vm169, %v367, 0
  %v393 = vand.u32 %v351, %v197
  %395 = vmatprep.subr.bf16.mxu0 0
  %396 = vmatpush1.bf16.msra.mxu0 %v393
  %397 = vmatprep.subr.bf16.mxu0 0
  %398 = vmatpush1.bf16.msra.mxu0 0
  %399 = vmatprep.subr.bf16.mxu0 0
  %400 = vmatpush1.bf16.msra.mxu0 0
  %401 = vmatprep.subr.bf16.mxu0 0
  %402 = vmatpush1.bf16.msra.mxu0 0
  %403 = vmatprep.subr.bf16.mxu0 0
  %404 = vmatpush1.bf16.msra.mxu0 0
  %405 = vmatprep.subr.bf16.mxu0 0
  %406 = vmatpush1.bf16.msra.mxu0 0
  %407 = vmatprep.subr.bf16.mxu0 0
  %408 = vmatpush1.bf16.msra.mxu0 0
  %409 = vmatprep.subr.bf16.mxu0 0
  %410 = vmatpush1.bf16.msra.mxu0 0
  %411 = vmatprep.subr.bf16.mxu0 0
  %412 = vmatpush1.bf16.msra.mxu0 0
  %413 = vmatprep.subr.bf16.mxu0 0
  %414 = vmatpush1.bf16.msra.mxu0 0
  %415 = vmatprep.subr.bf16.mxu0 0
  %416 = vmatpush1.bf16.msra.mxu0 0
  %417 = vmatprep.subr.bf16.mxu0 0
  %418 = vmatpush1.bf16.msra.mxu0 0
  %419 = vmatprep.subr.bf16.mxu0 0
  %420 = vmatpush1.bf16.msra.mxu0 0
  %421 = vmatprep.subr.bf16.mxu0 0
  %422 = vmatpush1.bf16.msra.mxu0 0
  %423 = vmatprep.subr.bf16.mxu0 0
  %424 = vmatpush1.bf16.msra.mxu0 0
  %425 = vmatprep.subr.bf16.mxu0 0
  %426 = vmatpush1.bf16.msra.mxu0 0
  %427 = vmatprep.mubr.bf16.mxu0 0
  %428 = vmatmul.mubr.bf16.gmra.mrb[0].mxu0 %v369
  %v429 = vpop.f32.mrb[0].mxu0
  %v430 = vadd.f32 0.0, %v429
  %v431 = vpop.f32.mrb[0].mxu0
  %v432 = vpop.f32.mrb[0].mxu0
  %v433 = vadd.f32 0.0, %v432
  %v434 = vpop.f32.mrb[0].mxu0
  %435 = vmatprep.mubr.bf16.mxu0 0
  %436 = vmatmul.mubr.bf16.gmra.mrb[0].mxu0 %v372
  %v437 = vpop.f32.mrb[0].mxu0
  %v438 = vadd.f32 0.0, %v437
  %v439 = vpop.f32.mrb[0].mxu0
  %v440 = vpop.f32.mrb[0].mxu0
  %v441 = vadd.f32 0.0, %v440
  %v442 = vpop.f32.mrb[0].mxu0
  %443 = vmatprep.mubr.bf16.mxu0 0
  %444 = vmatmul.mubr.bf16.gmra.mrb[0].mxu0 %v375
  %v445 = vpop.f32.mrb[0].mxu0
  %v446 = vadd.f32 0.0, %v445
  %v447 = vpop.f32.mrb[0].mxu0
  %v448 = vpop.f32.mrb[0].mxu0
  %v449 = vadd.f32 0.0, %v448
  %v450 = vpop.f32.mrb[0].mxu0
  %451 = vmatprep.mubr.bf16.mxu0 0
  %452 = vmatmul.mubr.bf16.gmra.mrb[0].mxu0 %v378
  %v453 = vpop.f32.mrb[0].mxu0
  %v454 = vadd.f32 0.0, %v453
  %v455 = vpop.f32.mrb[0].mxu0
  %v456 = vpop.f32.mrb[0].mxu0
  %v457 = vadd.f32 0.0, %v456
  %v458 = vpop.f32.mrb[0].mxu0
  %459 = vmatprep.mubr.bf16.mxu0 0
  %460 = vmatmul.mubr.bf16.gmra.mrb[0].mxu0 %v381
  %v461 = vpop.f32.mrb[0].mxu0
  %v462 = vadd.f32 0.0, %v461
  %v463 = vpop.f32.mrb[0].mxu0
  %v464 = vpop.f32.mrb[0].mxu0
  %v465 = vadd.f32 0.0, %v464
  %v466 = vpop.f32.mrb[0].mxu0
  %467 = vmatprep.mubr.bf16.mxu0 0
  %468 = vmatmul.mubr.bf16.gmra.mrb[0].mxu0 %v384
  %v469 = vpop.f32.mrb[0].mxu0
  %v470 = vadd.f32 0.0, %v469
  %v471 = vpop.f32.mrb[0].mxu0
  %v472 = vpop.f32.mrb[0].mxu0
  %v473 = vadd.f32 0.0, %v472
  %v474 = vpop.f32.mrb[0].mxu0
  %475 = vmatprep.mubr.bf16.mxu0 0
  %476 = vmatmul.mubr.bf16.gmra.mrb[0].mxu0 %v387
  %v477 = vpop.f32.mrb[0].mxu0
  %v478 = vadd.f32 0.0, %v477
  %v479 = vpop.f32.mrb[0].mxu0
  %v480 = vpop.f32.mrb[0].mxu0
  %v481 = vadd.f32 0.0, %v480
  %v482 = vpop.f32.mrb[0].mxu0
  %483 = vmatprep.mubr.bf16.mxu0 0
  %484 = vmatmul.mubr.bf16.gmra.mrb[0].mxu0 %v390
  %v485 = vpop.f32.mrb[0].mxu0
  %v486 = vadd.f32 0.0, %v485
  %v487 = vpop.f32.mrb[0].mxu0
  %v488 = vpop.f32.mrb[0].mxu0
  %v489 = vadd.f32 0.0, %v488
  %v490 = vpop.f32.mrb[0].mxu0
  %491 = vdwg.mxu0
  %v492 = vpack.c.bf16 %v78, %v78
  %v493 = vpack.c.bf16 %v433, %v430
  %v494 = vpack.c.bf16 %v441, %v438
  %v495 = vpack.c.bf16 %v449, %v446
  %v496 = vpack.c.bf16 %v457, %v454
  %v497 = vpack.c.bf16 %v465, %v462
  %v498 = vpack.c.bf16 %v473, %v470
  %v499 = vpack.c.bf16 %v481, %v478
  %v500 = vpack.c.bf16 %v489, %v486
  %501 = vmatprep.subr.bf16.mxu0 0
  %502 = vmatpush1.bf16.msra.mxu0 %v493
  %503 = vmatprep.subr.bf16.mxu0 0
  %504 = vmatpush1.bf16.msra.mxu0 %v494
  %505 = vmatprep.subr.bf16.mxu0 0
  %506 = vmatpush1.bf16.msra.mxu0 %v495
  %507 = vmatprep.subr.bf16.mxu0 0
  %508 = vmatpush1.bf16.msra.mxu0 %v496
  %509 = vmatprep.subr.bf16.mxu0 0
  %510 = vmatpush1.bf16.msra.mxu0 %v497
  %511 = vmatprep.subr.bf16.mxu0 0
  %512 = vmatpush1.bf16.msra.mxu0 %v498
  %513 = vmatprep.subr.bf16.mxu0 0
  %514 = vmatpush1.bf16.msra.mxu0 %v499
  %515 = vmatprep.subr.bf16.mxu0 0
  %516 = vmatpush1.bf16.msra.mxu0 %v500
  %517 = vmatprep.subr.bf16.mxu0 0
  %518 = vmatpush1.bf16.msra.mxu0 0
  %519 = vmatprep.subr.bf16.mxu0 0
  %520 = vmatpush1.bf16.msra.mxu0 0
  %521 = vmatprep.subr.bf16.mxu0 0
  %522 = vmatpush1.bf16.msra.mxu0 0
  %523 = vmatprep.subr.bf16.mxu0 0
  %524 = vmatpush1.bf16.msra.mxu0 0
  %525 = vmatprep.subr.bf16.mxu0 0
  %526 = vmatpush1.bf16.msra.mxu0 0
  %527 = vmatprep.subr.bf16.mxu0 0
  %528 = vmatpush1.bf16.msra.mxu0 0
  %529 = vmatprep.subr.bf16.mxu0 0
  %530 = vmatpush1.bf16.msra.mxu0 0
  %531 = vmatprep.subr.bf16.mxu0 0
  %532 = vmatpush1.bf16.msra.mxu0 0
  %533 = vmatprep.mubr.bf16.mxu0 0
  %534 = vmatmul.mubr.bf16.gmra.mrb[0].mxu0 %v492
  %v535 = vpop.f32.mrb[0].mxu0
  %v536 = vadd.f32 0.0, %v535
  %v537 = vpop.f32.mrb[0].mxu0
  %v538 = vpop.f32.mrb[0].mxu0
  %v539 = vpop.f32.mrb[0].mxu0
  %540 = vdwg.mxu0
  %v541 = vrcp.pop %v144
  %v542 = vmul.f32 %v536, %v541
  %s543 = scalar_lea.vmem %s3, 8
  %544 = vst [vmem:[%s543] sm:$0x1f] %v542
  %v545 = vpack.c.bf16 %v105, %v105
  %v546 = vpack.c.bf16 %v18, %v18
  %547 = vxpose.xlu0.c.b16.start [1/8] %v545, 128
  %548 = vxpose.xlu0.c.b16.cont [2/8] 0, 128
  %549 = vxpose.xlu0.c.b16.cont [3/8] 0, 128
  %550 = vxpose.xlu0.c.b16.cont [4/8] 0, 128
  %551 = vxpose.xlu0.c.b16.cont [5/8] 0, 128
  %552 = vxpose.xlu0.c.b16.cont [6/8] 0, 128
  %553 = vxpose.xlu0.c.b16.cont [7/8] 0, 128
  %554 = vxpose.xlu0.c.b16.end [8/8] 0, 128
  %v555 = vpop.trf.xlu0
  %v556 = vpop.trf.xlu0
  %v557 = vpop.trf.xlu0
  %v558 = vpop.trf.xlu0
  %v559 = vpop.trf.xlu0
  %v560 = vpop.trf.xlu0
  %v561 = vpop.trf.xlu0
  %v562 = vpop.trf.xlu0
  %v564 = vsel %vm169, %v555, 0
  %v567 = vsel %vm169, %v556, 0
  %v570 = vsel %vm169, %v557, 0
  %v573 = vsel %vm169, %v558, 0
  %v576 = vsel %vm169, %v559, 0
  %v579 = vsel %vm169, %v560, 0
  %v582 = vsel %vm169, %v561, 0
  %v585 = vsel %vm169, %v562, 0
  %v588 = vand.u32 %v546, %v197
  %590 = vmatprep.subr.bf16.mxu0 0
  %591 = vmatpush1.bf16.msra.mxu0 %v588
  %592 = vmatprep.subr.bf16.mxu0 0
  %593 = vmatpush1.bf16.msra.mxu0 0
  %594 = vmatprep.subr.bf16.mxu0 0
  %595 = vmatpush1.bf16.msra.mxu0 0
  %596 = vmatprep.subr.bf16.mxu0 0
  %597 = vmatpush1.bf16.msra.mxu0 0
  %598 = vmatprep.subr.bf16.mxu0 0
  %599 = vmatpush1.bf16.msra.mxu0 0
  %600 = vmatprep.subr.bf16.mxu0 0
  %601 = vmatpush1.bf16.msra.mxu0 0
  %602 = vmatprep.subr.bf16.mxu0 0
  %603 = vmatpush1.bf16.msra.mxu0 0
  %604 = vmatprep.subr.bf16.mxu0 0
  %605 = vmatpush1.bf16.msra.mxu0 0
  %606 = vmatprep.subr.bf16.mxu0 0
  %607 = vmatpush1.bf16.msra.mxu0 0
  %608 = vmatprep.subr.bf16.mxu0 0
  %609 = vmatpush1.bf16.msra.mxu0 0
  %610 = vmatprep.subr.bf16.mxu0 0
  %611 = vmatpush1.bf16.msra.mxu0 0
  %612 = vmatprep.subr.bf16.mxu0 0
  %613 = vmatpush1.bf16.msra.mxu0 0
  %614 = vmatprep.subr.bf16.mxu0 0
  %615 = vmatpush1.bf16.msra.mxu0 0
  %616 = vmatprep.subr.bf16.mxu0 0
  %617 = vmatpush1.bf16.msra.mxu0 0
  %618 = vmatprep.subr.bf16.mxu0 0
  %619 = vmatpush1.bf16.msra.mxu0 0
  %620 = vmatprep.subr.bf16.mxu0 0
  %621 = vmatpush1.bf16.msra.mxu0 0
  %622 = vmatprep.mubr.bf16.mxu0 0
  %623 = vmatmul.mubr.bf16.gmra.mrb[0].mxu0 %v564
  %v624 = vpop.f32.mrb[0].mxu0
  %v625 = vadd.f32 0.0, %v624
  %v626 = vpop.f32.mrb[0].mxu0
  %v627 = vpop.f32.mrb[0].mxu0
  %v628 = vadd.f32 0.0, %v627
  %v629 = vpop.f32.mrb[0].mxu0
  %630 = vmatprep.mubr.bf16.mxu0 0
  %631 = vmatmul.mubr.bf16.gmra.mrb[0].mxu0 %v567
  %v632 = vpop.f32.mrb[0].mxu0
  %v633 = vadd.f32 0.0, %v632
  %v634 = vpop.f32.mrb[0].mxu0
  %v635 = vpop.f32.mrb[0].mxu0
  %v636 = vadd.f32 0.0, %v635
  %v637 = vpop.f32.mrb[0].mxu0
  %638 = vmatprep.mubr.bf16.mxu0 0
  %639 = vmatmul.mubr.bf16.gmra.mrb[0].mxu0 %v570
  %v640 = vpop.f32.mrb[0].mxu0
  %v641 = vadd.f32 0.0, %v640
  %v642 = vpop.f32.mrb[0].mxu0
  %v643 = vpop.f32.mrb[0].mxu0
  %v644 = vadd.f32 0.0, %v643
  %v645 = vpop.f32.mrb[0].mxu0
  %646 = vmatprep.mubr.bf16.mxu0 0
  %647 = vmatmul.mubr.bf16.gmra.mrb[0].mxu0 %v573
  %v648 = vpop.f32.mrb[0].mxu0
  %v649 = vadd.f32 0.0, %v648
  %v650 = vpop.f32.mrb[0].mxu0
  %v651 = vpop.f32.mrb[0].mxu0
  %v652 = vadd.f32 0.0, %v651
  %v653 = vpop.f32.mrb[0].mxu0
  %654 = vmatprep.mubr.bf16.mxu0 0
  %655 = vmatmul.mubr.bf16.gmra.mrb[0].mxu0 %v576
  %v656 = vpop.f32.mrb[0].mxu0
  %v657 = vadd.f32 0.0, %v656
  %v658 = vpop.f32.mrb[0].mxu0
  %v659 = vpop.f32.mrb[0].mxu0
  %v660 = vadd.f32 0.0, %v659
  %v661 = vpop.f32.mrb[0].mxu0
  %662 = vmatprep.mubr.bf16.mxu0 0
  %663 = vmatmul.mubr.bf16.gmra.mrb[0].mxu0 %v579
  %v664 = vpop.f32.mrb[0].mxu0
  %v665 = vadd.f32 0.0, %v664
  %v666 = vpop.f32.mrb[0].mxu0
  %v667 = vpop.f32.mrb[0].mxu0
  %v668 = vadd.f32 0.0, %v667
  %v669 = vpop.f32.mrb[0].mxu0
  %670 = vmatprep.mubr.bf16.mxu0 0
  %671 = vmatmul.mubr.bf16.gmra.mrb[0].mxu0 %v582
  %v672 = vpop.f32.mrb[0].mxu0
  %v673 = vadd.f32 0.0, %v672
  %v674 = vpop.f32.mrb[0].mxu0
  %v675 = vpop.f32.mrb[0].mxu0
  %v676 = vadd.f32 0.0, %v675
  %v677 = vpop.f32.mrb[0].mxu0
  %678 = vmatprep.mubr.bf16.mxu0 0
  %679 = vmatmul.mubr.bf16.gmra.mrb[0].mxu0 %v585
  %v680 = vpop.f32.mrb[0].mxu0
  %v681 = vadd.f32 0.0, %v680
  %v682 = vpop.f32.mrb[0].mxu0
  %v683 = vpop.f32.mrb[0].mxu0
  %v684 = vadd.f32 0.0, %v683
  %v685 = vpop.f32.mrb[0].mxu0
  %686 = vdwg.mxu0
  %v687 = vpack.c.bf16 %v79, %v79
  %v688 = vpack.c.bf16 %v628, %v625
  %v689 = vpack.c.bf16 %v636, %v633
  %v690 = vpack.c.bf16 %v644, %v641
  %v691 = vpack.c.bf16 %v652, %v649
  %v692 = vpack.c.bf16 %v660, %v657
  %v693 = vpack.c.bf16 %v668, %v665
  %v694 = vpack.c.bf16 %v676, %v673
  %v695 = vpack.c.bf16 %v684, %v681
  %696 = vmatprep.subr.bf16.mxu0 0
  %697 = vmatpush1.bf16.msra.mxu0 %v688
  %698 = vmatprep.subr.bf16.mxu0 0
  %699 = vmatpush1.bf16.msra.mxu0 %v689
  %700 = vmatprep.subr.bf16.mxu0 0
  %701 = vmatpush1.bf16.msra.mxu0 %v690
  %702 = vmatprep.subr.bf16.mxu0 0
  %703 = vmatpush1.bf16.msra.mxu0 %v691
  %704 = vmatprep.subr.bf16.mxu0 0
  %705 = vmatpush1.bf16.msra.mxu0 %v692
  %706 = vmatprep.subr.bf16.mxu0 0
  %707 = vmatpush1.bf16.msra.mxu0 %v693
  %708 = vmatprep.subr.bf16.mxu0 0
  %709 = vmatpush1.bf16.msra.mxu0 %v694
  %710 = vmatprep.subr.bf16.mxu0 0
  %711 = vmatpush1.bf16.msra.mxu0 %v695
  %712 = vmatprep.subr.bf16.mxu0 0
  %713 = vmatpush1.bf16.msra.mxu0 0
  %714 = vmatprep.subr.bf16.mxu0 0
  %715 = vmatpush1.bf16.msra.mxu0 0
  %716 = vmatprep.subr.bf16.mxu0 0
  %717 = vmatpush1.bf16.msra.mxu0 0
  %718 = vmatprep.subr.bf16.mxu0 0
  %719 = vmatpush1.bf16.msra.mxu0 0
  %720 = vmatprep.subr.bf16.mxu0 0
  %721 = vmatpush1.bf16.msra.mxu0 0
  %722 = vmatprep.subr.bf16.mxu0 0
  %723 = vmatpush1.bf16.msra.mxu0 0
  %724 = vmatprep.subr.bf16.mxu0 0
  %725 = vmatpush1.bf16.msra.mxu0 0
  %726 = vmatprep.subr.bf16.mxu0 0
  %727 = vmatpush1.bf16.msra.mxu0 0
  %728 = vmatprep.mubr.bf16.mxu0 0
  %729 = vmatmul.mubr.bf16.gmra.mrb[0].mxu0 %v687
  %v730 = vpop.f32.mrb[0].mxu0
  %v731 = vadd.f32 0.0, %v730
  %v732 = vpop.f32.mrb[0].mxu0
  %v733 = vpop.f32.mrb[0].mxu0
  %v734 = vpop.f32.mrb[0].mxu0
  %735 = vdwg.mxu0
  %v736 = vrcp.pop %v147
  %v737 = vmul.f32 %v731, %v736
  %s738 = scalar_lea.vmem %s3, 16
  %739 = vst [vmem:[%s738] sm:$0x1f] %v737
  %v740 = vpack.c.bf16 %v106, %v106
  %v741 = vpack.c.bf16 %v19, %v19
  %742 = vxpose.xlu0.c.b16.start [1/8] %v740, 128
  %743 = vxpose.xlu0.c.b16.cont [2/8] 0, 128
  %744 = vxpose.xlu0.c.b16.cont [3/8] 0, 128
  %745 = vxpose.xlu0.c.b16.cont [4/8] 0, 128
  %746 = vxpose.xlu0.c.b16.cont [5/8] 0, 128
  %747 = vxpose.xlu0.c.b16.cont [6/8] 0, 128
  %748 = vxpose.xlu0.c.b16.cont [7/8] 0, 128
  %749 = vxpose.xlu0.c.b16.end [8/8] 0, 128
  %v750 = vpop.trf.xlu0
  %v751 = vpop.trf.xlu0
  %v752 = vpop.trf.xlu0
  %v753 = vpop.trf.xlu0
  %v754 = vpop.trf.xlu0
  %v755 = vpop.trf.xlu0
  %v756 = vpop.trf.xlu0
  %v757 = vpop.trf.xlu0
  %v759 = vsel %vm169, %v750, 0
  %v762 = vsel %vm169, %v751, 0
  %v765 = vsel %vm169, %v752, 0
  %v768 = vsel %vm169, %v753, 0
  %v771 = vsel %vm169, %v754, 0
  %v774 = vsel %vm169, %v755, 0
  %v777 = vsel %vm169, %v756, 0
  %v780 = vsel %vm169, %v757, 0
  %v783 = vand.u32 %v741, %v197
  %785 = vmatprep.subr.bf16.mxu0 0
  %786 = vmatpush1.bf16.msra.mxu0 %v783
  %787 = vmatprep.subr.bf16.mxu0 0
  %788 = vmatpush1.bf16.msra.mxu0 0
  %789 = vmatprep.subr.bf16.mxu0 0
  %790 = vmatpush1.bf16.msra.mxu0 0
  %791 = vmatprep.subr.bf16.mxu0 0
  %792 = vmatpush1.bf16.msra.mxu0 0
  %793 = vmatprep.subr.bf16.mxu0 0
  %794 = vmatpush1.bf16.msra.mxu0 0
  %795 = vmatprep.subr.bf16.mxu0 0
  %796 = vmatpush1.bf16.msra.mxu0 0
  %797 = vmatprep.subr.bf16.mxu0 0
  %798 = vmatpush1.bf16.msra.mxu0 0
  %799 = vmatprep.subr.bf16.mxu0 0
  %800 = vmatpush1.bf16.msra.mxu0 0
  %801 = vmatprep.subr.bf16.mxu0 0
  %802 = vmatpush1.bf16.msra.mxu0 0
  %803 = vmatprep.subr.bf16.mxu0 0
  %804 = vmatpush1.bf16.msra.mxu0 0
  %805 = vmatprep.subr.bf16.mxu0 0
  %806 = vmatpush1.bf16.msra.mxu0 0
  %807 = vmatprep.subr.bf16.mxu0 0
  %808 = vmatpush1.bf16.msra.mxu0 0
  %809 = vmatprep.subr.bf16.mxu0 0
  %810 = vmatpush1.bf16.msra.mxu0 0
  %811 = vmatprep.subr.bf16.mxu0 0
  %812 = vmatpush1.bf16.msra.mxu0 0
  %813 = vmatprep.subr.bf16.mxu0 0
  %814 = vmatpush1.bf16.msra.mxu0 0
  %815 = vmatprep.subr.bf16.mxu0 0
  %816 = vmatpush1.bf16.msra.mxu0 0
  %817 = vmatprep.mubr.bf16.mxu0 0
  %818 = vmatmul.mubr.bf16.gmra.mrb[0].mxu0 %v759
  %v819 = vpop.f32.mrb[0].mxu0
  %v820 = vadd.f32 0.0, %v819
  %v821 = vpop.f32.mrb[0].mxu0
  %v822 = vpop.f32.mrb[0].mxu0
  %v823 = vadd.f32 0.0, %v822
  %v824 = vpop.f32.mrb[0].mxu0
  %825 = vmatprep.mubr.bf16.mxu0 0
  %826 = vmatmul.mubr.bf16.gmra.mrb[0].mxu0 %v762
  %v827 = vpop.f32.mrb[0].mxu0
  %v828 = vadd.f32 0.0, %v827
  %v829 = vpop.f32.mrb[0].mxu0
  %v830 = vpop.f32.mrb[0].mxu0
  %v831 = vadd.f32 0.0, %v830
  %v832 = vpop.f32.mrb[0].mxu0
  %833 = vmatprep.mubr.bf16.mxu0 0
  %834 = vmatmul.mubr.bf16.gmra.mrb[0].mxu0 %v765
  %v835 = vpop.f32.mrb[0].mxu0
  %v836 = vadd.f32 0.0, %v835
  %v837 = vpop.f32.mrb[0].mxu0
  %v838 = vpop.f32.mrb[0].mxu0
  %v839 = vadd.f32 0.0, %v838
  %v840 = vpop.f32.mrb[0].mxu0
  %841 = vmatprep.mubr.bf16.mxu0 0
  %842 = vmatmul.mubr.bf16.gmra.mrb[0].mxu0 %v768
  %v843 = vpop.f32.mrb[0].mxu0
  %v844 = vadd.f32 0.0, %v843
  %v845 = vpop.f32.mrb[0].mxu0
  %v846 = vpop.f32.mrb[0].mxu0
  %v847 = vadd.f32 0.0, %v846
  %v848 = vpop.f32.mrb[0].mxu0
  %849 = vmatprep.mubr.bf16.mxu0 0
  %850 = vmatmul.mubr.bf16.gmra.mrb[0].mxu0 %v771
  %v851 = vpop.f32.mrb[0].mxu0
  %v852 = vadd.f32 0.0, %v851
  %v853 = vpop.f32.mrb[0].mxu0
  %v854 = vpop.f32.mrb[0].mxu0
  %v855 = vadd.f32 0.0, %v854
  %v856 = vpop.f32.mrb[0].mxu0
  %857 = vmatprep.mubr.bf16.mxu0 0
  %858 = vmatmul.mubr.bf16.gmra.mrb[0].mxu0 %v774
  %v859 = vpop.f32.mrb[0].mxu0
  %v860 = vadd.f32 0.0, %v859
  %v861 = vpop.f32.mrb[0].mxu0
  %v862 = vpop.f32.mrb[0].mxu0
  %v863 = vadd.f32 0.0, %v862
  %v864 = vpop.f32.mrb[0].mxu0
  %865 = vmatprep.mubr.bf16.mxu0 0
  %866 = vmatmul.mubr.bf16.gmra.mrb[0].mxu0 %v777
  %v867 = vpop.f32.mrb[0].mxu0
  %v868 = vadd.f32 0.0, %v867
  %v869 = vpop.f32.mrb[0].mxu0
  %v870 = vpop.f32.mrb[0].mxu0
  %v871 = vadd.f32 0.0, %v870
  %v872 = vpop.f32.mrb[0].mxu0
  %873 = vmatprep.mubr.bf16.mxu0 0
  %874 = vmatmul.mubr.bf16.gmra.mrb[0].mxu0 %v780
  %v875 = vpop.f32.mrb[0].mxu0
  %v876 = vadd.f32 0.0, %v875
  %v877 = vpop.f32.mrb[0].mxu0
  %v878 = vpop.f32.mrb[0].mxu0
  %v879 = vadd.f32 0.0, %v878
  %v880 = vpop.f32.mrb[0].mxu0
  %881 = vdwg.mxu0
  %v882 = vpack.c.bf16 %v80, %v80
  %v883 = vpack.c.bf16 %v823, %v820
  %v884 = vpack.c.bf16 %v831, %v828
  %v885 = vpack.c.bf16 %v839, %v836
  %v886 = vpack.c.bf16 %v847, %v844
  %v887 = vpack.c.bf16 %v855, %v852
  %v888 = vpack.c.bf16 %v863, %v860
  %v889 = vpack.c.bf16 %v871, %v868
  %v890 = vpack.c.bf16 %v879, %v876
  %891 = vmatprep.subr.bf16.mxu0 0
  %892 = vmatpush1.bf16.msra.mxu0 %v883
  %893 = vmatprep.subr.bf16.mxu0 0
  %894 = vmatpush1.bf16.msra.mxu0 %v884
  %895 = vmatprep.subr.bf16.mxu0 0
  %896 = vmatpush1.bf16.msra.mxu0 %v885
  %897 = vmatprep.subr.bf16.mxu0 0
  %898 = vmatpush1.bf16.msra.mxu0 %v886
  %899 = vmatprep.subr.bf16.mxu0 0
  %900 = vmatpush1.bf16.msra.mxu0 %v887
  %901 = vmatprep.subr.bf16.mxu0 0
  %902 = vmatpush1.bf16.msra.mxu0 %v888
  %903 = vmatprep.subr.bf16.mxu0 0
  %904 = vmatpush1.bf16.msra.mxu0 %v889
  %905 = vmatprep.subr.bf16.mxu0 0
  %906 = vmatpush1.bf16.msra.mxu0 %v890
  %907 = vmatprep.subr.bf16.mxu0 0
  %908 = vmatpush1.bf16.msra.mxu0 0
  %909 = vmatprep.subr.bf16.mxu0 0
  %910 = vmatpush1.bf16.msra.mxu0 0
  %911 = vmatprep.subr.bf16.mxu0 0
  %912 = vmatpush1.bf16.msra.mxu0 0
  %913 = vmatprep.subr.bf16.mxu0 0
  %914 = vmatpush1.bf16.msra.mxu0 0
  %915 = vmatprep.subr.bf16.mxu0 0
  %916 = vmatpush1.bf16.msra.mxu0 0
  %917 = vmatprep.subr.bf16.mxu0 0
  %918 = vmatpush1.bf16.msra.mxu0 0
  %919 = vmatprep.subr.bf16.mxu0 0
  %920 = vmatpush1.bf16.msra.mxu0 0
  %921 = vmatprep.subr.bf16.mxu0 0
  %922 = vmatpush1.bf16.msra.mxu0 0
  %923 = vmatprep.mubr.bf16.mxu0 0
  %924 = vmatmul.mubr.bf16.gmra.mrb[0].mxu0 %v882
  %v925 = vpop.f32.mrb[0].mxu0
  %v926 = vadd.f32 0.0, %v925
  %v927 = vpop.f32.mrb[0].mxu0
  %v928 = vpop.f32.mrb[0].mxu0
  %v929 = vpop.f32.mrb[0].mxu0
  %930 = vdwg.mxu0
  %v931 = vrcp.pop %v150
  %v932 = vmul.f32 %v926, %v931
  %s933 = scalar_lea.vmem %s3, 24
  %934 = vst [vmem:[%s933] sm:$0x1f] %v932
  // Predicated region
  $region14: #{vit_forward.13} parent=0 // pred_check
    _
  $region15: #{vit_forward.13} parent=0 // pred_check_branch
    %936 = sbr.rel (0) target = $region17
  $region16: #{vit_forward.13} parent=0 // pred_region
    _
  $region17: #{vit_forward.13} parent=0 // pred_fallthru
    _
  // Predicated region
  $region18: #{vit_forward.13} parent=0 // pred_check
    _
  $region19: #{vit_forward.13} parent=0 // pred_check_branch
    %938 = sbr.rel (0) target = $region21
  $region20: #{vit_forward.13} parent=0 // pred_region
    _
  $region21: #{vit_forward.13} parent=0 // pred_fallthru
    _

</llo_original>
